<compile_context>
chip_gen: v7x
topology: tpu7x:2x2x1
jax: 0.10.0
libtpu: 0.0.40
codegen_flags: <defaults>
</compile_context>

<pallas_src>
import functools

import jax
import jax.numpy as jnp
from jax.experimental import pallas as pl
from jax.experimental.pallas import tpu as pltpu

EPS_LN = 1e-5          # torch.nn.LayerNorm default eps
EPS = 1e-6             # module eps
NEG_INF = -1e30        # stand-in for -inf in the attention mask (softmax output identical)

_LIVE_PLANES = 20      # ~peak live f32 [tile_n, N] planes in the pairwise kernel

NODE_PARAMS = [
    "lm_w1_x", "lm_w1_l", "lm_w2",
    "eq_np_w1", "eq_np_w2", "eq_cp_w", "eq_ap_w",
    "msg_np_w", "msg_w1_s", "msg_w1_e",
    "na_in_w", "ca_cp_w",
    "vecD", "vec_dff", "vec_dm", "vec_msg", "setw",
]

PAIR_PARAMS = ["msg_w1_c", "msg_w2", "na_out_w", "ca_ap_w", "vecD", "vec_msg"]


# ----------------------------------------------------------------------------- helpers
def _dot(a, b):
    # f32 operands, f32 accumulation (runs on the MXU on TPU; supported everywhere).
    return jnp.dot(a, b, preferred_element_type=jnp.float32)


def _silu(x):
    return x * jax.nn.sigmoid(x)


def _layer_norm(x, g, b):
    mu = jnp.mean(x, axis=-1, keepdims=True)
    var = jnp.mean((x - mu) ** 2, axis=-1, keepdims=True)
    return (x - mu) * jax.lax.rsqrt(var + EPS_LN) * g + b


def _coord_norm_stats(c_all, m_all, set_w_row, use_length, n_sets):
    """Global CoordNorm statistics from node-major coords.

    c_all / m_all: [N, 3*S]   (column order set-major: col = 3*s + k)
    set_w_row:     [1, S]
    Returns (com_row, fac_row), both [1, 3*S], such that for ANY subset of node rows
        normalized = (c_rows - com_row) * m_rows * fac_row
    reproduces the module's CoordNorm ('length' when use_length else 'none').
    """
    masked = c_all * m_all
    # guard against fully-masked coordinate sets
    n_atoms = jnp.maximum(jnp.sum(m_all, axis=0, keepdims=True), 1.0)     # [1, 3S]
    com_row = jnp.sum(masked, axis=0, keepdims=True) / n_atoms            # [1, 3S]
    fac_cols = []
    if use_length:
        centered = (c_all - com_row) * m_all
        for s in range(n_sets):
            c3 = centered[:, 3 * s:3 * s + 3]
            lens = jnp.sqrt(jnp.sum(c3 * c3, axis=1, keepdims=True))      # [N, 1]
            n_s = n_atoms[:, 3 * s:3 * s + 1]                             # [1, 1]
            scaled = jnp.sum(lens, axis=0, keepdims=True) / n_s           # [1, 1]
            f = set_w_row[:, s:s + 1] / (scaled + EPS)
            fac_cols += [f, f, f]
    else:
        for s in range(n_sets):
            f = set_w_row[:, s:s + 1]
            fac_cols += [f, f, f]
    fac_row = jnp.concatenate(fac_cols, axis=1)                           # [1, 3S]
    return com_row, fac_row


# ----------------------------------------------------- node-level kernel (grid = (B,))
def _node_kernel(*refs, cfg):
    """Runs the whole node-level phase once per batch element.

    Outputs (all node-major, [N, .]):
      x2, c2           - post-NodeFeedForward residual features / coords
      cnm              - CoordNorm('none') of c2 (EdgeMessages coord input)
      cproj            - CoordAttention projected coords, columns 3*p + k
      a_start, a_end   - start/end halves of the message-MLP first layer (b1 folded in)
      vproj            - NodeAttention value projection
    """
    S = cfg["n_coord_sets"]
    n_p = len(NODE_PARAMS)
    ci_ref, x_ref, m_ref = refs[:3]
    param_refs = refs[3:3 + n_p]
    x2_ref, c2_ref, cnm_ref, cproj_ref, ast_ref, aend_ref, vproj_ref = refs[3 + n_p:]

    p = {k: r[...] for k, r in zip(NODE_PARAMS, param_refs)}
    ci = ci_ref[0]          # [N, 3S]
    x = x_ref[0]            # [N, D]
    m = m_ref[0]            # [N, 3S]

    vecD = p["vecD"]
    ln1_g, ln1_b, lm_b2 = vecD[0:1], vecD[1:2], vecD[2:3]
    ln2_g, ln2_b = vecD[3:4], vecD[4:5]
    na_ln_g, na_ln_b = vecD[5:6], vecD[6:7]
    na_in_b = vecD[7:8]
    lm_b1 = p["vec_dff"][0:1]
    eq_np_b1, eq_np_b2, msg_np_b = p["vec_dm"][0:1], p["vec_dm"][1:2], p["vec_dm"][2:3]
    msg_b1 = p["vec_msg"][0:1]
    setw = p["setw"]

    # ================================ NodeFeedForward ================================
    com1, fac1 = _coord_norm_stats(ci, m, setw[0:1], True, S)
    x_ln = _layer_norm(x, ln1_g, ln1_b)                                   # [N, D]
    cn = (ci - com1) * m * fac1                                           # [N, 3S]

    # LengthsMLP with split first weight (no feature concat)
    h = _dot(x_ln, p["lm_w1_x"]) + lm_b1                                  # [N, dff]
    for s in range(S):
        c3 = cn[:, 3 * s:3 * s + 3]
        ln_s = jnp.sqrt(jnp.sum(c3 * c3, axis=1, keepdims=True))          # [N, 1]
        h = h + ln_s * p["lm_w1_l"][s:s + 1, :]
    x2 = x + _dot(_silu(h), p["lm_w2"]) + lm_b2                           # [N, D]

    # EquivariantMLP, factorised (exact):
    #   upd[n, 3*s'+k] = (inv @ eq_ap_w)[n,s'] * sum_s cn[n,3s+k] * sum_p eq_cp_w[s,p]
    inv = _dot(_silu(_dot(x_ln, p["eq_np_w1"]) + eq_np_b1),
               p["eq_np_w2"]) + eq_np_b2                                  # [N, dm]
    iv = _dot(inv, p["eq_ap_w"])                                          # [N, S]
    wsum = jnp.sum(p["eq_cp_w"], axis=1, keepdims=True)                   # [S, 1]
    psum3 = cn[:, 0:3] * wsum[0:1, 0:1]
    for s in range(1, S):
        psum3 = psum3 + cn[:, 3 * s:3 * s + 3] * wsum[s:s + 1, 0:1]       # [N, 3]
    c2 = ci + jnp.concatenate([iv[:, s:s + 1] * psum3 for s in range(S)], axis=1)

    # ======================= message / attention node projections ====================
    com2, fac2 = _coord_norm_stats(c2, m, setw[1:2], False, S)
    com3, fac3 = _coord_norm_stats(c2, m, setw[2:3], True, S)
    cnm = (c2 - com2) * m * fac2                                          # [N, 3S]
    cna = (c2 - com3) * m * fac3                                          # [N, 3S]

    # CoordAttention coordinate projection, output column order 3*p + k
    blocks = []
    for pp in range(S):                                                   # proj_sets == S
        blk = cna[:, 0:3] * p["ca_cp_w"][0:1, pp:pp + 1]
        for s in range(1, S):
            blk = blk + cna[:, 3 * s:3 * s + 3] * p["ca_cp_w"][s:s + 1, pp:pp + 1]
        blocks.append(blk)
    cproj = jnp.concatenate(blocks, axis=1)                               # [N, 3*Pc]

    pn = _dot(_layer_norm(x2, ln2_g, ln2_b), p["msg_np_w"]) + msg_np_b    # [N, dm]
    a_start = _dot(pn, p["msg_w1_s"]) + msg_b1                            # bias folded in
    a_end = _dot(pn, p["msg_w1_e"])
    vproj = _dot(_layer_norm(x2, na_ln_g, na_ln_b), p["na_in_w"]) + na_in_b

    x2_ref[0] = x2
    c2_ref[0] = c2
    cnm_ref[0] = cnm
    cproj_ref[0] = cproj
    ast_ref[0] = a_start
    aend_ref[0] = a_end
    vproj_ref[0] = vproj


# -------------------------------------------- pairwise kernel (grid = (B, N // tile_n))
def _pair_kernel(*refs, cfg):
    S = cfg["n_coord_sets"]
    H = cfg["n_attn_heads"]
    D = cfg["d_model"]
    dh = D // H
    dmo = H + S
    Pc = S

    n_fixed = 10
    (adj_ref, x2_ref, c2_ref, cnm_ref, cnmT_ref, cpr_ref, cprT_ref,
     ast_ref, aendT_ref, vproj_ref) = refs[:n_fixed]
    param_refs = refs[n_fixed:n_fixed + len(PAIR_PARAMS)]
    cout_ref, fout_ref = refs[n_fixed + len(PAIR_PARAMS):]

    p = {k: r[...] for k, r in zip(PAIR_PARAMS, param_refs)}
    adj = adj_ref[0]          # [TN, N] bf16 (0/1)
    x2_t = x2_ref[0]          # [TN, D]
    c2_t = c2_ref[0]          # [TN, 3S]
    cnm_t = cnm_ref[0]        # [TN, 3S]
    cnm_T = cnmT_ref[0]       # [3S, N]
    cpr_t = cpr_ref[0]        # [TN, 3Pc]
    cpr_T = cprT_ref[0]       # [3Pc, N]
    a_st = ast_ref[0]         # [TN, dmo]
    a_eT = aendT_ref[0]       # [dmo, N]
    vproj = vproj_ref[0]      # [N, D]

    msg_w1_c = p["msg_w1_c"]                                               # [S, dmo]
    msg_w2 = p["msg_w2"]                                                   # [dmo, dmo]
    na_out_w = p["na_out_w"]                                               # [D, D]
    ca_ap_w = p["ca_ap_w"]                                                 # [Pc, S]
    na_out_b = p["vecD"][8:9]                                              # [1, D]
    msg_b2 = p["vec_msg"][1:2]                                             # [1, dmo]

    # attention mask (adj_to_attn_mask): -inf on missing edges, all-zero for 0-degree rows
    amask = jnp.where(adj == 0, NEG_INF, 0.0)                              # [TN, N] f32
    row_any = jnp.max(adj, axis=-1, keepdims=True) > 0
    amask = jnp.where(row_any, amask, 0.0)

    # per-set Gram planes on the MXU (K=3 dots)
    grams = [_dot(cnm_t[:, 3 * s:3 * s + 3], cnm_T[3 * s:3 * s + 3, :]) for s in range(S)]

    # edge-message MLP hidden planes (silu applied), kept live; grams die here
    hs = []
    for f in range(dmo):
        hf = a_st[:, f:f + 1] + a_eT[f:f + 1, :]
        for s in range(S):
            hf = hf + msg_w1_c[s:s + 1, f:f + 1] * grams[s]
        hs.append(_silu(hf))                                               # [TN, N]

    def softmax_j(logits):                                                 # softmax over j (lanes)
        mx = jnp.max(logits, axis=-1, keepdims=True)
        e = jnp.exp(logits - mx)
        return e * (1.0 / jnp.sum(e, axis=-1, keepdims=True))

    def out_plane(c):                                                      # one output channel
        acc = amask + msg_b2[:, c:c + 1]
        for f in range(dmo):
            acc = acc + msg_w2[f:f + 1, c:c + 1] * hs[f]
        return acc                                                         # [TN, N]

    # --------------------------- NodeAttention (channels 0..H-1) ---------------------------
    head_cols = []
    for hh in range(H):
        a = softmax_j(out_plane(hh))                                       # [TN, N]
        w = jnp.sqrt(jnp.sum(a * a, axis=-1, keepdims=True))               # [TN, 1]
        piece = _dot(a, vproj[:, hh * dh:(hh + 1) * dh]) * w               # MXU A@V, [TN, dh]
        head_cols.append(piece)
    attn_out = jnp.concatenate(head_cols, axis=-1)                         # [TN, D]
    feats = x2_t + _dot(attn_out, na_out_w) + na_out_b                     # MXU out-proj

    # ------------------------- CoordAttention (channels H..H+Pc-1) -------------------------
    ca_cols = [None] * (3 * S)                                             # output cols 3*s + k
    for pp in range(Pc):
        a = softmax_j(out_plane(H + pp))                                   # [TN, N]
        cw = jnp.sqrt(jnp.sum(a * a, axis=-1, keepdims=True))              # [TN, 1]
        d0 = cpr_t[:, 3 * pp + 0:3 * pp + 1] - cpr_T[3 * pp + 0:3 * pp + 1, :]
        d1 = cpr_t[:, 3 * pp + 1:3 * pp + 2] - cpr_T[3 * pp + 1:3 * pp + 2, :]
        d2 = cpr_t[:, 3 * pp + 2:3 * pp + 3] - cpr_T[3 * pp + 2:3 * pp + 3, :]
        lens = jnp.sqrt(d0 * d0 + d1 * d1 + d2 * d2)
        w_dir = a * (1.0 / (lens + EPS))                                   # [TN, N]
        for k, dk in enumerate((d0, d1, d2)):
            upd = jnp.sum(dk * w_dir, axis=-1, keepdims=True) * cw         # [TN, 1]
            for s in range(S):
                idx = 3 * s + k
                term = upd * ca_ap_w[pp:pp + 1, s:s + 1]
                ca_cols[idx] = term if ca_cols[idx] is None else ca_cols[idx] + term
    coords = c2_t + jnp.concatenate(ca_cols, axis=-1)                      # [TN, 3S]

    cout_ref[0] = coords
    fout_ref[0] = feats


# ------------------------------------------------------------------ tiling / VMEM helpers
def _plane_footprint_bytes(tile_n, n_nodes):
    return _LIVE_PLANES * tile_n * n_nodes * 4


def _default_tile_n(n_nodes, batch, budget_bytes):
    if n_nodes <= 256:
        tn = n_nodes
    else:
        tn = None
        for cand in (512, 256, 128, 64, 32, 16, 8):
            if n_nodes % cand == 0 and _plane_footprint_bytes(cand, n_nodes) <= budget_bytes:
                tn = cand
                break
        if tn is None:
            tn = n_nodes
    # v7x has 2 TensorCores per chip: make sure the "parallel" grid has >= 2 steps
    if batch * (n_nodes // tn) < 2 and tn == n_nodes and n_nodes >= 16 and (n_nodes // 2) % 8 == 0:
        tn = n_nodes // 2
    return tn


def _vmem_limit_bytes(tile_n, n_nodes):
    est = _plane_footprint_bytes(tile_n, n_nodes) + 16 * 1024 * 1024
    return max(32 * 1024 * 1024, min(112 * 1024 * 1024, int(est)))


# --------------------------------------------------------------------------- entry point
def equi_message_passing(coords, node_feats, adj, node_mask, params, cfg,
                         tile_n=None, vmem_budget_bytes=44 * 1024 * 1024,
                         vmem_limit_bytes=None):
    """coords [B,S,N,3], node_feats [B,N,D], adj [B,N,N], node_mask [B,S,N]."""
    B, S, N, _ = coords.shape
    D = node_feats.shape[-1]
    H = cfg["n_attn_heads"]
    dmo = H + S
    Pc = S
    cfgd = dict(cfg)

    if tile_n is None:
        tile_n = _default_tile_n(N, B, vmem_budget_bytes)
    if N % tile_n != 0 or (tile_n != N and tile_n % 8 != 0):
        raise ValueError("tile_n must divide N and be a multiple of 8 (or equal N)")
    n_tiles = N // tile_n
    if vmem_limit_bytes is None:
        vmem_limit_bytes = _vmem_limit_bytes(tile_n, N)

    # layout plumbing in XLA (outside the kernels)
    coords_i = jnp.transpose(coords, (0, 2, 1, 3)).reshape(B, N, S * 3)    # [B, N, 3S]
    mask_i = jnp.repeat(jnp.transpose(node_mask, (0, 2, 1)), 3, axis=-1)   # [B, N, 3S]
    adj_b = adj.astype(jnp.bfloat16)                                       # 0/1, exact in bf16

    # ------------------------- node-level phase: once per batch -------------------------
    node_params = [params[k] for k in NODE_PARAMS]
    node_out_shapes = (
        jax.ShapeDtypeStruct((B, N, D), jnp.float32),        # x2
        jax.ShapeDtypeStruct((B, N, S * 3), jnp.float32),    # c2
        jax.ShapeDtypeStruct((B, N, S * 3), jnp.float32),    # cnm
        jax.ShapeDtypeStruct((B, N, Pc * 3), jnp.float32),   # cproj
        jax.ShapeDtypeStruct((B, N, dmo), jnp.float32),      # a_start
        jax.ShapeDtypeStruct((B, N, dmo), jnp.float32),      # a_end
        jax.ShapeDtypeStruct((B, N, D), jnp.float32),        # vproj
    )
    node_in_specs = [
        pl.BlockSpec((1, N, S * 3), lambda b: (b, 0, 0)),
        pl.BlockSpec((1, N, D), lambda b: (b, 0, 0)),
        pl.BlockSpec((1, N, S * 3), lambda b: (b, 0, 0)),
    ] + [pl.BlockSpec(w.shape, lambda b: (0, 0)) for w in node_params]
    node_out_specs = tuple(
        pl.BlockSpec((1,) + s.shape[1:], lambda b: (b, 0, 0)) for s in node_out_shapes)

    x2, c2, cnm, cproj, a_start, a_end, vproj = pl.pallas_call(
        functools.partial(_node_kernel, cfg=cfgd),
        grid=(B,),
        in_specs=node_in_specs,
        out_specs=node_out_specs,
        out_shape=node_out_shapes,
        compiler_params=pltpu.CompilerParams(dimension_semantics=("parallel",)),
    )(coords_i, node_feats, mask_i, *node_params)

    # tiny XLA transposes: j-side tensors go lane-major (node j on lanes)
    cnm_T = jnp.swapaxes(cnm, 1, 2)       # [B, 3S, N]
    cproj_T = jnp.swapaxes(cproj, 1, 2)   # [B, 3Pc, N]
    a_end_T = jnp.swapaxes(a_end, 1, 2)   # [B, dmo, N]

    # ------------------------------- pairwise phase -------------------------------------
    pair_params = [params[k] for k in PAIR_PARAMS]
    pair_in_specs = [
        pl.BlockSpec((1, tile_n, N), lambda b, t: (b, t, 0)),        # adjacency rows (bf16)
        pl.BlockSpec((1, tile_n, D), lambda b, t: (b, t, 0)),        # x2 tile
        pl.BlockSpec((1, tile_n, S * 3), lambda b, t: (b, t, 0)),    # c2 tile
        pl.BlockSpec((1, tile_n, S * 3), lambda b, t: (b, t, 0)),    # cnm tile
        pl.BlockSpec((1, S * 3, N), lambda b, t: (b, 0, 0)),         # cnm_T
        pl.BlockSpec((1, tile_n, Pc * 3), lambda b, t: (b, t, 0)),   # cproj tile
        pl.BlockSpec((1, Pc * 3, N), lambda b, t: (b, 0, 0)),        # cproj_T
        pl.BlockSpec((1, tile_n, dmo), lambda b, t: (b, t, 0)),      # a_start tile
        pl.BlockSpec((1, dmo, N), lambda b, t: (b, 0, 0)),           # a_end_T
        pl.BlockSpec((1, N, D), lambda b, t: (b, 0, 0)),             # vproj (all nodes)
    ] + [pl.BlockSpec(w.shape, lambda b, t: (0, 0)) for w in pair_params]

    pair_out_shapes = (jax.ShapeDtypeStruct((B, N, S * 3), jnp.float32),
                       jax.ShapeDtypeStruct((B, N, D), jnp.float32))
    pair_out_specs = (pl.BlockSpec((1, tile_n, S * 3), lambda b, t: (b, t, 0)),
                      pl.BlockSpec((1, tile_n, D), lambda b, t: (b, t, 0)))

    cost = pl.CostEstimate(
        flops=int(B * N * N * (2 * dmo * dmo + 6 * S + 2 * D + 12 * Pc + 32)),
        transcendentals=int(B * N * N * (dmo + 2 * Pc)),
        bytes_accessed=int(B * (N * N * 2
                                + N * (2 * D + 3 * S * 2 + 3 * Pc * 2 + 2 * dmo + D) * 4
                                + N * (S * 3 + D) * 4)))

    coords_nm, feats = pl.pallas_call(
        functools.partial(_pair_kernel, cfg=cfgd),
        grid=(B, n_tiles),
        in_specs=pair_in_specs,
        out_specs=pair_out_specs,
        out_shape=pair_out_shapes,
        compiler_params=pltpu.CompilerParams(
            dimension_semantics=("parallel", "parallel"),
            vmem_limit_bytes=int(vmem_limit_bytes)),
        cost_estimate=cost,
    )(adj_b, x2, c2, cnm, cnm_T, cproj, cproj_T, a_start, a_end_T, vproj, *pair_params)

    coords_out = jnp.transpose(coords_nm.reshape(B, N, S, 3), (0, 2, 1, 3))  # [B, S, N, 3]
    return coords_out, feats


# --------------------------------------------------- plain-XLA module-faithful reference
def _reference(coords, node_feats, adj, node_mask, params, cfg):
    b_sz, n_set, n_nodes, _ = coords.shape
    D = cfg["d_model"]
    dm = cfg["d_message"]
    S = cfg["n_coord_sets"]
    H = cfg["n_attn_heads"]
    dh = D // H
    dmo = H + S
    Pc = S
    p = params

    def layer_norm(x, g, b):
        mu = jnp.mean(x, axis=-1, keepdims=True)
        var = jnp.mean((x - mu) ** 2, axis=-1, keepdims=True)
        return (x - mu) / jnp.sqrt(var + EPS_LN) * g + b

    def coord_norm(c, mask, set_w, norm):
        m = mask[..., None]
        n_atoms = jnp.maximum(jnp.sum(mask, axis=-1, keepdims=True), 1.0)[..., None]
        com = jnp.sum(c * m, axis=2, keepdims=True) / n_atoms
        c = (c - com) * m
        if norm == "length":
            lengths = jnp.sqrt(jnp.sum(c * c, axis=-1))
            scaled = jnp.sum(lengths, axis=-1, keepdims=True)[..., None] / n_atoms
            div = scaled + EPS
        else:
            div = 1.0
        return c * set_w.reshape(1, S, 1, 1) / div * m

    vecD = p["vecD"]
    ln1_g, ln1_b, lm_b2 = vecD[0], vecD[1], vecD[2]
    ln2_g, ln2_b = vecD[3], vecD[4]
    na_ln_g, na_ln_b = vecD[5], vecD[6]
    na_in_b, na_out_b = vecD[7], vecD[8]
    lm_b1 = p["vec_dff"][0]
    eq_np_b1, eq_np_b2, msg_np_b = p["vec_dm"][0], p["vec_dm"][1], p["vec_dm"][2]
    msg_b1, msg_b2 = p["vec_msg"][0], p["vec_msg"][1]
    setw = p["setw"]

    # ---------------- NodeFeedForward ----------------
    x_ln = layer_norm(node_feats, ln1_g, ln1_b)
    cn = coord_norm(coords, node_mask, setw[0], "length")
    lengths = jnp.moveaxis(jnp.sqrt(jnp.sum(cn * cn, axis=-1)), 1, -1)       # [B, N, S]
    lm_w1 = jnp.concatenate([p["lm_w1_x"], p["lm_w1_l"]], axis=0)
    h = jnp.concatenate([x_ln, lengths], axis=-1) @ lm_w1 + lm_b1
    node_upd = jax.nn.silu(h) @ p["lm_w2"] + lm_b2
    inv = jax.nn.silu(x_ln @ p["eq_np_w1"] + eq_np_b1) @ p["eq_np_w2"] + eq_np_b2
    proj = jnp.einsum("bsnk,sp->bknp", cn, p["eq_cp_w"])
    attn = (inv[:, None, :, :, None] * proj[:, :, :, None, :]).sum(-1)
    coord_upd = jnp.einsum("bknp,ps->bsnk", attn, p["eq_ap_w"])
    c2 = coords + coord_upd
    x2 = node_feats + node_upd

    # ---------------- EdgeMessages ----------------
    x2_ln = layer_norm(x2, ln2_g, ln2_b)
    cnm = coord_norm(c2, node_mask, setw[1], "none")
    gram = jnp.einsum("bsik,bsjk->bijs", cnm, cnm)
    pn = x2_ln @ p["msg_np_w"] + msg_np_b
    msg_w1 = jnp.concatenate([p["msg_w1_s"], p["msg_w1_e"], p["msg_w1_c"]], axis=0)
    pairs = jnp.concatenate([
        jnp.broadcast_to(pn[:, :, None, :], (b_sz, n_nodes, n_nodes, dm)),
        jnp.broadcast_to(pn[:, None, :, :], (b_sz, n_nodes, n_nodes, dm)),
        gram], axis=-1)
    msgs = jax.nn.silu(pairs @ msg_w1 + msg_b1) @ p["msg_w2"] + msg_b2

    # attention mask
    amask = jnp.where(adj == 0, NEG_INF, 0.0)
    deg = jnp.sum(adj, axis=-1)
    amask = jnp.where(deg[..., None] == 0, 0.0, amask)

    # ---------------- NodeAttention ----------------
    attn_n = jax.nn.softmax(msgs[..., :H] + amask[..., None], axis=2)
    vproj = layer_norm(x2, na_ln_g, na_ln_b) @ p["na_in_w"] + na_in_b
    headv = vproj.reshape(b_sz, n_nodes, H, dh)
    attn_out = jnp.einsum("bijh,bjhd->bihd", attn_n, headv)
    w = jnp.sqrt(jnp.sum(attn_n ** 2, axis=2))
    attn_out = (attn_out * w[..., None]).reshape(b_sz, n_nodes, D)
    x_out = x2 + attn_out @ p["na_out_w"] + na_out_b

    # ---------------- CoordAttention ----------------
    cna = coord_norm(c2, node_mask, setw[2], "length")
    cproj = jnp.einsum("bsnk,sp->bknp", cna, p["ca_cp_w"])
    vdist = cproj[:, :, :, None, :] - cproj[:, :, None, :, :]
    lens = jnp.sqrt(jnp.sum(vdist ** 2, axis=1, keepdims=True))
    ndist = vdist / (lens + EPS)
    attn_c = jax.nn.softmax(msgs[..., H:H + Pc] + amask[..., None], axis=2)
    upd = (ndist * attn_c[:, None]).sum(3)
    cw = jnp.sqrt(jnp.sum(attn_c ** 2, axis=2))
    upd = upd * cw[:, None]
    cupd = jnp.einsum("bknp,ps->bsnk", upd, p["ca_ap_w"])
    c_out = c2 + cupd
    return c_out, x_out


# ------------------------------------------------------------------- parameter creation
def init_params(key, cfg):
    D = cfg["d_model"]
    dm = cfg["d_message"]
    S = cfg["n_coord_sets"]
    H = cfg["n_attn_heads"]
    dff = 4 * D
    dmo = H + S          # d_coord_message == n_coord_sets, d_edge_out is None
    Pc = S               # CoordAttention proj_sets

    def linear(k, fi, fo):
        return jax.random.normal(k, (fi, fo), jnp.float32) / jnp.sqrt(float(fi))

    ks = jax.random.split(key, 13)
    lm_w1 = linear(ks[0], D + S, dff)          # LengthsMLP first weight, split below
    msg_w1 = linear(ks[7], 2 * dm + S, dmo)    # message MLP first weight, split below

    vecD = jnp.zeros((9, D), jnp.float32)
    vecD = vecD.at[0].set(1.0).at[3].set(1.0).at[5].set(1.0)   # LayerNorm gains = 1

    return {
        "lm_w1_x": lm_w1[:D], "lm_w1_l": lm_w1[D:],
        "lm_w2": linear(ks[1], dff, D),
        "eq_np_w1": linear(ks[2], D, dm), "eq_np_w2": linear(ks[3], dm, dm),
        "eq_cp_w": linear(ks[4], S, dm), "eq_ap_w": linear(ks[5], dm, S),
        "msg_np_w": linear(ks[6], D, dm),
        "msg_w1_s": msg_w1[:dm], "msg_w1_e": msg_w1[dm:2 * dm], "msg_w1_c": msg_w1[2 * dm:],
        "msg_w2": linear(ks[8], dmo, dmo),
        "na_in_w": linear(ks[9], D, D), "na_out_w": linear(ks[10], D, D),
        "ca_cp_w": linear(ks[11], S, Pc), "ca_ap_w": linear(ks[12], Pc, S),
        # packed small vectors: [ln1_g, ln1_b, lm_b2, ln2_g, ln2_b, na_ln_g, na_ln_b, na_in_b, na_out_b]
        "vecD": vecD,
        "vec_dff": jnp.zeros((1, dff), jnp.float32),    # lm_b1
        "vec_dm": jnp.zeros((3, dm), jnp.float32),      # eq_np_b1, eq_np_b2, msg_np_b
        "vec_msg": jnp.zeros((2, dmo), jnp.float32),    # msg_b1, msg_b2
        "setw": jnp.ones((3, S), jnp.float32),          # cn1_w, cn2_w, cn3_w
    }


# ---------------------------------------------------------------------------------- main
if __name__ == "__main__":
    cfg = dict(d_model=32, d_message=8, n_coord_sets=4, n_attn_heads=8)
    B, S, N, D = 2, cfg["n_coord_sets"], 8, cfg["d_model"]

    key = jax.random.PRNGKey(0)
    k1, k2, k3, kp = jax.random.split(key, 4)
    coords = jax.random.normal(k1, (B, S, N, 3), jnp.float32)
    node_feats = jax.random.normal(k2, (B, N, D), jnp.float32)

    # first 6 nodes real, last 2 padded (same mask across coord sets)
    node_mask = jnp.concatenate(
        [jnp.ones((B, S, 6), jnp.float32), jnp.zeros((B, S, N - 6), jnp.float32)], axis=-1)

    bern = jax.random.bernoulli(k3, 0.6, (B, N, N)).astype(jnp.float32)
    adj = jnp.maximum(bern, jnp.swapaxes(bern, 1, 2))
    adj = jnp.maximum(adj, jnp.eye(N, dtype=jnp.float32)[None])
    real = node_mask[:, 0, :]
    adj = adj * real[:, :, None] * real[:, None, :]

    params = init_params(kp, cfg)

    coords_out, feats_out = equi_message_passing(coords, node_feats, adj, node_mask, params, cfg)
    jax.block_until_ready((coords_out, feats_out))

    # cross-check the Pallas path against a plain-XLA implementation of the torch module
    ref_c, ref_x = _reference(coords, node_feats, adj, node_mask, params, cfg)
    assert coords_out.shape == (B, S, N, 3) and feats_out.shape == (B, N, D)
    assert bool(jnp.all(jnp.isfinite(coords_out))) and bool(jnp.all(jnp.isfinite(feats_out)))
    assert jnp.allclose(coords_out, ref_c, atol=2e-3, rtol=2e-3)
    assert jnp.allclose(feats_out, ref_x, atol=2e-3, rtol=2e-3)

    print("KERNEL_OK")
</pallas_src>

<mosaic_0001>
module attributes {stable_mosaic.version = 11 : i64} {
  func.func @_node_kernel(%arg0: i32, %arg1: memref<1x8x12xf32, #tpu.memory_space<vmem>>, %arg2: memref<1x8x32xf32, #tpu.memory_space<vmem>>, %arg3: memref<1x8x12xf32, #tpu.memory_space<vmem>>, %arg4: memref<32x128xf32, #tpu.memory_space<vmem>>, %arg5: memref<4x128xf32, #tpu.memory_space<vmem>>, %arg6: memref<128x32xf32, #tpu.memory_space<vmem>>, %arg7: memref<32x8xf32, #tpu.memory_space<vmem>>, %arg8: memref<8x8xf32, #tpu.memory_space<vmem>>, %arg9: memref<4x8xf32, #tpu.memory_space<vmem>>, %arg10: memref<8x4xf32, #tpu.memory_space<vmem>>, %arg11: memref<32x8xf32, #tpu.memory_space<vmem>>, %arg12: memref<8x12xf32, #tpu.memory_space<vmem>>, %arg13: memref<8x12xf32, #tpu.memory_space<vmem>>, %arg14: memref<32x32xf32, #tpu.memory_space<vmem>>, %arg15: memref<4x4xf32, #tpu.memory_space<vmem>>, %arg16: memref<9x32xf32, #tpu.memory_space<vmem>>, %arg17: memref<1x128xf32, #tpu.memory_space<vmem>>, %arg18: memref<3x8xf32, #tpu.memory_space<vmem>>, %arg19: memref<2x12xf32, #tpu.memory_space<vmem>>, %arg20: memref<3x4xf32, #tpu.memory_space<vmem>>, %arg21: memref<1x8x32xf32, #tpu.memory_space<vmem>>, %arg22: memref<1x8x12xf32, #tpu.memory_space<vmem>>, %arg23: memref<1x8x12xf32, #tpu.memory_space<vmem>>, %arg24: memref<1x8x12xf32, #tpu.memory_space<vmem>>, %arg25: memref<1x8x12xf32, #tpu.memory_space<vmem>>, %arg26: memref<1x8x12xf32, #tpu.memory_space<vmem>>, %arg27: memref<1x8x32xf32, #tpu.memory_space<vmem>>) attributes {dimension_semantics = [#tpu.dimension_semantics<parallel>], iteration_bounds = array<i64: 2>, scalar_prefetch = 0 : i64, scratch_operands = 0 : i64, tpu.core_type = #tpu.core_type<tc>, window_params = [{transform_indices = @transform_0, window_bounds = array<i64: 1, 8, 12>}, {transform_indices = @transform_1, window_bounds = array<i64: 1, 8, 32>}, {transform_indices = @transform_2, window_bounds = array<i64: 1, 8, 12>}, {pipeline_mode = #tpu.pipeline_mode<synchronous>, transform_indices = @transform_3, window_bounds = array<i64: 32, 128>}, {pipeline_mode = #tpu.pipeline_mode<synchronous>, transform_indices = @transform_4, window_bounds = array<i64: 4, 128>}, {pipeline_mode = #tpu.pipeline_mode<synchronous>, transform_indices = @transform_5, window_bounds = array<i64: 128, 32>}, {pipeline_mode = #tpu.pipeline_mode<synchronous>, transform_indices = @transform_6, window_bounds = array<i64: 32, 8>}, {pipeline_mode = #tpu.pipeline_mode<synchronous>, transform_indices = @transform_7, window_bounds = array<i64: 8, 8>}, {pipeline_mode = #tpu.pipeline_mode<synchronous>, transform_indices = @transform_8, window_bounds = array<i64: 4, 8>}, {pipeline_mode = #tpu.pipeline_mode<synchronous>, transform_indices = @transform_9, window_bounds = array<i64: 8, 4>}, {pipeline_mode = #tpu.pipeline_mode<synchronous>, transform_indices = @transform_10, window_bounds = array<i64: 32, 8>}, {pipeline_mode = #tpu.pipeline_mode<synchronous>, transform_indices = @transform_11, window_bounds = array<i64: 8, 12>}, {pipeline_mode = #tpu.pipeline_mode<synchronous>, transform_indices = @transform_12, window_bounds = array<i64: 8, 12>}, {pipeline_mode = #tpu.pipeline_mode<synchronous>, transform_indices = @transform_13, window_bounds = array<i64: 32, 32>}, {pipeline_mode = #tpu.pipeline_mode<synchronous>, transform_indices = @transform_14, window_bounds = array<i64: 4, 4>}, {pipeline_mode = #tpu.pipeline_mode<synchronous>, transform_indices = @transform_15, window_bounds = array<i64: 9, 32>}, {pipeline_mode = #tpu.pipeline_mode<synchronous>, transform_indices = @transform_16, window_bounds = array<i64: 1, 128>}, {pipeline_mode = #tpu.pipeline_mode<synchronous>, transform_indices = @transform_17, window_bounds = array<i64: 3, 8>}, {pipeline_mode = #tpu.pipeline_mode<synchronous>, transform_indices = @transform_18, window_bounds = array<i64: 2, 12>}, {pipeline_mode = #tpu.pipeline_mode<synchronous>, transform_indices = @transform_19, window_bounds = array<i64: 3, 4>}, {transform_indices = @transform_20, window_bounds = array<i64: 1, 8, 32>}, {transform_indices = @transform_21, window_bounds = array<i64: 1, 8, 12>}, {transform_indices = @transform_22, window_bounds = array<i64: 1, 8, 12>}, {transform_indices = @transform_23, window_bounds = array<i64: 1, 8, 12>}, {transform_indices = @transform_24, window_bounds = array<i64: 1, 8, 12>}, {transform_indices = @transform_25, window_bounds = array<i64: 1, 8, 12>}, {transform_indices = @transform_26, window_bounds = array<i64: 1, 8, 32>}]} {
    %c0 = arith.constant 0 : index
    %c0_0 = arith.constant 0 : index
    %0 = vector.load %arg4[%c0, %c0_0] : memref<32x128xf32, #tpu.memory_space<vmem>>, vector<32x128xf32>
    %c0_1 = arith.constant 0 : index
    %c0_2 = arith.constant 0 : index
    %1 = vector.load %arg5[%c0_1, %c0_2] : memref<4x128xf32, #tpu.memory_space<vmem>>, vector<4x128xf32>
    %c0_3 = arith.constant 0 : index
    %c0_4 = arith.constant 0 : index
    %2 = vector.load %arg6[%c0_3, %c0_4] : memref<128x32xf32, #tpu.memory_space<vmem>>, vector<128x32xf32>
    %c0_5 = arith.constant 0 : index
    %c0_6 = arith.constant 0 : index
    %3 = vector.load %arg7[%c0_5, %c0_6] : memref<32x8xf32, #tpu.memory_space<vmem>>, vector<32x8xf32>
    %c0_7 = arith.constant 0 : index
    %c0_8 = arith.constant 0 : index
    %4 = vector.load %arg8[%c0_7, %c0_8] : memref<8x8xf32, #tpu.memory_space<vmem>>, vector<8x8xf32>
    %c0_9 = arith.constant 0 : index
    %c0_10 = arith.constant 0 : index
    %5 = vector.load %arg9[%c0_9, %c0_10] : memref<4x8xf32, #tpu.memory_space<vmem>>, vector<4x8xf32>
    %c0_11 = arith.constant 0 : index
    %c0_12 = arith.constant 0 : index
    %6 = vector.load %arg10[%c0_11, %c0_12] : memref<8x4xf32, #tpu.memory_space<vmem>>, vector<8x4xf32>
    %c0_13 = arith.constant 0 : index
    %c0_14 = arith.constant 0 : index
    %7 = vector.load %arg11[%c0_13, %c0_14] : memref<32x8xf32, #tpu.memory_space<vmem>>, vector<32x8xf32>
    %c0_15 = arith.constant 0 : index
    %c0_16 = arith.constant 0 : index
    %8 = vector.load %arg12[%c0_15, %c0_16] : memref<8x12xf32, #tpu.memory_space<vmem>>, vector<8x12xf32>
    %c0_17 = arith.constant 0 : index
    %c0_18 = arith.constant 0 : index
    %9 = vector.load %arg13[%c0_17, %c0_18] : memref<8x12xf32, #tpu.memory_space<vmem>>, vector<8x12xf32>
    %c0_19 = arith.constant 0 : index
    %c0_20 = arith.constant 0 : index
    %10 = vector.load %arg14[%c0_19, %c0_20] : memref<32x32xf32, #tpu.memory_space<vmem>>, vector<32x32xf32>
    %c0_21 = arith.constant 0 : index
    %c0_22 = arith.constant 0 : index
    %11 = vector.load %arg15[%c0_21, %c0_22] : memref<4x4xf32, #tpu.memory_space<vmem>>, vector<4x4xf32>
    %c0_23 = arith.constant 0 : index
    %c0_24 = arith.constant 0 : index
    %12 = vector.load %arg16[%c0_23, %c0_24] : memref<9x32xf32, #tpu.memory_space<vmem>>, vector<9x32xf32>
    %c0_25 = arith.constant 0 : index
    %c0_26 = arith.constant 0 : index
    %13 = vector.load %arg17[%c0_25, %c0_26] : memref<1x128xf32, #tpu.memory_space<vmem>>, vector<1x128xf32>
    %c0_27 = arith.constant 0 : index
    %c0_28 = arith.constant 0 : index
    %14 = vector.load %arg18[%c0_27, %c0_28] : memref<3x8xf32, #tpu.memory_space<vmem>>, vector<3x8xf32>
    %c0_29 = arith.constant 0 : index
    %c0_30 = arith.constant 0 : index
    %15 = vector.load %arg19[%c0_29, %c0_30] : memref<2x12xf32, #tpu.memory_space<vmem>>, vector<2x12xf32>
    %c0_31 = arith.constant 0 : index
    %c0_32 = arith.constant 0 : index
    %16 = vector.load %arg20[%c0_31, %c0_32] : memref<3x4xf32, #tpu.memory_space<vmem>>, vector<3x4xf32>
    %c0_33 = arith.constant 0 : index
    %c0_34 = arith.constant 0 : index
    %c0_35 = arith.constant 0 : index
    %17 = vector.load %arg1[%c0_33, %c0_34, %c0_35] : memref<1x8x12xf32, #tpu.memory_space<vmem>>, vector<1x8x12xf32>
    %18 = vector.shape_cast %17 : vector<1x8x12xf32> to vector<8x12xf32>
    %c0_36 = arith.constant 0 : index
    %c0_37 = arith.constant 0 : index
    %c0_38 = arith.constant 0 : index
    %19 = vector.load %arg2[%c0_36, %c0_37, %c0_38] : memref<1x8x32xf32, #tpu.memory_space<vmem>>, vector<1x8x32xf32>
    %20 = vector.shape_cast %19 : vector<1x8x32xf32> to vector<8x32xf32>
    %c0_39 = arith.constant 0 : index
    %c0_40 = arith.constant 0 : index
    %c0_41 = arith.constant 0 : index
    %21 = vector.load %arg3[%c0_39, %c0_40, %c0_41] : memref<1x8x12xf32, #tpu.memory_space<vmem>>, vector<1x8x12xf32>
    %22 = vector.shape_cast %21 : vector<1x8x12xf32> to vector<8x12xf32>
    %23 = vector.extract_strided_slice %12 {offsets = [0, 0], sizes = [1, 32], strides = [1, 1]} : vector<9x32xf32> to vector<1x32xf32>
    %24 = vector.extract_strided_slice %12 {offsets = [1, 0], sizes = [1, 32], strides = [1, 1]} : vector<9x32xf32> to vector<1x32xf32>
    %25 = vector.extract_strided_slice %12 {offsets = [2, 0], sizes = [1, 32], strides = [1, 1]} : vector<9x32xf32> to vector<1x32xf32>
    %26 = vector.extract_strided_slice %12 {offsets = [3, 0], sizes = [1, 32], strides = [1, 1]} : vector<9x32xf32> to vector<1x32xf32>
    %27 = vector.extract_strided_slice %12 {offsets = [4, 0], sizes = [1, 32], strides = [1, 1]} : vector<9x32xf32> to vector<1x32xf32>
    %28 = vector.extract_strided_slice %12 {offsets = [5, 0], sizes = [1, 32], strides = [1, 1]} : vector<9x32xf32> to vector<1x32xf32>
    %29 = vector.extract_strided_slice %12 {offsets = [6, 0], sizes = [1, 32], strides = [1, 1]} : vector<9x32xf32> to vector<1x32xf32>
    %30 = vector.extract_strided_slice %12 {offsets = [7, 0], sizes = [1, 32], strides = [1, 1]} : vector<9x32xf32> to vector<1x32xf32>
    %31 = vector.extract_strided_slice %14 {offsets = [0, 0], sizes = [1, 8], strides = [1, 1]} : vector<3x8xf32> to vector<1x8xf32>
    %32 = vector.extract_strided_slice %14 {offsets = [1, 0], sizes = [1, 8], strides = [1, 1]} : vector<3x8xf32> to vector<1x8xf32>
    %33 = vector.extract_strided_slice %14 {offsets = [2, 0], sizes = [1, 8], strides = [1, 1]} : vector<3x8xf32> to vector<1x8xf32>
    %34 = vector.extract_strided_slice %15 {offsets = [0, 0], sizes = [1, 12], strides = [1, 1]} : vector<2x12xf32> to vector<1x12xf32>
    %35 = vector.extract_strided_slice %16 {offsets = [0, 0], sizes = [1, 4], strides = [1, 1]} : vector<3x4xf32> to vector<1x4xf32>
    %36 = arith.mulf %18, %22 : vector<8x12xf32>
    %cst = arith.constant dense<0.000000e+00> : vector<12xf32>
    %37 = vector.multi_reduction <add>, %22, %cst [0] : vector<8x12xf32> to vector<12xf32>
    %38 = vector.shape_cast %37 : vector<12xf32> to vector<1x12xf32>
    %cst_42 = arith.constant 1.000000e+00 : f32
    %39 = vector.broadcast %cst_42 : f32 to vector<1x12xf32>
    %40 = arith.maximumf %38, %39 : vector<1x12xf32>
    %cst_43 = arith.constant dense<0.000000e+00> : vector<12xf32>
    %41 = vector.multi_reduction <add>, %36, %cst_43 [0] : vector<8x12xf32> to vector<12xf32>
    %42 = vector.shape_cast %41 : vector<12xf32> to vector<1x12xf32>
    %43 = arith.divf %42, %40 : vector<1x12xf32>
    %44 = vector.broadcast %43 : vector<1x12xf32> to vector<8x12xf32>
    %45 = arith.subf %18, %44 : vector<8x12xf32>
    %46 = arith.mulf %45, %22 : vector<8x12xf32>
    %47 = vector.extract_strided_slice %46 {offsets = [0, 0], sizes = [8, 3], strides = [1, 1]} : vector<8x12xf32> to vector<8x3xf32>
    %48 = arith.mulf %47, %47 : vector<8x3xf32>
    %cst_44 = arith.constant dense<0.000000e+00> : vector<8xf32>
    %49 = vector.multi_reduction <add>, %48, %cst_44 [1] : vector<8x3xf32> to vector<8xf32>
    %50 = vector.shape_cast %49 : vector<8xf32> to vector<8x1xf32>
    %51 = math.sqrt %50 : vector<8x1xf32>
    %52 = vector.extract_strided_slice %40 {offsets = [0, 0], sizes = [1, 1], strides = [1, 1]} : vector<1x12xf32> to vector<1x1xf32>
    %cst_45 = arith.constant dense<0.000000e+00> : vector<1xf32>
    %53 = vector.multi_reduction <add>, %51, %cst_45 [0] : vector<8x1xf32> to vector<1xf32>
    %54 = vector.shape_cast %53 : vector<1xf32> to vector<1x1xf32>
    %55 = arith.divf %54, %52 : vector<1x1xf32>
    %56 = vector.extract_strided_slice %35 {offsets = [0, 0], sizes = [1, 1], strides = [1, 1]} : vector<1x4xf32> to vector<1x1xf32>
    %cst_46 = arith.constant 9.99999997E-7 : f32
    %57 = vector.broadcast %cst_46 : f32 to vector<1x1xf32>
    %58 = arith.addf %55, %57 : vector<1x1xf32>
    %59 = arith.divf %56, %58 : vector<1x1xf32>
    %60 = vector.extract_strided_slice %46 {offsets = [0, 3], sizes = [8, 3], strides = [1, 1]} : vector<8x12xf32> to vector<8x3xf32>
    %61 = arith.mulf %60, %60 : vector<8x3xf32>
    %cst_47 = arith.constant dense<0.000000e+00> : vector<8xf32>
    %62 = vector.multi_reduction <add>, %61, %cst_47 [1] : vector<8x3xf32> to vector<8xf32>
    %63 = vector.shape_cast %62 : vector<8xf32> to vector<8x1xf32>
    %64 = math.sqrt %63 : vector<8x1xf32>
    %65 = vector.extract_strided_slice %40 {offsets = [0, 3], sizes = [1, 1], strides = [1, 1]} : vector<1x12xf32> to vector<1x1xf32>
    %cst_48 = arith.constant dense<0.000000e+00> : vector<1xf32>
    %66 = vector.multi_reduction <add>, %64, %cst_48 [0] : vector<8x1xf32> to vector<1xf32>
    %67 = vector.shape_cast %66 : vector<1xf32> to vector<1x1xf32>
    %68 = arith.divf %67, %65 : vector<1x1xf32>
    %69 = vector.extract_strided_slice %35 {offsets = [0, 1], sizes = [1, 1], strides = [1, 1]} : vector<1x4xf32> to vector<1x1xf32>
    %cst_49 = arith.constant 9.99999997E-7 : f32
    %70 = vector.broadcast %cst_49 : f32 to vector<1x1xf32>
    %71 = arith.addf %68, %70 : vector<1x1xf32>
    %72 = arith.divf %69, %71 : vector<1x1xf32>
    %73 = vector.extract_strided_slice %46 {offsets = [0, 6], sizes = [8, 3], strides = [1, 1]} : vector<8x12xf32> to vector<8x3xf32>
    %74 = arith.mulf %73, %73 : vector<8x3xf32>
    %cst_50 = arith.constant dense<0.000000e+00> : vector<8xf32>
    %75 = vector.multi_reduction <add>, %74, %cst_50 [1] : vector<8x3xf32> to vector<8xf32>
    %76 = vector.shape_cast %75 : vector<8xf32> to vector<8x1xf32>
    %77 = math.sqrt %76 : vector<8x1xf32>
    %78 = vector.extract_strided_slice %40 {offsets = [0, 6], sizes = [1, 1], strides = [1, 1]} : vector<1x12xf32> to vector<1x1xf32>
    %cst_51 = arith.constant dense<0.000000e+00> : vector<1xf32>
    %79 = vector.multi_reduction <add>, %77, %cst_51 [0] : vector<8x1xf32> to vector<1xf32>
    %80 = vector.shape_cast %79 : vector<1xf32> to vector<1x1xf32>
    %81 = arith.divf %80, %78 : vector<1x1xf32>
    %82 = vector.extract_strided_slice %35 {offsets = [0, 2], sizes = [1, 1], strides = [1, 1]} : vector<1x4xf32> to vector<1x1xf32>
    %cst_52 = arith.constant 9.99999997E-7 : f32
    %83 = vector.broadcast %cst_52 : f32 to vector<1x1xf32>
    %84 = arith.addf %81, %83 : vector<1x1xf32>
    %85 = arith.divf %82, %84 : vector<1x1xf32>
    %86 = vector.extract_strided_slice %46 {offsets = [0, 9], sizes = [8, 3], strides = [1, 1]} : vector<8x12xf32> to vector<8x3xf32>
    %87 = arith.mulf %86, %86 : vector<8x3xf32>
    %cst_53 = arith.constant dense<0.000000e+00> : vector<8xf32>
    %88 = vector.multi_reduction <add>, %87, %cst_53 [1] : vector<8x3xf32> to vector<8xf32>
    %89 = vector.shape_cast %88 : vector<8xf32> to vector<8x1xf32>
    %90 = math.sqrt %89 : vector<8x1xf32>
    %91 = vector.extract_strided_slice %40 {offsets = [0, 9], sizes = [1, 1], strides = [1, 1]} : vector<1x12xf32> to vector<1x1xf32>
    %cst_54 = arith.constant dense<0.000000e+00> : vector<1xf32>
    %92 = vector.multi_reduction <add>, %90, %cst_54 [0] : vector<8x1xf32> to vector<1xf32>
    %93 = vector.shape_cast %92 : vector<1xf32> to vector<1x1xf32>
    %94 = arith.divf %93, %91 : vector<1x1xf32>
    %95 = vector.extract_strided_slice %35 {offsets = [0, 3], sizes = [1, 1], strides = [1, 1]} : vector<1x4xf32> to vector<1x1xf32>
    %cst_55 = arith.constant 9.99999997E-7 : f32
    %96 = vector.broadcast %cst_55 : f32 to vector<1x1xf32>
    %97 = arith.addf %94, %96 : vector<1x1xf32>
    %98 = arith.divf %95, %97 : vector<1x1xf32>
    %99 = tpu.concatenate %59, %59, %59, %72, %72, %72, %85, %85, %85, %98, %98, %98 in 1 : vector<1x1xf32>, vector<1x1xf32>, vector<1x1xf32>, vector<1x1xf32>, vector<1x1xf32>, vector<1x1xf32>, vector<1x1xf32>, vector<1x1xf32>, vector<1x1xf32>, vector<1x1xf32>, vector<1x1xf32>, vector<1x1xf32> -> vector<1x12xf32>
    %cst_56 = arith.constant dense<0.000000e+00> : vector<8xf32>
    %100 = vector.multi_reduction <add>, %20, %cst_56 [1] : vector<8x32xf32> to vector<8xf32>
    %101 = vector.shape_cast %100 : vector<8xf32> to vector<8x1xf32>
    %cst_57 = arith.constant 3.200000e+01 : f32
    %102 = vector.broadcast %cst_57 : f32 to vector<8x1xf32>
    %103 = arith.divf %101, %102 : vector<8x1xf32>
    %104 = vector.broadcast %103 : vector<8x1xf32> to vector<8x32xf32>
    %105 = arith.subf %20, %104 : vector<8x32xf32>
    %106 = arith.mulf %105, %105 : vector<8x32xf32>
    %cst_58 = arith.constant dense<0.000000e+00> : vector<8xf32>
    %107 = vector.multi_reduction <add>, %106, %cst_58 [1] : vector<8x32xf32> to vector<8xf32>
    %108 = vector.shape_cast %107 : vector<8xf32> to vector<8x1xf32>
    %cst_59 = arith.constant 3.200000e+01 : f32
    %109 = vector.broadcast %cst_59 : f32 to vector<8x1xf32>
    %110 = arith.divf %108, %109 : vector<8x1xf32>
    %111 = vector.broadcast %103 : vector<8x1xf32> to vector<8x32xf32>
    %112 = arith.subf %20, %111 : vector<8x32xf32>
    %cst_60 = arith.constant 9.99999974E-6 : f32
    %113 = vector.broadcast %cst_60 : f32 to vector<8x1xf32>
    %114 = arith.addf %110, %113 : vector<8x1xf32>
    %115 = math.rsqrt %114 : vector<8x1xf32>
    %116 = vector.broadcast %115 : vector<8x1xf32> to vector<8x32xf32>
    %117 = arith.mulf %112, %116 : vector<8x32xf32>
    %118 = vector.broadcast %23 : vector<1x32xf32> to vector<8x32xf32>
    %119 = arith.mulf %117, %118 : vector<8x32xf32>
    %120 = vector.broadcast %24 : vector<1x32xf32> to vector<8x32xf32>
    %121 = arith.addf %119, %120 : vector<8x32xf32>
    %122 = vector.broadcast %43 : vector<1x12xf32> to vector<8x12xf32>
    %123 = arith.subf %18, %122 : vector<8x12xf32>
    %124 = arith.mulf %123, %22 : vector<8x12xf32>
    %125 = vector.broadcast %99 : vector<1x12xf32> to vector<8x12xf32>
    %126 = arith.mulf %124, %125 : vector<8x12xf32>
    %cst_61 = arith.constant dense<0.000000e+00> : vector<8x128xf32>
    %127 = tpu.matmul %121, %0, %cst_61 {dimension_numbers = #tpu.dot_dimension_numbers<[1], [0], [0], [1], [0, 0, 1, 1], [], []>} : vector<8x32xf32>, vector<32x128xf32>, vector<8x128xf32> -> vector<8x128xf32>
    %128 = vector.broadcast %13 : vector<1x128xf32> to vector<8x128xf32>
    %129 = arith.addf %127, %128 : vector<8x128xf32>
    %130 = vector.extract_strided_slice %126 {offsets = [0, 0], sizes = [8, 3], strides = [1, 1]} : vector<8x12xf32> to vector<8x3xf32>
    %131 = arith.mulf %130, %130 : vector<8x3xf32>
    %cst_62 = arith.constant dense<0.000000e+00> : vector<8xf32>
    %132 = vector.multi_reduction <add>, %131, %cst_62 [1] : vector<8x3xf32> to vector<8xf32>
    %133 = vector.shape_cast %132 : vector<8xf32> to vector<8x1xf32>
    %134 = math.sqrt %133 : vector<8x1xf32>
    %135 = vector.extract_strided_slice %1 {offsets = [0, 0], sizes = [1, 128], strides = [1, 1]} : vector<4x128xf32> to vector<1x128xf32>
    %136 = vector.broadcast %134 : vector<8x1xf32> to vector<8x128xf32>
    %137 = vector.broadcast %135 : vector<1x128xf32> to vector<8x128xf32>
    %138 = arith.mulf %136, %137 : vector<8x128xf32>
    %139 = arith.addf %129, %138 : vector<8x128xf32>
    %140 = vector.extract_strided_slice %126 {offsets = [0, 3], sizes = [8, 3], strides = [1, 1]} : vector<8x12xf32> to vector<8x3xf32>
    %141 = arith.mulf %140, %140 : vector<8x3xf32>
    %cst_63 = arith.constant dense<0.000000e+00> : vector<8xf32>
    %142 = vector.multi_reduction <add>, %141, %cst_63 [1] : vector<8x3xf32> to vector<8xf32>
    %143 = vector.shape_cast %142 : vector<8xf32> to vector<8x1xf32>
    %144 = math.sqrt %143 : vector<8x1xf32>
    %145 = vector.extract_strided_slice %1 {offsets = [1, 0], sizes = [1, 128], strides = [1, 1]} : vector<4x128xf32> to vector<1x128xf32>
    %146 = vector.broadcast %144 : vector<8x1xf32> to vector<8x128xf32>
    %147 = vector.broadcast %145 : vector<1x128xf32> to vector<8x128xf32>
    %148 = arith.mulf %146, %147 : vector<8x128xf32>
    %149 = arith.addf %139, %148 : vector<8x128xf32>
    %150 = vector.extract_strided_slice %126 {offsets = [0, 6], sizes = [8, 3], strides = [1, 1]} : vector<8x12xf32> to vector<8x3xf32>
    %151 = arith.mulf %150, %150 : vector<8x3xf32>
    %cst_64 = arith.constant dense<0.000000e+00> : vector<8xf32>
    %152 = vector.multi_reduction <add>, %151, %cst_64 [1] : vector<8x3xf32> to vector<8xf32>
    %153 = vector.shape_cast %152 : vector<8xf32> to vector<8x1xf32>
    %154 = math.sqrt %153 : vector<8x1xf32>
    %155 = vector.extract_strided_slice %1 {offsets = [2, 0], sizes = [1, 128], strides = [1, 1]} : vector<4x128xf32> to vector<1x128xf32>
    %156 = vector.broadcast %154 : vector<8x1xf32> to vector<8x128xf32>
    %157 = vector.broadcast %155 : vector<1x128xf32> to vector<8x128xf32>
    %158 = arith.mulf %156, %157 : vector<8x128xf32>
    %159 = arith.addf %149, %158 : vector<8x128xf32>
    %160 = vector.extract_strided_slice %126 {offsets = [0, 9], sizes = [8, 3], strides = [1, 1]} : vector<8x12xf32> to vector<8x3xf32>
    %161 = arith.mulf %160, %160 : vector<8x3xf32>
    %cst_65 = arith.constant dense<0.000000e+00> : vector<8xf32>
    %162 = vector.multi_reduction <add>, %161, %cst_65 [1] : vector<8x3xf32> to vector<8xf32>
    %163 = vector.shape_cast %162 : vector<8xf32> to vector<8x1xf32>
    %164 = math.sqrt %163 : vector<8x1xf32>
    %165 = vector.extract_strided_slice %1 {offsets = [3, 0], sizes = [1, 128], strides = [1, 1]} : vector<4x128xf32> to vector<1x128xf32>
    %166 = vector.broadcast %164 : vector<8x1xf32> to vector<8x128xf32>
    %167 = vector.broadcast %165 : vector<1x128xf32> to vector<8x128xf32>
    %168 = arith.mulf %166, %167 : vector<8x128xf32>
    %169 = arith.addf %159, %168 : vector<8x128xf32>
    %170 = arith.negf %169 : vector<8x128xf32>
    %171 = math.exp %170 : vector<8x128xf32>
    %cst_66 = arith.constant 1.000000e+00 : f32
    %172 = vector.broadcast %cst_66 : f32 to vector<8x128xf32>
    %173 = arith.addf %172, %171 : vector<8x128xf32>
    %174 = arith.divf %172, %173 : vector<8x128xf32>
    %175 = arith.mulf %169, %174 : vector<8x128xf32>
    %cst_67 = arith.constant dense<0.000000e+00> : vector<8x32xf32>
    %176 = tpu.matmul %175, %2, %cst_67 {dimension_numbers = #tpu.dot_dimension_numbers<[1], [0], [0], [1], [0, 0, 1, 1], [], []>} : vector<8x128xf32>, vector<128x32xf32>, vector<8x32xf32> -> vector<8x32xf32>
    %177 = arith.addf %20, %176 : vector<8x32xf32>
    %178 = vector.broadcast %25 : vector<1x32xf32> to vector<8x32xf32>
    %179 = arith.addf %177, %178 : vector<8x32xf32>
    %cst_68 = arith.constant dense<0.000000e+00> : vector<8x8xf32>
    %180 = tpu.matmul %121, %3, %cst_68 {dimension_numbers = #tpu.dot_dimension_numbers<[1], [0], [0], [1], [0, 0, 1, 1], [], []>} : vector<8x32xf32>, vector<32x8xf32>, vector<8x8xf32> -> vector<8x8xf32>
    %181 = vector.broadcast %31 : vector<1x8xf32> to vector<8x8xf32>
    %182 = arith.addf %180, %181 : vector<8x8xf32>
    %183 = arith.negf %182 : vector<8x8xf32>
    %184 = math.exp %183 : vector<8x8xf32>
    %cst_69 = arith.constant 1.000000e+00 : f32
    %185 = vector.broadcast %cst_69 : f32 to vector<8x8xf32>
    %186 = arith.addf %185, %184 : vector<8x8xf32>
    %187 = arith.divf %185, %186 : vector<8x8xf32>
    %188 = arith.mulf %182, %187 : vector<8x8xf32>
    %cst_70 = arith.constant dense<0.000000e+00> : vector<8x8xf32>
    %189 = tpu.matmul %188, %4, %cst_70 {dimension_numbers = #tpu.dot_dimension_numbers<[1], [0], [0], [1], [0, 0, 1, 1], [], []>} : vector<8x8xf32>, vector<8x8xf32>, vector<8x8xf32> -> vector<8x8xf32>
    %190 = vector.broadcast %32 : vector<1x8xf32> to vector<8x8xf32>
    %191 = arith.addf %189, %190 : vector<8x8xf32>
    %cst_71 = arith.constant dense<0.000000e+00> : vector<8x4xf32>
    %192 = tpu.matmul %191, %6, %cst_71 {dimension_numbers = #tpu.dot_dimension_numbers<[1], [0], [0], [1], [0, 0, 1, 1], [], []>} : vector<8x8xf32>, vector<8x4xf32>, vector<8x4xf32> -> vector<8x4xf32>
    %cst_72 = arith.constant dense<0.000000e+00> : vector<4xf32>
    %193 = vector.multi_reduction <add>, %5, %cst_72 [1] : vector<4x8xf32> to vector<4xf32>
    %194 = vector.shape_cast %193 : vector<4xf32> to vector<4x1xf32>
    %195 = vector.extract_strided_slice %126 {offsets = [0, 0], sizes = [8, 3], strides = [1, 1]} : vector<8x12xf32> to vector<8x3xf32>
    %196 = vector.extract_strided_slice %194 {offsets = [0, 0], sizes = [1, 1], strides = [1, 1]} : vector<4x1xf32> to vector<1x1xf32>
    %197 = vector.broadcast %196 : vector<1x1xf32> to vector<8x3xf32>
    %198 = arith.mulf %195, %197 : vector<8x3xf32>
    %199 = vector.extract_strided_slice %126 {offsets = [0, 3], sizes = [8, 3], strides = [1, 1]} : vector<8x12xf32> to vector<8x3xf32>
    %200 = vector.extract_strided_slice %194 {offsets = [1, 0], sizes = [1, 1], strides = [1, 1]} : vector<4x1xf32> to vector<1x1xf32>
    %201 = vector.broadcast %200 : vector<1x1xf32> to vector<8x3xf32>
    %202 = arith.mulf %199, %201 : vector<8x3xf32>
    %203 = arith.addf %198, %202 : vector<8x3xf32>
    %204 = vector.extract_strided_slice %126 {offsets = [0, 6], sizes = [8, 3], strides = [1, 1]} : vector<8x12xf32> to vector<8x3xf32>
    %205 = vector.extract_strided_slice %194 {offsets = [2, 0], sizes = [1, 1], strides = [1, 1]} : vector<4x1xf32> to vector<1x1xf32>
    %206 = vector.broadcast %205 : vector<1x1xf32> to vector<8x3xf32>
    %207 = arith.mulf %204, %206 : vector<8x3xf32>
    %208 = arith.addf %203, %207 : vector<8x3xf32>
    %209 = vector.extract_strided_slice %126 {offsets = [0, 9], sizes = [8, 3], strides = [1, 1]} : vector<8x12xf32> to vector<8x3xf32>
    %210 = vector.extract_strided_slice %194 {offsets = [3, 0], sizes = [1, 1], strides = [1, 1]} : vector<4x1xf32> to vector<1x1xf32>
    %211 = vector.broadcast %210 : vector<1x1xf32> to vector<8x3xf32>
    %212 = arith.mulf %209, %211 : vector<8x3xf32>
    %213 = arith.addf %208, %212 : vector<8x3xf32>
    %214 = vector.extract_strided_slice %192 {offsets = [0, 0], sizes = [8, 1], strides = [1, 1]} : vector<8x4xf32> to vector<8x1xf32>
    %215 = vector.broadcast %214 : vector<8x1xf32> to vector<8x3xf32>
    %216 = arith.mulf %215, %213 : vector<8x3xf32>
    %217 = vector.extract_strided_slice %192 {offsets = [0, 1], sizes = [8, 1], strides = [1, 1]} : vector<8x4xf32> to vector<8x1xf32>
    %218 = vector.broadcast %217 : vector<8x1xf32> to vector<8x3xf32>
    %219 = arith.mulf %218, %213 : vector<8x3xf32>
    %220 = vector.extract_strided_slice %192 {offsets = [0, 2], sizes = [8, 1], strides = [1, 1]} : vector<8x4xf32> to vector<8x1xf32>
    %221 = vector.broadcast %220 : vector<8x1xf32> to vector<8x3xf32>
    %222 = arith.mulf %221, %213 : vector<8x3xf32>
    %223 = vector.extract_strided_slice %192 {offsets = [0, 3], sizes = [8, 1], strides = [1, 1]} : vector<8x4xf32> to vector<8x1xf32>
    %224 = vector.broadcast %223 : vector<8x1xf32> to vector<8x3xf32>
    %225 = arith.mulf %224, %213 : vector<8x3xf32>
    %226 = tpu.concatenate %216, %219, %222, %225 in 1 : vector<8x3xf32>, vector<8x3xf32>, vector<8x3xf32>, vector<8x3xf32> -> vector<8x12xf32>
    %227 = arith.addf %18, %226 : vector<8x12xf32>
    %228 = vector.extract_strided_slice %16 {offsets = [1, 0], sizes = [1, 4], strides = [1, 1]} : vector<3x4xf32> to vector<1x4xf32>
    %229 = arith.mulf %227, %22 : vector<8x12xf32>
    %cst_73 = arith.constant dense<0.000000e+00> : vector<12xf32>
    %230 = vector.multi_reduction <add>, %22, %cst_73 [0] : vector<8x12xf32> to vector<12xf32>
    %231 = vector.shape_cast %230 : vector<12xf32> to vector<1x12xf32>
    %cst_74 = arith.constant 1.000000e+00 : f32
    %232 = vector.broadcast %cst_74 : f32 to vector<1x12xf32>
    %233 = arith.maximumf %231, %232 : vector<1x12xf32>
    %cst_75 = arith.constant dense<0.000000e+00> : vector<12xf32>
    %234 = vector.multi_reduction <add>, %229, %cst_75 [0] : vector<8x12xf32> to vector<12xf32>
    %235 = vector.shape_cast %234 : vector<12xf32> to vector<1x12xf32>
    %236 = arith.divf %235, %233 : vector<1x12xf32>
    %237 = vector.extract_strided_slice %228 {offsets = [0, 0], sizes = [1, 1], strides = [1, 1]} : vector<1x4xf32> to vector<1x1xf32>
    %238 = vector.extract_strided_slice %228 {offsets = [0, 1], sizes = [1, 1], strides = [1, 1]} : vector<1x4xf32> to vector<1x1xf32>
    %239 = vector.extract_strided_slice %228 {offsets = [0, 2], sizes = [1, 1], strides = [1, 1]} : vector<1x4xf32> to vector<1x1xf32>
    %240 = vector.extract_strided_slice %228 {offsets = [0, 3], sizes = [1, 1], strides = [1, 1]} : vector<1x4xf32> to vector<1x1xf32>
    %241 = tpu.concatenate %237, %237, %237, %238, %238, %238, %239, %239, %239, %240, %240, %240 in 1 : vector<1x1xf32>, vector<1x1xf32>, vector<1x1xf32>, vector<1x1xf32>, vector<1x1xf32>, vector<1x1xf32>, vector<1x1xf32>, vector<1x1xf32>, vector<1x1xf32>, vector<1x1xf32>, vector<1x1xf32>, vector<1x1xf32> -> vector<1x12xf32>
    %242 = vector.extract_strided_slice %16 {offsets = [2, 0], sizes = [1, 4], strides = [1, 1]} : vector<3x4xf32> to vector<1x4xf32>
    %243 = arith.mulf %227, %22 : vector<8x12xf32>
    %cst_76 = arith.constant dense<0.000000e+00> : vector<12xf32>
    %244 = vector.multi_reduction <add>, %22, %cst_76 [0] : vector<8x12xf32> to vector<12xf32>
    %245 = vector.shape_cast %244 : vector<12xf32> to vector<1x12xf32>
    %cst_77 = arith.constant 1.000000e+00 : f32
    %246 = vector.broadcast %cst_77 : f32 to vector<1x12xf32>
    %247 = arith.maximumf %245, %246 : vector<1x12xf32>
    %cst_78 = arith.constant dense<0.000000e+00> : vector<12xf32>
    %248 = vector.multi_reduction <add>, %243, %cst_78 [0] : vector<8x12xf32> to vector<12xf32>
    %249 = vector.shape_cast %248 : vector<12xf32> to vector<1x12xf32>
    %250 = arith.divf %249, %247 : vector<1x12xf32>
    %251 = vector.broadcast %250 : vector<1x12xf32> to vector<8x12xf32>
    %252 = arith.subf %227, %251 : vector<8x12xf32>
    %253 = arith.mulf %252, %22 : vector<8x12xf32>
    %254 = vector.extract_strided_slice %253 {offsets = [0, 0], sizes = [8, 3], strides = [1, 1]} : vector<8x12xf32> to vector<8x3xf32>
    %255 = arith.mulf %254, %254 : vector<8x3xf32>
    %cst_79 = arith.constant dense<0.000000e+00> : vector<8xf32>
    %256 = vector.multi_reduction <add>, %255, %cst_79 [1] : vector<8x3xf32> to vector<8xf32>
    %257 = vector.shape_cast %256 : vector<8xf32> to vector<8x1xf32>
    %258 = math.sqrt %257 : vector<8x1xf32>
    %259 = vector.extract_strided_slice %247 {offsets = [0, 0], sizes = [1, 1], strides = [1, 1]} : vector<1x12xf32> to vector<1x1xf32>
    %cst_80 = arith.constant dense<0.000000e+00> : vector<1xf32>
    %260 = vector.multi_reduction <add>, %258, %cst_80 [0] : vector<8x1xf32> to vector<1xf32>
    %261 = vector.shape_cast %260 : vector<1xf32> to vector<1x1xf32>
    %262 = arith.divf %261, %259 : vector<1x1xf32>
    %263 = vector.extract_strided_slice %242 {offsets = [0, 0], sizes = [1, 1], strides = [1, 1]} : vector<1x4xf32> to vector<1x1xf32>
    %cst_81 = arith.constant 9.99999997E-7 : f32
    %264 = vector.broadcast %cst_81 : f32 to vector<1x1xf32>
    %265 = arith.addf %262, %264 : vector<1x1xf32>
    %266 = arith.divf %263, %265 : vector<1x1xf32>
    %267 = vector.extract_strided_slice %253 {offsets = [0, 3], sizes = [8, 3], strides = [1, 1]} : vector<8x12xf32> to vector<8x3xf32>
    %268 = arith.mulf %267, %267 : vector<8x3xf32>
    %cst_82 = arith.constant dense<0.000000e+00> : vector<8xf32>
    %269 = vector.multi_reduction <add>, %268, %cst_82 [1] : vector<8x3xf32> to vector<8xf32>
    %270 = vector.shape_cast %269 : vector<8xf32> to vector<8x1xf32>
    %271 = math.sqrt %270 : vector<8x1xf32>
    %272 = vector.extract_strided_slice %247 {offsets = [0, 3], sizes = [1, 1], strides = [1, 1]} : vector<1x12xf32> to vector<1x1xf32>
    %cst_83 = arith.constant dense<0.000000e+00> : vector<1xf32>
    %273 = vector.multi_reduction <add>, %271, %cst_83 [0] : vector<8x1xf32> to vector<1xf32>
    %274 = vector.shape_cast %273 : vector<1xf32> to vector<1x1xf32>
    %275 = arith.divf %274, %272 : vector<1x1xf32>
    %276 = vector.extract_strided_slice %242 {offsets = [0, 1], sizes = [1, 1], strides = [1, 1]} : vector<1x4xf32> to vector<1x1xf32>
    %cst_84 = arith.constant 9.99999997E-7 : f32
    %277 = vector.broadcast %cst_84 : f32 to vector<1x1xf32>
    %278 = arith.addf %275, %277 : vector<1x1xf32>
    %279 = arith.divf %276, %278 : vector<1x1xf32>
    %280 = vector.extract_strided_slice %253 {offsets = [0, 6], sizes = [8, 3], strides = [1, 1]} : vector<8x12xf32> to vector<8x3xf32>
    %281 = arith.mulf %280, %280 : vector<8x3xf32>
    %cst_85 = arith.constant dense<0.000000e+00> : vector<8xf32>
    %282 = vector.multi_reduction <add>, %281, %cst_85 [1] : vector<8x3xf32> to vector<8xf32>
    %283 = vector.shape_cast %282 : vector<8xf32> to vector<8x1xf32>
    %284 = math.sqrt %283 : vector<8x1xf32>
    %285 = vector.extract_strided_slice %247 {offsets = [0, 6], sizes = [1, 1], strides = [1, 1]} : vector<1x12xf32> to vector<1x1xf32>
    %cst_86 = arith.constant dense<0.000000e+00> : vector<1xf32>
    %286 = vector.multi_reduction <add>, %284, %cst_86 [0] : vector<8x1xf32> to vector<1xf32>
    %287 = vector.shape_cast %286 : vector<1xf32> to vector<1x1xf32>
    %288 = arith.divf %287, %285 : vector<1x1xf32>
    %289 = vector.extract_strided_slice %242 {offsets = [0, 2], sizes = [1, 1], strides = [1, 1]} : vector<1x4xf32> to vector<1x1xf32>
    %cst_87 = arith.constant 9.99999997E-7 : f32
    %290 = vector.broadcast %cst_87 : f32 to vector<1x1xf32>
    %291 = arith.addf %288, %290 : vector<1x1xf32>
    %292 = arith.divf %289, %291 : vector<1x1xf32>
    %293 = vector.extract_strided_slice %253 {offsets = [0, 9], sizes = [8, 3], strides = [1, 1]} : vector<8x12xf32> to vector<8x3xf32>
    %294 = arith.mulf %293, %293 : vector<8x3xf32>
    %cst_88 = arith.constant dense<0.000000e+00> : vector<8xf32>
    %295 = vector.multi_reduction <add>, %294, %cst_88 [1] : vector<8x3xf32> to vector<8xf32>
    %296 = vector.shape_cast %295 : vector<8xf32> to vector<8x1xf32>
    %297 = math.sqrt %296 : vector<8x1xf32>
    %298 = vector.extract_strided_slice %247 {offsets = [0, 9], sizes = [1, 1], strides = [1, 1]} : vector<1x12xf32> to vector<1x1xf32>
    %cst_89 = arith.constant dense<0.000000e+00> : vector<1xf32>
    %299 = vector.multi_reduction <add>, %297, %cst_89 [0] : vector<8x1xf32> to vector<1xf32>
    %300 = vector.shape_cast %299 : vector<1xf32> to vector<1x1xf32>
    %301 = arith.divf %300, %298 : vector<1x1xf32>
    %302 = vector.extract_strided_slice %242 {offsets = [0, 3], sizes = [1, 1], strides = [1, 1]} : vector<1x4xf32> to vector<1x1xf32>
    %cst_90 = arith.constant 9.99999997E-7 : f32
    %303 = vector.broadcast %cst_90 : f32 to vector<1x1xf32>
    %304 = arith.addf %301, %303 : vector<1x1xf32>
    %305 = arith.divf %302, %304 : vector<1x1xf32>
    %306 = tpu.concatenate %266, %266, %266, %279, %279, %279, %292, %292, %292, %305, %305, %305 in 1 : vector<1x1xf32>, vector<1x1xf32>, vector<1x1xf32>, vector<1x1xf32>, vector<1x1xf32>, vector<1x1xf32>, vector<1x1xf32>, vector<1x1xf32>, vector<1x1xf32>, vector<1x1xf32>, vector<1x1xf32>, vector<1x1xf32> -> vector<1x12xf32>
    %307 = vector.broadcast %236 : vector<1x12xf32> to vector<8x12xf32>
    %308 = arith.subf %227, %307 : vector<8x12xf32>
    %309 = arith.mulf %308, %22 : vector<8x12xf32>
    %310 = vector.broadcast %241 : vector<1x12xf32> to vector<8x12xf32>
    %311 = arith.mulf %309, %310 : vector<8x12xf32>
    %312 = vector.broadcast %250 : vector<1x12xf32> to vector<8x12xf32>
    %313 = arith.subf %227, %312 : vector<8x12xf32>
    %314 = arith.mulf %313, %22 : vector<8x12xf32>
    %315 = vector.broadcast %306 : vector<1x12xf32> to vector<8x12xf32>
    %316 = arith.mulf %314, %315 : vector<8x12xf32>
    %317 = vector.extract_strided_slice %316 {offsets = [0, 0], sizes = [8, 3], strides = [1, 1]} : vector<8x12xf32> to vector<8x3xf32>
    %318 = vector.extract_strided_slice %11 {offsets = [0, 0], sizes = [1, 1], strides = [1, 1]} : vector<4x4xf32> to vector<1x1xf32>
    %319 = vector.broadcast %318 : vector<1x1xf32> to vector<8x3xf32>
    %320 = arith.mulf %317, %319 : vector<8x3xf32>
    %321 = vector.extract_strided_slice %316 {offsets = [0, 3], sizes = [8, 3], strides = [1, 1]} : vector<8x12xf32> to vector<8x3xf32>
    %322 = vector.extract_strided_slice %11 {offsets = [1, 0], sizes = [1, 1], strides = [1, 1]} : vector<4x4xf32> to vector<1x1xf32>
    %323 = vector.broadcast %322 : vector<1x1xf32> to vector<8x3xf32>
    %324 = arith.mulf %321, %323 : vector<8x3xf32>
    %325 = arith.addf %320, %324 : vector<8x3xf32>
    %326 = vector.extract_strided_slice %316 {offsets = [0, 6], sizes = [8, 3], strides = [1, 1]} : vector<8x12xf32> to vector<8x3xf32>
    %327 = vector.extract_strided_slice %11 {offsets = [2, 0], sizes = [1, 1], strides = [1, 1]} : vector<4x4xf32> to vector<1x1xf32>
    %328 = vector.broadcast %327 : vector<1x1xf32> to vector<8x3xf32>
    %329 = arith.mulf %326, %328 : vector<8x3xf32>
    %330 = arith.addf %325, %329 : vector<8x3xf32>
    %331 = vector.extract_strided_slice %316 {offsets = [0, 9], sizes = [8, 3], strides = [1, 1]} : vector<8x12xf32> to vector<8x3xf32>
    %332 = vector.extract_strided_slice %11 {offsets = [3, 0], sizes = [1, 1], strides = [1, 1]} : vector<4x4xf32> to vector<1x1xf32>
    %333 = vector.broadcast %332 : vector<1x1xf32> to vector<8x3xf32>
    %334 = arith.mulf %331, %333 : vector<8x3xf32>
    %335 = arith.addf %330, %334 : vector<8x3xf32>
    %336 = vector.extract_strided_slice %316 {offsets = [0, 0], sizes = [8, 3], strides = [1, 1]} : vector<8x12xf32> to vector<8x3xf32>
    %337 = vector.extract_strided_slice %11 {offsets = [0, 1], sizes = [1, 1], strides = [1, 1]} : vector<4x4xf32> to vector<1x1xf32>
    %338 = vector.broadcast %337 : vector<1x1xf32> to vector<8x3xf32>
    %339 = arith.mulf %336, %338 : vector<8x3xf32>
    %340 = vector.extract_strided_slice %316 {offsets = [0, 3], sizes = [8, 3], strides = [1, 1]} : vector<8x12xf32> to vector<8x3xf32>
    %341 = vector.extract_strided_slice %11 {offsets = [1, 1], sizes = [1, 1], strides = [1, 1]} : vector<4x4xf32> to vector<1x1xf32>
    %342 = vector.broadcast %341 : vector<1x1xf32> to vector<8x3xf32>
    %343 = arith.mulf %340, %342 : vector<8x3xf32>
    %344 = arith.addf %339, %343 : vector<8x3xf32>
    %345 = vector.extract_strided_slice %316 {offsets = [0, 6], sizes = [8, 3], strides = [1, 1]} : vector<8x12xf32> to vector<8x3xf32>
    %346 = vector.extract_strided_slice %11 {offsets = [2, 1], sizes = [1, 1], strides = [1, 1]} : vector<4x4xf32> to vector<1x1xf32>
    %347 = vector.broadcast %346 : vector<1x1xf32> to vector<8x3xf32>
    %348 = arith.mulf %345, %347 : vector<8x3xf32>
    %349 = arith.addf %344, %348 : vector<8x3xf32>
    %350 = vector.extract_strided_slice %316 {offsets = [0, 9], sizes = [8, 3], strides = [1, 1]} : vector<8x12xf32> to vector<8x3xf32>
    %351 = vector.extract_strided_slice %11 {offsets = [3, 1], sizes = [1, 1], strides = [1, 1]} : vector<4x4xf32> to vector<1x1xf32>
    %352 = vector.broadcast %351 : vector<1x1xf32> to vector<8x3xf32>
    %353 = arith.mulf %350, %352 : vector<8x3xf32>
    %354 = arith.addf %349, %353 : vector<8x3xf32>
    %355 = vector.extract_strided_slice %316 {offsets = [0, 0], sizes = [8, 3], strides = [1, 1]} : vector<8x12xf32> to vector<8x3xf32>
    %356 = vector.extract_strided_slice %11 {offsets = [0, 2], sizes = [1, 1], strides = [1, 1]} : vector<4x4xf32> to vector<1x1xf32>
    %357 = vector.broadcast %356 : vector<1x1xf32> to vector<8x3xf32>
    %358 = arith.mulf %355, %357 : vector<8x3xf32>
    %359 = vector.extract_strided_slice %316 {offsets = [0, 3], sizes = [8, 3], strides = [1, 1]} : vector<8x12xf32> to vector<8x3xf32>
    %360 = vector.extract_strided_slice %11 {offsets = [1, 2], sizes = [1, 1], strides = [1, 1]} : vector<4x4xf32> to vector<1x1xf32>
    %361 = vector.broadcast %360 : vector<1x1xf32> to vector<8x3xf32>
    %362 = arith.mulf %359, %361 : vector<8x3xf32>
    %363 = arith.addf %358, %362 : vector<8x3xf32>
    %364 = vector.extract_strided_slice %316 {offsets = [0, 6], sizes = [8, 3], strides = [1, 1]} : vector<8x12xf32> to vector<8x3xf32>
    %365 = vector.extract_strided_slice %11 {offsets = [2, 2], sizes = [1, 1], strides = [1, 1]} : vector<4x4xf32> to vector<1x1xf32>
    %366 = vector.broadcast %365 : vector<1x1xf32> to vector<8x3xf32>
    %367 = arith.mulf %364, %366 : vector<8x3xf32>
    %368 = arith.addf %363, %367 : vector<8x3xf32>
    %369 = vector.extract_strided_slice %316 {offsets = [0, 9], sizes = [8, 3], strides = [1, 1]} : vector<8x12xf32> to vector<8x3xf32>
    %370 = vector.extract_strided_slice %11 {offsets = [3, 2], sizes = [1, 1], strides = [1, 1]} : vector<4x4xf32> to vector<1x1xf32>
    %371 = vector.broadcast %370 : vector<1x1xf32> to vector<8x3xf32>
    %372 = arith.mulf %369, %371 : vector<8x3xf32>
    %373 = arith.addf %368, %372 : vector<8x3xf32>
    %374 = vector.extract_strided_slice %316 {offsets = [0, 0], sizes = [8, 3], strides = [1, 1]} : vector<8x12xf32> to vector<8x3xf32>
    %375 = vector.extract_strided_slice %11 {offsets = [0, 3], sizes = [1, 1], strides = [1, 1]} : vector<4x4xf32> to vector<1x1xf32>
    %376 = vector.broadcast %375 : vector<1x1xf32> to vector<8x3xf32>
    %377 = arith.mulf %374, %376 : vector<8x3xf32>
    %378 = vector.extract_strided_slice %316 {offsets = [0, 3], sizes = [8, 3], strides = [1, 1]} : vector<8x12xf32> to vector<8x3xf32>
    %379 = vector.extract_strided_slice %11 {offsets = [1, 3], sizes = [1, 1], strides = [1, 1]} : vector<4x4xf32> to vector<1x1xf32>
    %380 = vector.broadcast %379 : vector<1x1xf32> to vector<8x3xf32>
    %381 = arith.mulf %378, %380 : vector<8x3xf32>
    %382 = arith.addf %377, %381 : vector<8x3xf32>
    %383 = vector.extract_strided_slice %316 {offsets = [0, 6], sizes = [8, 3], strides = [1, 1]} : vector<8x12xf32> to vector<8x3xf32>
    %384 = vector.extract_strided_slice %11 {offsets = [2, 3], sizes = [1, 1], strides = [1, 1]} : vector<4x4xf32> to vector<1x1xf32>
    %385 = vector.broadcast %384 : vector<1x1xf32> to vector<8x3xf32>
    %386 = arith.mulf %383, %385 : vector<8x3xf32>
    %387 = arith.addf %382, %386 : vector<8x3xf32>
    %388 = vector.extract_strided_slice %316 {offsets = [0, 9], sizes = [8, 3], strides = [1, 1]} : vector<8x12xf32> to vector<8x3xf32>
    %389 = vector.extract_strided_slice %11 {offsets = [3, 3], sizes = [1, 1], strides = [1, 1]} : vector<4x4xf32> to vector<1x1xf32>
    %390 = vector.broadcast %389 : vector<1x1xf32> to vector<8x3xf32>
    %391 = arith.mulf %388, %390 : vector<8x3xf32>
    %392 = arith.addf %387, %391 : vector<8x3xf32>
    %393 = tpu.concatenate %335, %354, %373, %392 in 1 : vector<8x3xf32>, vector<8x3xf32>, vector<8x3xf32>, vector<8x3xf32> -> vector<8x12xf32>
    %cst_91 = arith.constant dense<0.000000e+00> : vector<8xf32>
    %394 = vector.multi_reduction <add>, %179, %cst_91 [1] : vector<8x32xf32> to vector<8xf32>
    %395 = vector.shape_cast %394 : vector<8xf32> to vector<8x1xf32>
    %cst_92 = arith.constant 3.200000e+01 : f32
    %396 = vector.broadcast %cst_92 : f32 to vector<8x1xf32>
    %397 = arith.divf %395, %396 : vector<8x1xf32>
    %398 = vector.broadcast %397 : vector<8x1xf32> to vector<8x32xf32>
    %399 = arith.subf %179, %398 : vector<8x32xf32>
    %400 = arith.mulf %399, %399 : vector<8x32xf32>
    %cst_93 = arith.constant dense<0.000000e+00> : vector<8xf32>
    %401 = vector.multi_reduction <add>, %400, %cst_93 [1] : vector<8x32xf32> to vector<8xf32>
    %402 = vector.shape_cast %401 : vector<8xf32> to vector<8x1xf32>
    %cst_94 = arith.constant 3.200000e+01 : f32
    %403 = vector.broadcast %cst_94 : f32 to vector<8x1xf32>
    %404 = arith.divf %402, %403 : vector<8x1xf32>
    %405 = vector.broadcast %397 : vector<8x1xf32> to vector<8x32xf32>
    %406 = arith.subf %179, %405 : vector<8x32xf32>
    %cst_95 = arith.constant 9.99999974E-6 : f32
    %407 = vector.broadcast %cst_95 : f32 to vector<8x1xf32>
    %408 = arith.addf %404, %407 : vector<8x1xf32>
    %409 = math.rsqrt %408 : vector<8x1xf32>
    %410 = vector.broadcast %409 : vector<8x1xf32> to vector<8x32xf32>
    %411 = arith.mulf %406, %410 : vector<8x32xf32>
    %412 = vector.broadcast %26 : vector<1x32xf32> to vector<8x32xf32>
    %413 = arith.mulf %411, %412 : vector<8x32xf32>
    %414 = vector.broadcast %27 : vector<1x32xf32> to vector<8x32xf32>
    %415 = arith.addf %413, %414 : vector<8x32xf32>
    %cst_96 = arith.constant dense<0.000000e+00> : vector<8x8xf32>
    %416 = tpu.matmul %415, %7, %cst_96 {dimension_numbers = #tpu.dot_dimension_numbers<[1], [0], [0], [1], [0, 0, 1, 1], [], []>} : vector<8x32xf32>, vector<32x8xf32>, vector<8x8xf32> -> vector<8x8xf32>
    %417 = vector.broadcast %33 : vector<1x8xf32> to vector<8x8xf32>
    %418 = arith.addf %416, %417 : vector<8x8xf32>
    %cst_97 = arith.constant dense<0.000000e+00> : vector<8x12xf32>
    %419 = tpu.matmul %418, %8, %cst_97 {dimension_numbers = #tpu.dot_dimension_numbers<[1], [0], [0], [1], [0, 0, 1, 1], [], []>} : vector<8x8xf32>, vector<8x12xf32>, vector<8x12xf32> -> vector<8x12xf32>
    %420 = vector.broadcast %34 : vector<1x12xf32> to vector<8x12xf32>
    %421 = arith.addf %419, %420 : vector<8x12xf32>
    %cst_98 = arith.constant dense<0.000000e+00> : vector<8x12xf32>
    %422 = tpu.matmul %418, %9, %cst_98 {dimension_numbers = #tpu.dot_dimension_numbers<[1], [0], [0], [1], [0, 0, 1, 1], [], []>} : vector<8x8xf32>, vector<8x12xf32>, vector<8x12xf32> -> vector<8x12xf32>
    %cst_99 = arith.constant dense<0.000000e+00> : vector<8xf32>
    %423 = vector.multi_reduction <add>, %179, %cst_99 [1] : vector<8x32xf32> to vector<8xf32>
    %424 = vector.shape_cast %423 : vector<8xf32> to vector<8x1xf32>
    %cst_100 = arith.constant 3.200000e+01 : f32
    %425 = vector.broadcast %cst_100 : f32 to vector<8x1xf32>
    %426 = arith.divf %424, %425 : vector<8x1xf32>
    %427 = vector.broadcast %426 : vector<8x1xf32> to vector<8x32xf32>
    %428 = arith.subf %179, %427 : vector<8x32xf32>
    %429 = arith.mulf %428, %428 : vector<8x32xf32>
    %cst_101 = arith.constant dense<0.000000e+00> : vector<8xf32>
    %430 = vector.multi_reduction <add>, %429, %cst_101 [1] : vector<8x32xf32> to vector<8xf32>
    %431 = vector.shape_cast %430 : vector<8xf32> to vector<8x1xf32>
    %cst_102 = arith.constant 3.200000e+01 : f32
    %432 = vector.broadcast %cst_102 : f32 to vector<8x1xf32>
    %433 = arith.divf %431, %432 : vector<8x1xf32>
    %434 = vector.broadcast %426 : vector<8x1xf32> to vector<8x32xf32>
    %435 = arith.subf %179, %434 : vector<8x32xf32>
    %cst_103 = arith.constant 9.99999974E-6 : f32
    %436 = vector.broadcast %cst_103 : f32 to vector<8x1xf32>
    %437 = arith.addf %433, %436 : vector<8x1xf32>
    %438 = math.rsqrt %437 : vector<8x1xf32>
    %439 = vector.broadcast %438 : vector<8x1xf32> to vector<8x32xf32>
    %440 = arith.mulf %435, %439 : vector<8x32xf32>
    %441 = vector.broadcast %28 : vector<1x32xf32> to vector<8x32xf32>
    %442 = arith.mulf %440, %441 : vector<8x32xf32>
    %443 = vector.broadcast %29 : vector<1x32xf32> to vector<8x32xf32>
    %444 = arith.addf %442, %443 : vector<8x32xf32>
    %cst_104 = arith.constant dense<0.000000e+00> : vector<8x32xf32>
    %445 = tpu.matmul %444, %10, %cst_104 {dimension_numbers = #tpu.dot_dimension_numbers<[1], [0], [0], [1], [0, 0, 1, 1], [], []>} : vector<8x32xf32>, vector<32x32xf32>, vector<8x32xf32> -> vector<8x32xf32>
    %446 = vector.broadcast %30 : vector<1x32xf32> to vector<8x32xf32>
    %447 = arith.addf %445, %446 : vector<8x32xf32>
    %c0_105 = arith.constant 0 : index
    %c0_106 = arith.constant 0 : index
    %c0_107 = arith.constant 0 : index
    %448 = vector.load %arg21[%c0_105, %c0_106, %c0_107] : memref<1x8x32xf32, #tpu.memory_space<vmem>>, vector<1x8x32xf32>
    %449 = vector.shape_cast %448 : vector<1x8x32xf32> to vector<8x32xf32>
    %450 = vector.shape_cast %179 : vector<8x32xf32> to vector<1x8x32xf32>
    tpu.vector_store %arg21[%c0_105, %c0_106, %c0_107], %450 {strides = array<i32>} : memref<1x8x32xf32, #tpu.memory_space<vmem>>, vector<1x8x32xf32>,
    %c0_108 = arith.constant 0 : index
    %c0_109 = arith.constant 0 : index
    %c0_110 = arith.constant 0 : index
    %451 = vector.load %arg22[%c0_108, %c0_109, %c0_110] : memref<1x8x12xf32, #tpu.memory_space<vmem>>, vector<1x8x12xf32>
    %452 = vector.shape_cast %451 : vector<1x8x12xf32> to vector<8x12xf32>
    %453 = vector.shape_cast %227 : vector<8x12xf32> to vector<1x8x12xf32>
    tpu.vector_store %arg22[%c0_108, %c0_109, %c0_110], %453 {strides = array<i32>} : memref<1x8x12xf32, #tpu.memory_space<vmem>>, vector<1x8x12xf32>,
    %c0_111 = arith.constant 0 : index
    %c0_112 = arith.constant 0 : index
    %c0_113 = arith.constant 0 : index
    %454 = vector.load %arg23[%c0_111, %c0_112, %c0_113] : memref<1x8x12xf32, #tpu.memory_space<vmem>>, vector<1x8x12xf32>
    %455 = vector.shape_cast %454 : vector<1x8x12xf32> to vector<8x12xf32>
    %456 = vector.shape_cast %311 : vector<8x12xf32> to vector<1x8x12xf32>
    tpu.vector_store %arg23[%c0_111, %c0_112, %c0_113], %456 {strides = array<i32>} : memref<1x8x12xf32, #tpu.memory_space<vmem>>, vector<1x8x12xf32>,
    %c0_114 = arith.constant 0 : index
    %c0_115 = arith.constant 0 : index
    %c0_116 = arith.constant 0 : index
    %457 = vector.load %arg24[%c0_114, %c0_115, %c0_116] : memref<1x8x12xf32, #tpu.memory_space<vmem>>, vector<1x8x12xf32>
    %458 = vector.shape_cast %457 : vector<1x8x12xf32> to vector<8x12xf32>
    %459 = vector.shape_cast %393 : vector<8x12xf32> to vector<1x8x12xf32>
    tpu.vector_store %arg24[%c0_114, %c0_115, %c0_116], %459 {strides = array<i32>} : memref<1x8x12xf32, #tpu.memory_space<vmem>>, vector<1x8x12xf32>,
    %c0_117 = arith.constant 0 : index
    %c0_118 = arith.constant 0 : index
    %c0_119 = arith.constant 0 : index
    %460 = vector.load %arg25[%c0_117, %c0_118, %c0_119] : memref<1x8x12xf32, #tpu.memory_space<vmem>>, vector<1x8x12xf32>
    %461 = vector.shape_cast %460 : vector<1x8x12xf32> to vector<8x12xf32>
    %462 = vector.shape_cast %421 : vector<8x12xf32> to vector<1x8x12xf32>
    tpu.vector_store %arg25[%c0_117, %c0_118, %c0_119], %462 {strides = array<i32>} : memref<1x8x12xf32, #tpu.memory_space<vmem>>, vector<1x8x12xf32>,
    %c0_120 = arith.constant 0 : index
    %c0_121 = arith.constant 0 : index
    %c0_122 = arith.constant 0 : index
    %463 = vector.load %arg26[%c0_120, %c0_121, %c0_122] : memref<1x8x12xf32, #tpu.memory_space<vmem>>, vector<1x8x12xf32>
    %464 = vector.shape_cast %463 : vector<1x8x12xf32> to vector<8x12xf32>
    %465 = vector.shape_cast %422 : vector<8x12xf32> to vector<1x8x12xf32>
    tpu.vector_store %arg26[%c0_120, %c0_121, %c0_122], %465 {strides = array<i32>} : memref<1x8x12xf32, #tpu.memory_space<vmem>>, vector<1x8x12xf32>,
    %c0_123 = arith.constant 0 : index
    %c0_124 = arith.constant 0 : index
    %c0_125 = arith.constant 0 : index
    %466 = vector.load %arg27[%c0_123, %c0_124, %c0_125] : memref<1x8x32xf32, #tpu.memory_space<vmem>>, vector<1x8x32xf32>
    %467 = vector.shape_cast %466 : vector<1x8x32xf32> to vector<8x32xf32>
    %468 = vector.shape_cast %447 : vector<8x32xf32> to vector<1x8x32xf32>
    tpu.vector_store %arg27[%c0_123, %c0_124, %c0_125], %468 {strides = array<i32>} : memref<1x8x32xf32, #tpu.memory_space<vmem>>, vector<1x8x32xf32>,
    return
  }
  func.func @transform_0(%arg0: i32) -> (i32, i32, i32) {
    %c0_i32 = arith.constant 0 : i32
    %c0_i32_0 = arith.constant 0 : i32
    %c0_i32_1 = arith.constant 0 : i32
    return %arg0, %c0_i32, %c0_i32_0 : i32, i32, i32
  }
  func.func @transform_1(%arg0: i32) -> (i32, i32, i32) {
    %c0_i32 = arith.constant 0 : i32
    %c0_i32_0 = arith.constant 0 : i32
    %c0_i32_1 = arith.constant 0 : i32
    return %arg0, %c0_i32, %c0_i32_0 : i32, i32, i32
  }
  func.func @transform_2(%arg0: i32) -> (i32, i32, i32) {
    %c0_i32 = arith.constant 0 : i32
    %c0_i32_0 = arith.constant 0 : i32
    %c0_i32_1 = arith.constant 0 : i32
    return %arg0, %c0_i32, %c0_i32_0 : i32, i32, i32
  }
  func.func @transform_3(%arg0: i32) -> (i32, i32) {
    %c0_i32 = arith.constant 0 : i32
    %c0_i32_0 = arith.constant 0 : i32
    %c0_i32_1 = arith.constant 0 : i32
    return %c0_i32, %c0_i32_0 : i32, i32
  }
  func.func @transform_4(%arg0: i32) -> (i32, i32) {
    %c0_i32 = arith.constant 0 : i32
    %c0_i32_0 = arith.constant 0 : i32
    %c0_i32_1 = arith.constant 0 : i32
    return %c0_i32, %c0_i32_0 : i32, i32
  }
  func.func @transform_5(%arg0: i32) -> (i32, i32) {
    %c0_i32 = arith.constant 0 : i32
    %c0_i32_0 = arith.constant 0 : i32
    %c0_i32_1 = arith.constant 0 : i32
    return %c0_i32, %c0_i32_0 : i32, i32
  }
  func.func @transform_6(%arg0: i32) -> (i32, i32) {
    %c0_i32 = arith.constant 0 : i32
    %c0_i32_0 = arith.constant 0 : i32
    %c0_i32_1 = arith.constant 0 : i32
    return %c0_i32, %c0_i32_0 : i32, i32
  }
  func.func @transform_7(%arg0: i32) -> (i32, i32) {
    %c0_i32 = arith.constant 0 : i32
    %c0_i32_0 = arith.constant 0 : i32
    %c0_i32_1 = arith.constant 0 : i32
    return %c0_i32, %c0_i32_0 : i32, i32
  }
  func.func @transform_8(%arg0: i32) -> (i32, i32) {
    %c0_i32 = arith.constant 0 : i32
    %c0_i32_0 = arith.constant 0 : i32
    %c0_i32_1 = arith.constant 0 : i32
    return %c0_i32, %c0_i32_0 : i32, i32
  }
  func.func @transform_9(%arg0: i32) -> (i32, i32) {
    %c0_i32 = arith.constant 0 : i32
    %c0_i32_0 = arith.constant 0 : i32
    %c0_i32_1 = arith.constant 0 : i32
    return %c0_i32, %c0_i32_0 : i32, i32
  }
  func.func @transform_10(%arg0: i32) -> (i32, i32) {
    %c0_i32 = arith.constant 0 : i32
    %c0_i32_0 = arith.constant 0 : i32
    %c0_i32_1 = arith.constant 0 : i32
    return %c0_i32, %c0_i32_0 : i32, i32
  }
  func.func @transform_11(%arg0: i32) -> (i32, i32) {
    %c0_i32 = arith.constant 0 : i32
    %c0_i32_0 = arith.constant 0 : i32
    %c0_i32_1 = arith.constant 0 : i32
    return %c0_i32, %c0_i32_0 : i32, i32
  }
  func.func @transform_12(%arg0: i32) -> (i32, i32) {
    %c0_i32 = arith.constant 0 : i32
    %c0_i32_0 = arith.constant 0 : i32
    %c0_i32_1 = arith.constant 0 : i32
    return %c0_i32, %c0_i32_0 : i32, i32
  }
  func.func @transform_13(%arg0: i32) -> (i32, i32) {
    %c0_i32 = arith.constant 0 : i32
    %c0_i32_0 = arith.constant 0 : i32
    %c0_i32_1 = arith.constant 0 : i32
    return %c0_i32, %c0_i32_0 : i32, i32
  }
  func.func @transform_14(%arg0: i32) -> (i32, i32) {
    %c0_i32 = arith.constant 0 : i32
    %c0_i32_0 = arith.constant 0 : i32
    %c0_i32_1 = arith.constant 0 : i32
    return %c0_i32, %c0_i32_0 : i32, i32
  }
  func.func @transform_15(%arg0: i32) -> (i32, i32) {
    %c0_i32 = arith.constant 0 : i32
    %c0_i32_0 = arith.constant 0 : i32
    %c0_i32_1 = arith.constant 0 : i32
    return %c0_i32, %c0_i32_0 : i32, i32
  }
  func.func @transform_16(%arg0: i32) -> (i32, i32) {
    %c0_i32 = arith.constant 0 : i32
    %c0_i32_0 = arith.constant 0 : i32
    %c0_i32_1 = arith.constant 0 : i32
    return %c0_i32, %c0_i32_0 : i32, i32
  }
  func.func @transform_17(%arg0: i32) -> (i32, i32) {
    %c0_i32 = arith.constant 0 : i32
    %c0_i32_0 = arith.constant 0 : i32
    %c0_i32_1 = arith.constant 0 : i32
    return %c0_i32, %c0_i32_0 : i32, i32
  }
  func.func @transform_18(%arg0: i32) -> (i32, i32) {
    %c0_i32 = arith.constant 0 : i32
    %c0_i32_0 = arith.constant 0 : i32
    %c0_i32_1 = arith.constant 0 : i32
    return %c0_i32, %c0_i32_0 : i32, i32
  }
  func.func @transform_19(%arg0: i32) -> (i32, i32) {
    %c0_i32 = arith.constant 0 : i32
    %c0_i32_0 = arith.constant 0 : i32
    %c0_i32_1 = arith.constant 0 : i32
    return %c0_i32, %c0_i32_0 : i32, i32
  }
  func.func @transform_20(%arg0: i32) -> (i32, i32, i32) {
    %c0_i32 = arith.constant 0 : i32
    %c0_i32_0 = arith.constant 0 : i32
    %c0_i32_1 = arith.constant 0 : i32
    return %arg0, %c0_i32, %c0_i32_0 : i32, i32, i32
  }
  func.func @transform_21(%arg0: i32) -> (i32, i32, i32) {
    %c0_i32 = arith.constant 0 : i32
    %c0_i32_0 = arith.constant 0 : i32
    %c0_i32_1 = arith.constant 0 : i32
    return %arg0, %c0_i32, %c0_i32_0 : i32, i32, i32
  }
  func.func @transform_22(%arg0: i32) -> (i32, i32, i32) {
    %c0_i32 = arith.constant 0 : i32
    %c0_i32_0 = arith.constant 0 : i32
    %c0_i32_1 = arith.constant 0 : i32
    return %arg0, %c0_i32, %c0_i32_0 : i32, i32, i32
  }
  func.func @transform_23(%arg0: i32) -> (i32, i32, i32) {
    %c0_i32 = arith.constant 0 : i32
    %c0_i32_0 = arith.constant 0 : i32
    %c0_i32_1 = arith.constant 0 : i32
    return %arg0, %c0_i32, %c0_i32_0 : i32, i32, i32
  }
  func.func @transform_24(%arg0: i32) -> (i32, i32, i32) {
    %c0_i32 = arith.constant 0 : i32
    %c0_i32_0 = arith.constant 0 : i32
    %c0_i32_1 = arith.constant 0 : i32
    return %arg0, %c0_i32, %c0_i32_0 : i32, i32, i32
  }
  func.func @transform_25(%arg0: i32) -> (i32, i32, i32) {
    %c0_i32 = arith.constant 0 : i32
    %c0_i32_0 = arith.constant 0 : i32
    %c0_i32_1 = arith.constant 0 : i32
    return %arg0, %c0_i32, %c0_i32_0 : i32, i32, i32
  }
  func.func @transform_26(%arg0: i32) -> (i32, i32, i32) {
    %c0_i32 = arith.constant 0 : i32
    %c0_i32_0 = arith.constant 0 : i32
    %c0_i32_1 = arith.constant 0 : i32
    return %arg0, %c0_i32, %c0_i32_0 : i32, i32, i32
  }
}

</mosaic_0001>

<llo_original>
// kernel: tpu_custom_call.1
$region0: #{tpu_custom_call.1}
  #allocation0 [shape = 'u32[]', space=smem, size = 0x4, offset = 0x4, fixed_abs, tag = 'smem constant byte address 0x4 - core index']
  #allocation1 [shape = 'u32[144,128]{1,0:T(1,128)}', space=vmem, size = 0x12000, scoped, tag = 'internal scratch']
  %s0 = inlined_call_operand.vmem [shape: f32[2,8,12], index: 0, kind: input, shape index: {}]
  %s1 = inlined_call_operand.vmem [shape: f32[2,8,32], index: 1, kind: input, shape index: {}]
  %s2 = inlined_call_operand.vmem [shape: f32[2,8,12], index: 2, kind: input, shape index: {}]
  %s3 = inlined_call_operand.vmem [shape: f32[32,128], index: 3, kind: input, shape index: {}]
  %s4 = inlined_call_operand.vmem [shape: f32[4,128], index: 4, kind: input, shape index: {}]
  %s5 = inlined_call_operand.vmem [shape: f32[128,32], index: 5, kind: input, shape index: {}]
  %s6 = inlined_call_operand.vmem [shape: f32[32,8], index: 6, kind: input, shape index: {}]
  %s7 = inlined_call_operand.vmem [shape: f32[8,8], index: 7, kind: input, shape index: {}]
  %s8 = inlined_call_operand.vmem [shape: f32[4,8], index: 8, kind: input, shape index: {}]
  %s9 = inlined_call_operand.vmem [shape: f32[8,4], index: 9, kind: input, shape index: {}]
  %s10 = inlined_call_operand.vmem [shape: f32[32,8], index: 10, kind: input, shape index: {}]
  %s11 = inlined_call_operand.vmem [shape: f32[8,12], index: 11, kind: input, shape index: {}]
  %s12 = inlined_call_operand.vmem [shape: f32[8,12], index: 12, kind: input, shape index: {}]
  %s13 = inlined_call_operand.vmem [shape: f32[32,32], index: 13, kind: input, shape index: {}]
  %s14 = inlined_call_operand.vmem [shape: f32[4,4], index: 14, kind: input, shape index: {}]
  %s15 = inlined_call_operand.vmem [shape: f32[9,32], index: 15, kind: input, shape index: {}]
  %s16 = inlined_call_operand.vmem [shape: f32[1,128], index: 16, kind: input, shape index: {}]
  %s17 = inlined_call_operand.vmem [shape: f32[3,8], index: 17, kind: input, shape index: {}]
  %s18 = inlined_call_operand.vmem [shape: f32[2,12], index: 18, kind: input, shape index: {}]
  %s19 = inlined_call_operand.vmem [shape: f32[3,4], index: 19, kind: input, shape index: {}]
  %s20 = inlined_call_operand.hbm [shape: f32[2,8,32], index: 20, kind: output, shape index: {0}]
  %s21 = inlined_call_operand.hbm [shape: f32[2,8,12], index: 21, kind: output, shape index: {1}]
  %s22 = inlined_call_operand.hbm [shape: f32[2,8,12], index: 22, kind: output, shape index: {2}]
  %s23 = inlined_call_operand.hbm [shape: f32[2,8,12], index: 23, kind: output, shape index: {3}]
  %s24 = inlined_call_operand.hbm [shape: f32[2,8,12], index: 24, kind: output, shape index: {4}]
  %s25 = inlined_call_operand.hbm [shape: f32[2,8,12], index: 25, kind: output, shape index: {5}]
  %s26 = inlined_call_operand.hbm [shape: f32[2,8,32], index: 26, kind: output, shape index: {6}]
  %27 = xla_tuple %s20, %s21, %s22, %s23, %s24, %s25, %s26
  %s28 = sld [smem:[#allocation0]]
  $region161: #{tpu_custom_call.1} parent=0
    _
  %s30 = ssub.s32 1, %s28
  %s31 = scalar_select 0, %s30, %s28
  $region1: #{tpu_custom_call.1} parent=0
    #allocation2 [shape = 'u8[8192]{0}', space=vmem, size = 0x2000, scoped, tag = 'output window, operand 0']
    #allocation3 [shape = 's32[2]{0}', space=sflag, size = 0x8, scoped, tag = 'scoped memory for tpu_custom_call.1']
    #allocation4 [shape = 'u8[8192]{0}', space=vmem, size = 0x2000, scoped, tag = 'output window, operand 1']
    #allocation5 [shape = 's32[2]{0}', space=sflag, size = 0x8, scoped, tag = 'scoped memory for tpu_custom_call.1']
    #allocation6 [shape = 'u8[8192]{0}', space=vmem, size = 0x2000, scoped, tag = 'output window, operand 2']
    #allocation7 [shape = 'u8[8192]{0}', space=vmem, size = 0x2000, scoped, tag = 'output window, operand 3']
    #allocation8 [shape = 's32[2]{0}', space=sflag, size = 0x8, scoped, tag = 'scoped memory for tpu_custom_call.1']
    #allocation9 [shape = 'u8[8192]{0}', space=vmem, size = 0x2000, scoped, tag = 'output window, operand 4']
    #allocation10 [shape = 'u8[8192]{0}', space=vmem, size = 0x2000, scoped, tag = 'output window, operand 5']
    #allocation11 [shape = 's32[2]{0}', space=sflag, size = 0x8, scoped, tag = 'scoped memory for tpu_custom_call.1']
    #allocation12 [shape = 'u8[8192]{0}', space=vmem, size = 0x2000, scoped, tag = 'output window, operand 6']
    %32 = vsyncpa [#allocation3], 0
    %s33 = scalar_lea.sflag [#allocation3], 1
    %34 = vsyncpa %s33, 0
    %35 = vsyncpa [#allocation5], 0
    %s36 = scalar_lea.sflag [#allocation5], 1
    %37 = vsyncpa %s36, 0
    %38 = vsyncpa [#allocation8], 0
    %s39 = scalar_lea.sflag [#allocation8], 1
    %40 = vsyncpa %s39, 0
    %41 = vsyncpa [#allocation11], 0
    %s42 = scalar_lea.sflag [#allocation11], 1
    %43 = vsyncpa %s42, 0
    loop: start=0, step=1, limit=4
    $region2: #{tpu_custom_call.1} parent=1 // loop_pre_header
      _
    $region3: #{tpu_custom_call.1} parent=1 // loop_header
      %s45 = sphi 0, %s49
      %p46 = scmp.ge.s32.totalorder %s45, 4
      %s55 = sphi 0, %s57
      %s58 = sphi 0, %s55
      %s59 = sphi 0, %s58
      %s75 = sphi 0, %s59
      %s81 = sphi 0, %s83
      %s84 = sphi 0, %s81
      %s85 = sphi 0, %s84
      %s101 = sphi 0, %s85
      %s107 = sphi 0, %s109
      %s110 = sphi 0, %s107
      %s111 = sphi 0, %s110
      %s127 = sphi 0, %s111
      %s131 = sphi 0, %s131
      %s133 = sphi 0, %s131
      %s134 = sphi 0, %s133
      %s148 = sphi 0, %s134
      %s152 = sphi 0, %s152
      %s154 = sphi 0, %s152
      %s155 = sphi 0, %s154
      %s169 = sphi 0, %s155
      %s173 = sphi 0, %s173
      %s175 = sphi 0, %s173
      %s176 = sphi 0, %s175
      %s190 = sphi 0, %s176
      %s194 = sphi 0, %s194
      %s196 = sphi 0, %s194
      %s197 = sphi 0, %s196
      %s211 = sphi 0, %s197
      %s215 = sphi 0, %s215
      %s217 = sphi 0, %s215
      %s218 = sphi 0, %s217
      %s232 = sphi 0, %s218
      %s236 = sphi 0, %s236
      %s238 = sphi 0, %s236
      %s239 = sphi 0, %s238
      %s253 = sphi 0, %s239
      %s257 = sphi 0, %s257
      %s259 = sphi 0, %s257
      %s260 = sphi 0, %s259
      %s274 = sphi 0, %s260
      %s278 = sphi 0, %s278
      %s280 = sphi 0, %s278
      %s281 = sphi 0, %s280
      %s295 = sphi 0, %s281
      %s299 = sphi 0, %s299
      %s301 = sphi 0, %s299
      %s302 = sphi 0, %s301
      %s316 = sphi 0, %s302
      %s320 = sphi 0, %s320
      %s322 = sphi 0, %s320
      %s323 = sphi 0, %s322
      %s337 = sphi 0, %s323
      %s341 = sphi 0, %s341
      %s343 = sphi 0, %s341
      %s344 = sphi 0, %s343
      %s358 = sphi 0, %s344
      %s362 = sphi 0, %s362
      %s364 = sphi 0, %s362
      %s365 = sphi 0, %s364
      %s379 = sphi 0, %s365
      %s383 = sphi 0, %s383
      %s385 = sphi 0, %s383
      %s386 = sphi 0, %s385
      %s400 = sphi 0, %s386
      %s404 = sphi 0, %s404
      %s406 = sphi 0, %s404
      %s407 = sphi 0, %s406
      %s421 = sphi 0, %s407
      %s425 = sphi 0, %s425
      %s427 = sphi 0, %s425
      %s428 = sphi 0, %s427
      %s442 = sphi 0, %s428
      %s446 = sphi 0, %s446
      %s448 = sphi 0, %s446
      %s449 = sphi 0, %s448
      %s463 = sphi 0, %s449
      %s467 = sphi 0, %s467
      %s469 = sphi 0, %s467
      %s470 = sphi 0, %s469
      %s484 = sphi 0, %s470
      %s490 = sphi 0, %s492
      %s493 = sphi 0, %s490
      %s494 = sphi 0, %s493
      %s510 = sphi 0, %s494
      %s516 = sphi 0, %s518
      %s519 = sphi 0, %s516
      %s520 = sphi 0, %s519
      %s536 = sphi 0, %s520
      %s542 = sphi 0, %s544
      %s545 = sphi 0, %s542
      %s546 = sphi 0, %s545
      %s562 = sphi 0, %s546
      %s568 = sphi 0, %s570
      %s571 = sphi 0, %s568
      %s572 = sphi 0, %s571
      %s588 = sphi 0, %s572
      %s594 = sphi 0, %s596
      %s597 = sphi 0, %s594
      %s598 = sphi 0, %s597
      %s614 = sphi 0, %s598
      %s620 = sphi 0, %s622
      %s623 = sphi 0, %s620
      %s624 = sphi 0, %s623
      %s640 = sphi 0, %s624
      %s646 = sphi 0, %s648
      %s649 = sphi 0, %s646
      %s650 = sphi 0, %s649
      %s666 = sphi 0, %s650
    $region4: #{tpu_custom_call.1} parent=1 // loop_header_branch
      %48 = sbr.rel (%p46) target = $region8
    $region5: #{tpu_custom_call.1} parent=1 // loop_body
      %s50 = ssub.s32 %s45, 1
      %s51 = ssub.s32 %s45, 2
      %s52 = sadd.s32 %s45, 1
      %s53 = ssub.s32 %s45, %s52
      %p54 = scmp.eq.s32.totalorder %s53, 0
      %s56 = sadd.s32 %s55, 1
      %s57 = scalar_select %p54, %s55, %s56
      %p60 = pneg %p54
      %p61 = scmp.eq.s32.totalorder %s45, 1
      %p62 = por %p60, %p61
      %p63 = scmp.ne.s32.totalorder %s55, %s58
      %p64 = scmp.eq.s32.totalorder %s45, 0
      %p65 = por %p63, %p64
      %p66 = scmp.ne.s32.totalorder %s55, %s58
      %p67 = scmp.eq.s32.totalorder %s50, 1
      %p68 = por %p66, %p67
      %p69 = scmp.ne.s32.totalorder %s58, %s59
      %p70 = scmp.eq.s32.totalorder %s50, 0
      %p71 = por %p69, %p70
      %p72 = scmp.ne.s32.totalorder %s58, %s59
      %p73 = scmp.eq.s32.totalorder %s51, 1
      %p74 = por %p72, %p73
      %p76 = scmp.ne.s32.totalorder %s59, %s75
      %p77 = scmp.eq.s32.totalorder %s51, 0
      %p78 = por %p76, %p77
      %s79 = ssub.s32 %s45, %s52
      %p80 = scmp.eq.s32.totalorder %s79, 0
      %s82 = sadd.s32 %s81, 1
      %s83 = scalar_select %p80, %s81, %s82
      %p86 = pneg %p80
      %p87 = scmp.eq.s32.totalorder %s45, 1
      %p88 = por %p86, %p87
      %p89 = scmp.ne.s32.totalorder %s81, %s84
      %p90 = scmp.eq.s32.totalorder %s45, 0
      %p91 = por %p89, %p90
      %p92 = scmp.ne.s32.totalorder %s81, %s84
      %p93 = scmp.eq.s32.totalorder %s50, 1
      %p94 = por %p92, %p93
      %p95 = scmp.ne.s32.totalorder %s84, %s85
      %p96 = scmp.eq.s32.totalorder %s50, 0
      %p97 = por %p95, %p96
      %p98 = scmp.ne.s32.totalorder %s84, %s85
      %p99 = scmp.eq.s32.totalorder %s51, 1
      %p100 = por %p98, %p99
      %p102 = scmp.ne.s32.totalorder %s85, %s101
      %p103 = scmp.eq.s32.totalorder %s51, 0
      %p104 = por %p102, %p103
      %s105 = ssub.s32 %s45, %s52
      %p106 = scmp.eq.s32.totalorder %s105, 0
      %s108 = sadd.s32 %s107, 1
      %s109 = scalar_select %p106, %s107, %s108
      %p112 = pneg %p106
      %p113 = scmp.eq.s32.totalorder %s45, 1
      %p114 = por %p112, %p113
      %p115 = scmp.ne.s32.totalorder %s107, %s110
      %p116 = scmp.eq.s32.totalorder %s45, 0
      %p117 = por %p115, %p116
      %p118 = scmp.ne.s32.totalorder %s107, %s110
      %p119 = scmp.eq.s32.totalorder %s50, 1
      %p120 = por %p118, %p119
      %p121 = scmp.ne.s32.totalorder %s110, %s111
      %p122 = scmp.eq.s32.totalorder %s50, 0
      %p123 = por %p121, %p122
      %p124 = scmp.ne.s32.totalorder %s110, %s111
      %p125 = scmp.eq.s32.totalorder %s51, 1
      %p126 = por %p124, %p125
      %p128 = scmp.ne.s32.totalorder %s111, %s127
      %p129 = scmp.eq.s32.totalorder %s51, 0
      %p130 = por %p128, %p129
      %s132 = sadd.s32 %s131, 1
      %p135 = scmp.eq.s32.totalorder %s45, 1
      %p136 = scmp.ne.s32.totalorder %s131, %s133
      %p137 = scmp.eq.s32.totalorder %s45, 0
      %p138 = por %p136, %p137
      %p139 = scmp.ne.s32.totalorder %s131, %s133
      %p140 = scmp.eq.s32.totalorder %s50, 1
      %p141 = por %p139, %p140
      %p142 = scmp.ne.s32.totalorder %s133, %s134
      %p143 = scmp.eq.s32.totalorder %s50, 0
      %p144 = por %p142, %p143
      %p145 = scmp.ne.s32.totalorder %s133, %s134
      %p146 = scmp.eq.s32.totalorder %s51, 1
      %p147 = por %p145, %p146
      %p149 = scmp.ne.s32.totalorder %s134, %s148
      %p150 = scmp.eq.s32.totalorder %s51, 0
      %p151 = por %p149, %p150
      %s153 = sadd.s32 %s152, 1
      %p156 = scmp.eq.s32.totalorder %s45, 1
      %p157 = scmp.ne.s32.totalorder %s152, %s154
      %p158 = scmp.eq.s32.totalorder %s45, 0
      %p159 = por %p157, %p158
      %p160 = scmp.ne.s32.totalorder %s152, %s154
      %p161 = scmp.eq.s32.totalorder %s50, 1
      %p162 = por %p160, %p161
      %p163 = scmp.ne.s32.totalorder %s154, %s155
      %p164 = scmp.eq.s32.totalorder %s50, 0
      %p165 = por %p163, %p164
      %p166 = scmp.ne.s32.totalorder %s154, %s155
      %p167 = scmp.eq.s32.totalorder %s51, 1
      %p168 = por %p166, %p167
      %p170 = scmp.ne.s32.totalorder %s155, %s169
      %p171 = scmp.eq.s32.totalorder %s51, 0
      %p172 = por %p170, %p171
      %s174 = sadd.s32 %s173, 1
      %p177 = scmp.eq.s32.totalorder %s45, 1
      %p178 = scmp.ne.s32.totalorder %s173, %s175
      %p179 = scmp.eq.s32.totalorder %s45, 0
      %p180 = por %p178, %p179
      %p181 = scmp.ne.s32.totalorder %s173, %s175
      %p182 = scmp.eq.s32.totalorder %s50, 1
      %p183 = por %p181, %p182
      %p184 = scmp.ne.s32.totalorder %s175, %s176
      %p185 = scmp.eq.s32.totalorder %s50, 0
      %p186 = por %p184, %p185
      %p187 = scmp.ne.s32.totalorder %s175, %s176
      %p188 = scmp.eq.s32.totalorder %s51, 1
      %p189 = por %p187, %p188
      %p191 = scmp.ne.s32.totalorder %s176, %s190
      %p192 = scmp.eq.s32.totalorder %s51, 0
      %p193 = por %p191, %p192
      %s195 = sadd.s32 %s194, 1
      %p198 = scmp.eq.s32.totalorder %s45, 1
      %p199 = scmp.ne.s32.totalorder %s194, %s196
      %p200 = scmp.eq.s32.totalorder %s45, 0
      %p201 = por %p199, %p200
      %p202 = scmp.ne.s32.totalorder %s194, %s196
      %p203 = scmp.eq.s32.totalorder %s50, 1
      %p204 = por %p202, %p203
      %p205 = scmp.ne.s32.totalorder %s196, %s197
      %p206 = scmp.eq.s32.totalorder %s50, 0
      %p207 = por %p205, %p206
      %p208 = scmp.ne.s32.totalorder %s196, %s197
      %p209 = scmp.eq.s32.totalorder %s51, 1
      %p210 = por %p208, %p209
      %p212 = scmp.ne.s32.totalorder %s197, %s211
      %p213 = scmp.eq.s32.totalorder %s51, 0
      %p214 = por %p212, %p213
      %s216 = sadd.s32 %s215, 1
      %p219 = scmp.eq.s32.totalorder %s45, 1
      %p220 = scmp.ne.s32.totalorder %s215, %s217
      %p221 = scmp.eq.s32.totalorder %s45, 0
      %p222 = por %p220, %p221
      %p223 = scmp.ne.s32.totalorder %s215, %s217
      %p224 = scmp.eq.s32.totalorder %s50, 1
      %p225 = por %p223, %p224
      %p226 = scmp.ne.s32.totalorder %s217, %s218
      %p227 = scmp.eq.s32.totalorder %s50, 0
      %p228 = por %p226, %p227
      %p229 = scmp.ne.s32.totalorder %s217, %s218
      %p230 = scmp.eq.s32.totalorder %s51, 1
      %p231 = por %p229, %p230
      %p233 = scmp.ne.s32.totalorder %s218, %s232
      %p234 = scmp.eq.s32.totalorder %s51, 0
      %p235 = por %p233, %p234
      %s237 = sadd.s32 %s236, 1
      %p240 = scmp.eq.s32.totalorder %s45, 1
      %p241 = scmp.ne.s32.totalorder %s236, %s238
      %p242 = scmp.eq.s32.totalorder %s45, 0
      %p243 = por %p241, %p242
      %p244 = scmp.ne.s32.totalorder %s236, %s238
      %p245 = scmp.eq.s32.totalorder %s50, 1
      %p246 = por %p244, %p245
      %p247 = scmp.ne.s32.totalorder %s238, %s239
      %p248 = scmp.eq.s32.totalorder %s50, 0
      %p249 = por %p247, %p248
      %p250 = scmp.ne.s32.totalorder %s238, %s239
      %p251 = scmp.eq.s32.totalorder %s51, 1
      %p252 = por %p250, %p251
      %p254 = scmp.ne.s32.totalorder %s239, %s253
      %p255 = scmp.eq.s32.totalorder %s51, 0
      %p256 = por %p254, %p255
      %s258 = sadd.s32 %s257, 1
      %p261 = scmp.eq.s32.totalorder %s45, 1
      %p262 = scmp.ne.s32.totalorder %s257, %s259
      %p263 = scmp.eq.s32.totalorder %s45, 0
      %p264 = por %p262, %p263
      %p265 = scmp.ne.s32.totalorder %s257, %s259
      %p266 = scmp.eq.s32.totalorder %s50, 1
      %p267 = por %p265, %p266
      %p268 = scmp.ne.s32.totalorder %s259, %s260
      %p269 = scmp.eq.s32.totalorder %s50, 0
      %p270 = por %p268, %p269
      %p271 = scmp.ne.s32.totalorder %s259, %s260
      %p272 = scmp.eq.s32.totalorder %s51, 1
      %p273 = por %p271, %p272
      %p275 = scmp.ne.s32.totalorder %s260, %s274
      %p276 = scmp.eq.s32.totalorder %s51, 0
      %p277 = por %p275, %p276
      %s279 = sadd.s32 %s278, 1
      %p282 = scmp.eq.s32.totalorder %s45, 1
      %p283 = scmp.ne.s32.totalorder %s278, %s280
      %p284 = scmp.eq.s32.totalorder %s45, 0
      %p285 = por %p283, %p284
      %p286 = scmp.ne.s32.totalorder %s278, %s280
      %p287 = scmp.eq.s32.totalorder %s50, 1
      %p288 = por %p286, %p287
      %p289 = scmp.ne.s32.totalorder %s280, %s281
      %p290 = scmp.eq.s32.totalorder %s50, 0
      %p291 = por %p289, %p290
      %p292 = scmp.ne.s32.totalorder %s280, %s281
      %p293 = scmp.eq.s32.totalorder %s51, 1
      %p294 = por %p292, %p293
      %p296 = scmp.ne.s32.totalorder %s281, %s295
      %p297 = scmp.eq.s32.totalorder %s51, 0
      %p298 = por %p296, %p297
      %s300 = sadd.s32 %s299, 1
      %p303 = scmp.eq.s32.totalorder %s45, 1
      %p304 = scmp.ne.s32.totalorder %s299, %s301
      %p305 = scmp.eq.s32.totalorder %s45, 0
      %p306 = por %p304, %p305
      %p307 = scmp.ne.s32.totalorder %s299, %s301
      %p308 = scmp.eq.s32.totalorder %s50, 1
      %p309 = por %p307, %p308
      %p310 = scmp.ne.s32.totalorder %s301, %s302
      %p311 = scmp.eq.s32.totalorder %s50, 0
      %p312 = por %p310, %p311
      %p313 = scmp.ne.s32.totalorder %s301, %s302
      %p314 = scmp.eq.s32.totalorder %s51, 1
      %p315 = por %p313, %p314
      %p317 = scmp.ne.s32.totalorder %s302, %s316
      %p318 = scmp.eq.s32.totalorder %s51, 0
      %p319 = por %p317, %p318
      %s321 = sadd.s32 %s320, 1
      %p324 = scmp.eq.s32.totalorder %s45, 1
      %p325 = scmp.ne.s32.totalorder %s320, %s322
      %p326 = scmp.eq.s32.totalorder %s45, 0
      %p327 = por %p325, %p326
      %p328 = scmp.ne.s32.totalorder %s320, %s322
      %p329 = scmp.eq.s32.totalorder %s50, 1
      %p330 = por %p328, %p329
      %p331 = scmp.ne.s32.totalorder %s322, %s323
      %p332 = scmp.eq.s32.totalorder %s50, 0
      %p333 = por %p331, %p332
      %p334 = scmp.ne.s32.totalorder %s322, %s323
      %p335 = scmp.eq.s32.totalorder %s51, 1
      %p336 = por %p334, %p335
      %p338 = scmp.ne.s32.totalorder %s323, %s337
      %p339 = scmp.eq.s32.totalorder %s51, 0
      %p340 = por %p338, %p339
      %s342 = sadd.s32 %s341, 1
      %p345 = scmp.eq.s32.totalorder %s45, 1
      %p346 = scmp.ne.s32.totalorder %s341, %s343
      %p347 = scmp.eq.s32.totalorder %s45, 0
      %p348 = por %p346, %p347
      %p349 = scmp.ne.s32.totalorder %s341, %s343
      %p350 = scmp.eq.s32.totalorder %s50, 1
      %p351 = por %p349, %p350
      %p352 = scmp.ne.s32.totalorder %s343, %s344
      %p353 = scmp.eq.s32.totalorder %s50, 0
      %p354 = por %p352, %p353
      %p355 = scmp.ne.s32.totalorder %s343, %s344
      %p356 = scmp.eq.s32.totalorder %s51, 1
      %p357 = por %p355, %p356
      %p359 = scmp.ne.s32.totalorder %s344, %s358
      %p360 = scmp.eq.s32.totalorder %s51, 0
      %p361 = por %p359, %p360
      %s363 = sadd.s32 %s362, 1
      %p366 = scmp.eq.s32.totalorder %s45, 1
      %p367 = scmp.ne.s32.totalorder %s362, %s364
      %p368 = scmp.eq.s32.totalorder %s45, 0
      %p369 = por %p367, %p368
      %p370 = scmp.ne.s32.totalorder %s362, %s364
      %p371 = scmp.eq.s32.totalorder %s50, 1
      %p372 = por %p370, %p371
      %p373 = scmp.ne.s32.totalorder %s364, %s365
      %p374 = scmp.eq.s32.totalorder %s50, 0
      %p375 = por %p373, %p374
      %p376 = scmp.ne.s32.totalorder %s364, %s365
      %p377 = scmp.eq.s32.totalorder %s51, 1
      %p378 = por %p376, %p377
      %p380 = scmp.ne.s32.totalorder %s365, %s379
      %p381 = scmp.eq.s32.totalorder %s51, 0
      %p382 = por %p380, %p381
      %s384 = sadd.s32 %s383, 1
      %p387 = scmp.eq.s32.totalorder %s45, 1
      %p388 = scmp.ne.s32.totalorder %s383, %s385
      %p389 = scmp.eq.s32.totalorder %s45, 0
      %p390 = por %p388, %p389
      %p391 = scmp.ne.s32.totalorder %s383, %s385
      %p392 = scmp.eq.s32.totalorder %s50, 1
      %p393 = por %p391, %p392
      %p394 = scmp.ne.s32.totalorder %s385, %s386
      %p395 = scmp.eq.s32.totalorder %s50, 0
      %p396 = por %p394, %p395
      %p397 = scmp.ne.s32.totalorder %s385, %s386
      %p398 = scmp.eq.s32.totalorder %s51, 1
      %p399 = por %p397, %p398
      %p401 = scmp.ne.s32.totalorder %s386, %s400
      %p402 = scmp.eq.s32.totalorder %s51, 0
      %p403 = por %p401, %p402
      %s405 = sadd.s32 %s404, 1
      %p408 = scmp.eq.s32.totalorder %s45, 1
      %p409 = scmp.ne.s32.totalorder %s404, %s406
      %p410 = scmp.eq.s32.totalorder %s45, 0
      %p411 = por %p409, %p410
      %p412 = scmp.ne.s32.totalorder %s404, %s406
      %p413 = scmp.eq.s32.totalorder %s50, 1
      %p414 = por %p412, %p413
      %p415 = scmp.ne.s32.totalorder %s406, %s407
      %p416 = scmp.eq.s32.totalorder %s50, 0
      %p417 = por %p415, %p416
      %p418 = scmp.ne.s32.totalorder %s406, %s407
      %p419 = scmp.eq.s32.totalorder %s51, 1
      %p420 = por %p418, %p419
      %p422 = scmp.ne.s32.totalorder %s407, %s421
      %p423 = scmp.eq.s32.totalorder %s51, 0
      %p424 = por %p422, %p423
      %s426 = sadd.s32 %s425, 1
      %p429 = scmp.eq.s32.totalorder %s45, 1
      %p430 = scmp.ne.s32.totalorder %s425, %s427
      %p431 = scmp.eq.s32.totalorder %s45, 0
      %p432 = por %p430, %p431
      %p433 = scmp.ne.s32.totalorder %s425, %s427
      %p434 = scmp.eq.s32.totalorder %s50, 1
      %p435 = por %p433, %p434
      %p436 = scmp.ne.s32.totalorder %s427, %s428
      %p437 = scmp.eq.s32.totalorder %s50, 0
      %p438 = por %p436, %p437
      %p439 = scmp.ne.s32.totalorder %s427, %s428
      %p440 = scmp.eq.s32.totalorder %s51, 1
      %p441 = por %p439, %p440
      %p443 = scmp.ne.s32.totalorder %s428, %s442
      %p444 = scmp.eq.s32.totalorder %s51, 0
      %p445 = por %p443, %p444
      %s447 = sadd.s32 %s446, 1
      %p450 = scmp.eq.s32.totalorder %s45, 1
      %p451 = scmp.ne.s32.totalorder %s446, %s448
      %p452 = scmp.eq.s32.totalorder %s45, 0
      %p453 = por %p451, %p452
      %p454 = scmp.ne.s32.totalorder %s446, %s448
      %p455 = scmp.eq.s32.totalorder %s50, 1
      %p456 = por %p454, %p455
      %p457 = scmp.ne.s32.totalorder %s448, %s449
      %p458 = scmp.eq.s32.totalorder %s50, 0
      %p459 = por %p457, %p458
      %p460 = scmp.ne.s32.totalorder %s448, %s449
      %p461 = scmp.eq.s32.totalorder %s51, 1
      %p462 = por %p460, %p461
      %p464 = scmp.ne.s32.totalorder %s449, %s463
      %p465 = scmp.eq.s32.totalorder %s51, 0
      %p466 = por %p464, %p465
      %s468 = sadd.s32 %s467, 1
      %p471 = scmp.eq.s32.totalorder %s45, 1
      %p472 = scmp.ne.s32.totalorder %s467, %s469
      %p473 = scmp.eq.s32.totalorder %s45, 0
      %p474 = por %p472, %p473
      %p475 = scmp.ne.s32.totalorder %s467, %s469
      %p476 = scmp.eq.s32.totalorder %s50, 1
      %p477 = por %p475, %p476
      %p478 = scmp.ne.s32.totalorder %s469, %s470
      %p479 = scmp.eq.s32.totalorder %s50, 0
      %p480 = por %p478, %p479
      %p481 = scmp.ne.s32.totalorder %s469, %s470
      %p482 = scmp.eq.s32.totalorder %s51, 1
      %p483 = por %p481, %p482
      %p485 = scmp.ne.s32.totalorder %s470, %s484
      %p486 = scmp.eq.s32.totalorder %s51, 0
      %p487 = por %p485, %p486
      %s488 = ssub.s32 %s45, %s52
      %p489 = scmp.eq.s32.totalorder %s488, 0
      %s491 = sadd.s32 %s490, 1
      %s492 = scalar_select %p489, %s490, %s491
      %p495 = pneg %p489
      %p496 = scmp.eq.s32.totalorder %s45, 1
      %p497 = por %p495, %p496
      %p498 = scmp.ne.s32.totalorder %s490, %s493
      %p499 = scmp.eq.s32.totalorder %s45, 0
      %p500 = por %p498, %p499
      %p501 = scmp.ne.s32.totalorder %s490, %s493
      %p502 = scmp.eq.s32.totalorder %s50, 1
      %p503 = por %p501, %p502
      %p504 = scmp.ne.s32.totalorder %s493, %s494
      %p505 = scmp.eq.s32.totalorder %s50, 0
      %p506 = por %p504, %p505
      %p507 = scmp.ne.s32.totalorder %s493, %s494
      %p508 = scmp.eq.s32.totalorder %s51, 1
      %p509 = por %p507, %p508
      %p511 = scmp.ne.s32.totalorder %s494, %s510
      %p512 = scmp.eq.s32.totalorder %s51, 0
      %p513 = por %p511, %p512
      %s514 = ssub.s32 %s45, %s52
      %p515 = scmp.eq.s32.totalorder %s514, 0
      %s517 = sadd.s32 %s516, 1
      %s518 = scalar_select %p515, %s516, %s517
      %p521 = pneg %p515
      %p522 = scmp.eq.s32.totalorder %s45, 1
      %p523 = por %p521, %p522
      %p524 = scmp.ne.s32.totalorder %s516, %s519
      %p525 = scmp.eq.s32.totalorder %s45, 0
      %p526 = por %p524, %p525
      %p527 = scmp.ne.s32.totalorder %s516, %s519
      %p528 = scmp.eq.s32.totalorder %s50, 1
      %p529 = por %p527, %p528
      %p530 = scmp.ne.s32.totalorder %s519, %s520
      %p531 = scmp.eq.s32.totalorder %s50, 0
      %p532 = por %p530, %p531
      %p533 = scmp.ne.s32.totalorder %s519, %s520
      %p534 = scmp.eq.s32.totalorder %s51, 1
      %p535 = por %p533, %p534
      %p537 = scmp.ne.s32.totalorder %s520, %s536
      %p538 = scmp.eq.s32.totalorder %s51, 0
      %p539 = por %p537, %p538
      %s540 = ssub.s32 %s45, %s52
      %p541 = scmp.eq.s32.totalorder %s540, 0
      %s543 = sadd.s32 %s542, 1
      %s544 = scalar_select %p541, %s542, %s543
      %p547 = pneg %p541
      %p548 = scmp.eq.s32.totalorder %s45, 1
      %p549 = por %p547, %p548
      %p550 = scmp.ne.s32.totalorder %s542, %s545
      %p551 = scmp.eq.s32.totalorder %s45, 0
      %p552 = por %p550, %p551
      %p553 = scmp.ne.s32.totalorder %s542, %s545
      %p554 = scmp.eq.s32.totalorder %s50, 1
      %p555 = por %p553, %p554
      %p556 = scmp.ne.s32.totalorder %s545, %s546
      %p557 = scmp.eq.s32.totalorder %s50, 0
      %p558 = por %p556, %p557
      %p559 = scmp.ne.s32.totalorder %s545, %s546
      %p560 = scmp.eq.s32.totalorder %s51, 1
      %p561 = por %p559, %p560
      %p563 = scmp.ne.s32.totalorder %s546, %s562
      %p564 = scmp.eq.s32.totalorder %s51, 0
      %p565 = por %p563, %p564
      %s566 = ssub.s32 %s45, %s52
      %p567 = scmp.eq.s32.totalorder %s566, 0
      %s569 = sadd.s32 %s568, 1
      %s570 = scalar_select %p567, %s568, %s569
      %p573 = pneg %p567
      %p574 = scmp.eq.s32.totalorder %s45, 1
      %p575 = por %p573, %p574
      %p576 = scmp.ne.s32.totalorder %s568, %s571
      %p577 = scmp.eq.s32.totalorder %s45, 0
      %p578 = por %p576, %p577
      %p579 = scmp.ne.s32.totalorder %s568, %s571
      %p580 = scmp.eq.s32.totalorder %s50, 1
      %p581 = por %p579, %p580
      %p582 = scmp.ne.s32.totalorder %s571, %s572
      %p583 = scmp.eq.s32.totalorder %s50, 0
      %p584 = por %p582, %p583
      %p585 = scmp.ne.s32.totalorder %s571, %s572
      %p586 = scmp.eq.s32.totalorder %s51, 1
      %p587 = por %p585, %p586
      %p589 = scmp.ne.s32.totalorder %s572, %s588
      %p590 = scmp.eq.s32.totalorder %s51, 0
      %p591 = por %p589, %p590
      %s592 = ssub.s32 %s45, %s52
      %p593 = scmp.eq.s32.totalorder %s592, 0
      %s595 = sadd.s32 %s594, 1
      %s596 = scalar_select %p593, %s594, %s595
      %p599 = pneg %p593
      %p600 = scmp.eq.s32.totalorder %s45, 1
      %p601 = por %p599, %p600
      %p602 = scmp.ne.s32.totalorder %s594, %s597
      %p603 = scmp.eq.s32.totalorder %s45, 0
      %p604 = por %p602, %p603
      %p605 = scmp.ne.s32.totalorder %s594, %s597
      %p606 = scmp.eq.s32.totalorder %s50, 1
      %p607 = por %p605, %p606
      %p608 = scmp.ne.s32.totalorder %s597, %s598
      %p609 = scmp.eq.s32.totalorder %s50, 0
      %p610 = por %p608, %p609
      %p611 = scmp.ne.s32.totalorder %s597, %s598
      %p612 = scmp.eq.s32.totalorder %s51, 1
      %p613 = por %p611, %p612
      %p615 = scmp.ne.s32.totalorder %s598, %s614
      %p616 = scmp.eq.s32.totalorder %s51, 0
      %p617 = por %p615, %p616
      %s618 = ssub.s32 %s45, %s52
      %p619 = scmp.eq.s32.totalorder %s618, 0
      %s621 = sadd.s32 %s620, 1
      %s622 = scalar_select %p619, %s620, %s621
      %p625 = pneg %p619
      %p626 = scmp.eq.s32.totalorder %s45, 1
      %p627 = por %p625, %p626
      %p628 = scmp.ne.s32.totalorder %s620, %s623
      %p629 = scmp.eq.s32.totalorder %s45, 0
      %p630 = por %p628, %p629
      %p631 = scmp.ne.s32.totalorder %s620, %s623
      %p632 = scmp.eq.s32.totalorder %s50, 1
      %p633 = por %p631, %p632
      %p634 = scmp.ne.s32.totalorder %s623, %s624
      %p635 = scmp.eq.s32.totalorder %s50, 0
      %p636 = por %p634, %p635
      %p637 = scmp.ne.s32.totalorder %s623, %s624
      %p638 = scmp.eq.s32.totalorder %s51, 1
      %p639 = por %p637, %p638
      %p641 = scmp.ne.s32.totalorder %s624, %s640
      %p642 = scmp.eq.s32.totalorder %s51, 0
      %p643 = por %p641, %p642
      %s644 = ssub.s32 %s45, %s52
      %p645 = scmp.eq.s32.totalorder %s644, 0
      %s647 = sadd.s32 %s646, 1
      %s648 = scalar_select %p645, %s646, %s647
      %p651 = pneg %p645
      %p652 = scmp.eq.s32.totalorder %s45, 1
      %p653 = por %p651, %p652
      %p654 = scmp.ne.s32.totalorder %s646, %s649
      %p655 = scmp.eq.s32.totalorder %s45, 0
      %p656 = por %p654, %p655
      %p657 = scmp.ne.s32.totalorder %s646, %s649
      %p658 = scmp.eq.s32.totalorder %s50, 1
      %p659 = por %p657, %p658
      %p660 = scmp.ne.s32.totalorder %s649, %s650
      %p661 = scmp.eq.s32.totalorder %s50, 0
      %p662 = por %p660, %p661
      %p663 = scmp.ne.s32.totalorder %s649, %s650
      %p664 = scmp.eq.s32.totalorder %s51, 1
      %p665 = por %p663, %p664
      %p667 = scmp.ne.s32.totalorder %s650, %s666
      %p668 = scmp.eq.s32.totalorder %s51, 0
      %p669 = por %p667, %p668
      %p670 = scmp.le.s32.totalorder 1, %s45
      %p671 = scmp.lt.s32.totalorder %s45, 3
      %p672 = pnand %p670, %p671
      %p673 = pneg %p672
      // Predicated region
      $region9: #{tpu_custom_call.1} parent=5 // pred_check
        _
      $region10: #{tpu_custom_call.1} parent=5 // pred_check_branch
        %675 = sbr.rel (%p672) target = $region12
      $region11: #{tpu_custom_call.1} parent=5 // pred_region
        %s676 = ssub.s32 %s45, 1
        // Predicated region
        $region13: #{tpu_custom_call.1} parent=11 // pred_check
          %p677 = pneg %p144
        $region14: #{tpu_custom_call.1} parent=11 // pred_check_branch
          %679 = sbr.rel (%p677) target = $region16
        $region15: #{tpu_custom_call.1} parent=11 // pred_region
          _
        $region16: #{tpu_custom_call.1} parent=11 // pred_fallthru
          _
        // Predicated region
        $region17: #{tpu_custom_call.1} parent=11 // pred_check
          %p680 = pneg %p165
        $region18: #{tpu_custom_call.1} parent=11 // pred_check_branch
          %682 = sbr.rel (%p680) target = $region20
        $region19: #{tpu_custom_call.1} parent=11 // pred_region
          _
        $region20: #{tpu_custom_call.1} parent=11 // pred_fallthru
          _
        // Predicated region
        $region21: #{tpu_custom_call.1} parent=11 // pred_check
          %p683 = pneg %p186
        $region22: #{tpu_custom_call.1} parent=11 // pred_check_branch
          %685 = sbr.rel (%p683) target = $region24
        $region23: #{tpu_custom_call.1} parent=11 // pred_region
          _
        $region24: #{tpu_custom_call.1} parent=11 // pred_fallthru
          _
        // Predicated region
        $region25: #{tpu_custom_call.1} parent=11 // pred_check
          %p686 = pneg %p207
        $region26: #{tpu_custom_call.1} parent=11 // pred_check_branch
          %688 = sbr.rel (%p686) target = $region28
        $region27: #{tpu_custom_call.1} parent=11 // pred_region
          _
        $region28: #{tpu_custom_call.1} parent=11 // pred_fallthru
          _
        // Predicated region
        $region29: #{tpu_custom_call.1} parent=11 // pred_check
          %p689 = pneg %p228
        $region30: #{tpu_custom_call.1} parent=11 // pred_check_branch
          %691 = sbr.rel (%p689) target = $region32
        $region31: #{tpu_custom_call.1} parent=11 // pred_region
          _
        $region32: #{tpu_custom_call.1} parent=11 // pred_fallthru
          _
        // Predicated region
        $region33: #{tpu_custom_call.1} parent=11 // pred_check
          %p692 = pneg %p249
        $region34: #{tpu_custom_call.1} parent=11 // pred_check_branch
          %694 = sbr.rel (%p692) target = $region36
        $region35: #{tpu_custom_call.1} parent=11 // pred_region
          _
        $region36: #{tpu_custom_call.1} parent=11 // pred_fallthru
          _
        // Predicated region
        $region37: #{tpu_custom_call.1} parent=11 // pred_check
          %p695 = pneg %p270
        $region38: #{tpu_custom_call.1} parent=11 // pred_check_branch
          %697 = sbr.rel (%p695) target = $region40
        $region39: #{tpu_custom_call.1} parent=11 // pred_region
          _
        $region40: #{tpu_custom_call.1} parent=11 // pred_fallthru
          _
        // Predicated region
        $region41: #{tpu_custom_call.1} parent=11 // pred_check
          %p698 = pneg %p291
        $region42: #{tpu_custom_call.1} parent=11 // pred_check_branch
          %700 = sbr.rel (%p698) target = $region44
        $region43: #{tpu_custom_call.1} parent=11 // pred_region
          _
        $region44: #{tpu_custom_call.1} parent=11 // pred_fallthru
          _
        // Predicated region
        $region45: #{tpu_custom_call.1} parent=11 // pred_check
          %p701 = pneg %p312
        $region46: #{tpu_custom_call.1} parent=11 // pred_check_branch
          %703 = sbr.rel (%p701) target = $region48
        $region47: #{tpu_custom_call.1} parent=11 // pred_region
          _
        $region48: #{tpu_custom_call.1} parent=11 // pred_fallthru
          _
        // Predicated region
        $region49: #{tpu_custom_call.1} parent=11 // pred_check
          %p704 = pneg %p333
        $region50: #{tpu_custom_call.1} parent=11 // pred_check_branch
          %706 = sbr.rel (%p704) target = $region52
        $region51: #{tpu_custom_call.1} parent=11 // pred_region
          _
        $region52: #{tpu_custom_call.1} parent=11 // pred_fallthru
          _
        // Predicated region
        $region53: #{tpu_custom_call.1} parent=11 // pred_check
          %p707 = pneg %p354
        $region54: #{tpu_custom_call.1} parent=11 // pred_check_branch
          %709 = sbr.rel (%p707) target = $region56
        $region55: #{tpu_custom_call.1} parent=11 // pred_region
          _
        $region56: #{tpu_custom_call.1} parent=11 // pred_fallthru
          _
        // Predicated region
        $region57: #{tpu_custom_call.1} parent=11 // pred_check
          %p710 = pneg %p375
        $region58: #{tpu_custom_call.1} parent=11 // pred_check_branch
          %712 = sbr.rel (%p710) target = $region60
        $region59: #{tpu_custom_call.1} parent=11 // pred_region
          _
        $region60: #{tpu_custom_call.1} parent=11 // pred_fallthru
          _
        // Predicated region
        $region61: #{tpu_custom_call.1} parent=11 // pred_check
          %p713 = pneg %p396
        $region62: #{tpu_custom_call.1} parent=11 // pred_check_branch
          %715 = sbr.rel (%p713) target = $region64
        $region63: #{tpu_custom_call.1} parent=11 // pred_region
          _
        $region64: #{tpu_custom_call.1} parent=11 // pred_fallthru
          _
        // Predicated region
        $region65: #{tpu_custom_call.1} parent=11 // pred_check
          %p716 = pneg %p417
        $region66: #{tpu_custom_call.1} parent=11 // pred_check_branch
          %718 = sbr.rel (%p716) target = $region68
        $region67: #{tpu_custom_call.1} parent=11 // pred_region
          _
        $region68: #{tpu_custom_call.1} parent=11 // pred_fallthru
          _
        // Predicated region
        $region69: #{tpu_custom_call.1} parent=11 // pred_check
          %p719 = pneg %p438
        $region70: #{tpu_custom_call.1} parent=11 // pred_check_branch
          %721 = sbr.rel (%p719) target = $region72
        $region71: #{tpu_custom_call.1} parent=11 // pred_region
          _
        $region72: #{tpu_custom_call.1} parent=11 // pred_fallthru
          _
        // Predicated region
        $region73: #{tpu_custom_call.1} parent=11 // pred_check
          %p722 = pneg %p459
        $region74: #{tpu_custom_call.1} parent=11 // pred_check_branch
          %724 = sbr.rel (%p722) target = $region76
        $region75: #{tpu_custom_call.1} parent=11 // pred_region
          _
        $region76: #{tpu_custom_call.1} parent=11 // pred_fallthru
          _
        // Predicated region
        $region77: #{tpu_custom_call.1} parent=11 // pred_check
          %p725 = pneg %p480
        $region78: #{tpu_custom_call.1} parent=11 // pred_check_branch
          %727 = sbr.rel (%p725) target = $region80
        $region79: #{tpu_custom_call.1} parent=11 // pred_region
          _
        $region80: #{tpu_custom_call.1} parent=11 // pred_fallthru
          _
      $region12: #{tpu_custom_call.1} parent=5 // pred_fallthru
        _
      %p728 = scmp.lt.s32.totalorder %s45, 2
      // Predicated region
      $region81: #{tpu_custom_call.1} parent=5 // pred_check
        %p729 = pneg %p728
      $region82: #{tpu_custom_call.1} parent=5 // pred_check_branch
        %731 = sbr.rel (%p729) target = $region84
      $region83: #{tpu_custom_call.1} parent=5 // pred_region
        // Predicated region
        $region85: #{tpu_custom_call.1} parent=83 // pred_check
          %p732 = pneg %p65
        $region86: #{tpu_custom_call.1} parent=83 // pred_check_branch
          %734 = sbr.rel (%p732) target = $region88
        $region87: #{tpu_custom_call.1} parent=83 // pred_region
          %p735 = scmp.lt.s32.totalorder %s45, 1
          %s736 = scalar_select %p735, %s45, 1
          %s737 = smul.addr %s736, 8
          %s738 = scalar_lea.vmem %s0, %s737
        $region88: #{tpu_custom_call.1} parent=83 // pred_fallthru
          _
        // Predicated region
        $region89: #{tpu_custom_call.1} parent=83 // pred_check
          %p739 = pneg %p91
        $region90: #{tpu_custom_call.1} parent=83 // pred_check_branch
          %741 = sbr.rel (%p739) target = $region92
        $region91: #{tpu_custom_call.1} parent=83 // pred_region
          %p742 = scmp.lt.s32.totalorder %s45, 1
          %s743 = scalar_select %p742, %s45, 1
          %s744 = smul.addr %s743, 8
          %s745 = scalar_lea.vmem %s1, %s744
        $region92: #{tpu_custom_call.1} parent=83 // pred_fallthru
          _
        // Predicated region
        $region93: #{tpu_custom_call.1} parent=83 // pred_check
          %p746 = pneg %p117
        $region94: #{tpu_custom_call.1} parent=83 // pred_check_branch
          %748 = sbr.rel (%p746) target = $region96
        $region95: #{tpu_custom_call.1} parent=83 // pred_region
          %p749 = scmp.lt.s32.totalorder %s45, 1
          %s750 = scalar_select %p749, %s45, 1
          %s751 = smul.addr %s750, 8
          %s752 = scalar_lea.vmem %s2, %s751
        $region96: #{tpu_custom_call.1} parent=83 // pred_fallthru
          _
      $region84: #{tpu_custom_call.1} parent=5 // pred_fallthru
        _
      %p753 = scmp.le.s32.totalorder 1, %s45
      %p754 = scmp.lt.s32.totalorder %s45, 3
      %p755 = pnand %p753, %p754
      %p756 = pneg %p755
      // Predicated region
      $region97: #{tpu_custom_call.1} parent=5 // pred_check
        _
      $region98: #{tpu_custom_call.1} parent=5 // pred_check_branch
        %758 = sbr.rel (%p755) target = $region100
      $region99: #{tpu_custom_call.1} parent=5 // pred_region
        %s759 = ssub.s32 %s45, 1
        %p760 = scmp.lt.s32.totalorder %s50, 1
        %s761 = scalar_select %p760, %s50, 1
        %s762 = smul.addr %s761, 8
        %s763 = scalar_lea.vmem %s0, %s762
        %p764 = pneg %p71
        %p765 = pneg %p68
        %p766 = scmp.lt.s32.totalorder %s50, 1
        %s767 = scalar_select %p766, %s50, 1
        %s768 = smul.addr %s767, 8
        %s769 = scalar_lea.vmem %s1, %s768
        %p770 = pneg %p97
        %p771 = pneg %p94
        %p772 = scmp.lt.s32.totalorder %s50, 1
        %s773 = scalar_select %p772, %s50, 1
        %s774 = smul.addr %s773, 8
        %s775 = scalar_lea.vmem %s2, %s774
        %p776 = pneg %p123
        %p777 = pneg %p120
        %p778 = pneg %p144
        %p779 = pneg %p141
        %p780 = pneg %p165
        %p781 = pneg %p162
        %p782 = pneg %p186
        %p783 = pneg %p183
        %p784 = pneg %p207
        %p785 = pneg %p204
        %p786 = pneg %p228
        %p787 = pneg %p225
        %p788 = pneg %p249
        %p789 = pneg %p246
        %p790 = pneg %p270
        %p791 = pneg %p267
        %p792 = pneg %p291
        %p793 = pneg %p288
        %p794 = pneg %p312
        %p795 = pneg %p309
        %p796 = pneg %p333
        %p797 = pneg %p330
        %p798 = pneg %p354
        %p799 = pneg %p351
        %p800 = pneg %p375
        %p801 = pneg %p372
        %p802 = pneg %p396
        %p803 = pneg %p393
        %p804 = pneg %p417
        %p805 = pneg %p414
        %p806 = pneg %p438
        %p807 = pneg %p435
        %p808 = pneg %p459
        %p809 = pneg %p456
        %p810 = pneg %p480
        %p811 = pneg %p477
        %p812 = pneg %p506
        %p813 = pneg %p503
        %s814 = sand.u32 %s493, 1
        %s815 = scalar_lea.sflag [#allocation3], %s814
        %s816 = sand.u32 %s493, 1
        %s817 = smul.addr %s816, 8
        %s818 = scalar_lea.vmem [#allocation2], %s817
        %p819 = pneg %p532
        %p820 = pneg %p529
        %s821 = sand.u32 %s50, 1
        %s822 = scalar_lea.sflag [#allocation5], %s821
        %s823 = sand.u32 %s519, 1
        %s824 = smul.addr %s823, 8
        %s825 = scalar_lea.vmem [#allocation4], %s824
        %p826 = pneg %p558
        %p827 = pneg %p555
        %s828 = sand.u32 %s50, 1
        %s829 = scalar_lea.sflag [#allocation5], %s828
        %s830 = sand.u32 %s545, 1
        %s831 = smul.addr %s830, 8
        %s832 = scalar_lea.vmem [#allocation6], %s831
        %p833 = pneg %p584
        %p834 = pneg %p581
        %s835 = sand.u32 %s50, 1
        %s836 = scalar_lea.sflag [#allocation8], %s835
        %s837 = sand.u32 %s571, 1
        %s838 = smul.addr %s837, 8
        %s839 = scalar_lea.vmem [#allocation7], %s838
        %p840 = pneg %p610
        %p841 = pneg %p607
        %s842 = sand.u32 %s50, 1
        %s843 = scalar_lea.sflag [#allocation8], %s842
        %s844 = sand.u32 %s597, 1
        %s845 = smul.addr %s844, 8
        %s846 = scalar_lea.vmem [#allocation9], %s845
        %p847 = pneg %p636
        %p848 = pneg %p633
        %s849 = sand.u32 %s50, 1
        %s850 = scalar_lea.sflag [#allocation11], %s849
        %s851 = sand.u32 %s623, 1
        %s852 = smul.addr %s851, 8
        %s853 = scalar_lea.vmem [#allocation10], %s852
        %p854 = pneg %p662
        %p855 = pneg %p659
        %s856 = sand.u32 %s50, 1
        %s857 = scalar_lea.sflag [#allocation11], %s856
        %s858 = sand.u32 %s649, 1
        %s859 = smul.addr %s858, 8
        %s860 = scalar_lea.vmem [#allocation12], %s859
        %p861 = scmp.lt.s32.totalorder %s50, 1
        %s862 = scalar_select %p861, %s50, 1
        %s863 = smul.addr %s862, 8
        %s864 = scalar_lea.vmem %s0, %s863
        %p865 = scmp.lt.s32.totalorder %s50, 1
        %s866 = scalar_select %p865, %s50, 1
        %s867 = smul.addr %s866, 8
        %s868 = scalar_lea.vmem %s1, %s867
        %p869 = scmp.lt.s32.totalorder %s50, 1
        %s870 = scalar_select %p869, %s50, 1
        %s871 = smul.addr %s870, 8
        %s872 = scalar_lea.vmem %s2, %s871
        %v873 = vld [vmem:[%s3] sm:$0xff]
        %v874 = vld [vmem:[%s3 + $0x8] sm:$0xff]
        %v875 = vld [vmem:[%s3 + $0x10] sm:$0xff]
        %v876 = vld [vmem:[%s3 + $0x18] sm:$0xff]
        %v877 = vld [vmem:[%s4] sm:$0xf]
        %v878 = vld [vmem:[%s5] sm:$0xff]
        %v879 = vld [vmem:[%s5 + $0x8] sm:$0xff]
        %v880 = vld [vmem:[%s5 + $0x10] sm:$0xff]
        %v881 = vld [vmem:[%s5 + $0x18] sm:$0xff]
        %v882 = vld [vmem:[%s5 + $0x20] sm:$0xff]
        %v883 = vld [vmem:[%s5 + $0x28] sm:$0xff]
        %v884 = vld [vmem:[%s5 + $0x30] sm:$0xff]
        %v885 = vld [vmem:[%s5 + $0x38] sm:$0xff]
        %v886 = vld [vmem:[%s5 + $0x40] sm:$0xff]
        %v887 = vld [vmem:[%s5 + $0x48] sm:$0xff]
        %v888 = vld [vmem:[%s5 + $0x50] sm:$0xff]
        %v889 = vld [vmem:[%s5 + $0x58] sm:$0xff]
        %v890 = vld [vmem:[%s5 + $0x60] sm:$0xff]
        %v891 = vld [vmem:[%s5 + $0x68] sm:$0xff]
        %v892 = vld [vmem:[%s5 + $0x70] sm:$0xff]
        %v893 = vld [vmem:[%s5 + $0x78] sm:$0xff]
        %v894 = vld [vmem:[%s6] sm:$0xff]
        %v895 = vld [vmem:[%s6 + $0x8] sm:$0xff]
        %v896 = vld [vmem:[%s6 + $0x10] sm:$0xff]
        %v897 = vld [vmem:[%s6 + $0x18] sm:$0xff]
        %v898 = vld [vmem:[%s7] sm:$0xff]
        %v899 = vld [vmem:[%s8] sm:$0xf]
        %v900 = vld [vmem:[%s9] sm:$0xff]
        %v901 = vld [vmem:[%s10] sm:$0xff]
        %v902 = vld [vmem:[%s10 + $0x8] sm:$0xff]
        %v903 = vld [vmem:[%s10 + $0x10] sm:$0xff]
        %v904 = vld [vmem:[%s10 + $0x18] sm:$0xff]
        %v905 = vld [vmem:[%s11] sm:$0xff]
        %v906 = vld [vmem:[%s12] sm:$0xff]
        %v907 = vld [vmem:[%s13] sm:$0xff]
        %v908 = vld [vmem:[%s13 + $0x8] sm:$0xff]
        %v909 = vld [vmem:[%s13 + $0x10] sm:$0xff]
        %v910 = vld [vmem:[%s13 + $0x18] sm:$0xff]
        %v911 = vld [vmem:[%s14] sm:$0xf]
        %v912 = vld [vmem:[%s15] sm:$0xff]
        %v913 = vld [vmem:[%s16] sm:$0x1]
        %v914 = vld [vmem:[%s17] sm:$0x7]
        %v915 = vld [vmem:[%s18] sm:$0x3]
        %v916 = vld [vmem:[%s19] sm:$0x7]
        %v917 = vld [vmem:[%s864] sm:$0xff]
        %v918 = vld [vmem:[%s868] sm:$0xff]
        %v919 = vld [vmem:[%s872] sm:$0xff]
        %v920 = vmul.f32 %v917, %v919
        %vm921 = vcmask 97280
        %v922 = vsel %vm921, %v919, 0.0
        %v923 = vrot.slane %v922, 4
        %v924 = vadd.f32 %v922, %v923
        %v925 = vrot.slane %v924, 2
        %v926 = vadd.f32 %v924, %v925
        %v927 = vrot.slane %v926, 1
        %v928 = vadd.f32 %v926, %v927
        %v929 = vmax.f32 %v928, 1.0
        %v930 = vsel %vm921, %v920, 0.0
        %v931 = vrot.slane %v930, 4
        %v932 = vadd.f32 %v930, %v931
        %v933 = vrot.slane %v932, 2
        %v934 = vadd.f32 %v932, %v933
        %v935 = vrot.slane %v934, 1
        %v936 = vadd.f32 %v934, %v935
        %v937 = vrcp.pop %v929
        %v938 = vmul.f32 %v936, %v937
        %v939 = vsub.f32 %v917, %v938
        %v940 = vmul.f32 %v939, %v919
        %v941 = vmul.f32 %v940, %v940
        %vm942 = vcmask 23552
        %v943 = vsel %vm942, %v941, 0.0
        %944 = vadd.xlane.f32.xlu0 %v943
        %v945 = vpop.xlane.xlu0 %944
        %v946 = vrsqrt.pop %v945
        %v947 = vmul.f32 %v945, %v946
        %vm948 = vcmp.eq.f32.partialorder %v945, inf
        %v949 = vsel %vm948, %v945, %v947
        %vm950 = vcmp.eq.f32.partialorder %v945, 0.0
        %v951 = vand.u32 %v945, 2147483648
        %v952 = vsel %vm950, %v951, %v949
        %v953 = vrot.slane %v952, 4
        %v954 = vadd.f32 %v952, %v953
        %v955 = vrot.slane %v954, 2
        %v956 = vadd.f32 %v954, %v955
        %v957 = vrot.slane %v956, 1
        %v958 = vadd.f32 %v956, %v957
        %v959 = vmul.f32 %v958, %v937
        %v960 = vadd.f32 %v959, 1e-06
        %v961 = vrcp.pop %v960
        %v962 = vmul.f32 %v916, %v961
        %964 = vrot.lane.b32.xlu0 %v941, 125
        %v965 = vpop.permute.xlu0 %964
        %v967 = vsel %vm942, %v965, 0.0
        %968 = vadd.xlane.f32.xlu0 %v967
        %v969 = vpop.xlane.xlu0 %968
        %v970 = vrsqrt.pop %v969
        %v971 = vmul.f32 %v969, %v970
        %vm972 = vcmp.eq.f32.partialorder %v969, inf
        %v973 = vsel %vm972, %v969, %v971
        %vm974 = vcmp.eq.f32.partialorder %v969, 0.0
        %v975 = vand.u32 %v969, 2147483648
        %v976 = vsel %vm974, %v975, %v973
        %v977 = vrot.slane %v976, 4
        %v978 = vadd.f32 %v976, %v977
        %v979 = vrot.slane %v978, 2
        %v980 = vadd.f32 %v978, %v979
        %v981 = vrot.slane %v980, 1
        %v982 = vadd.f32 %v980, %v981
        %v983 = vmul.f32 %v982, %v937
        %v984 = vadd.f32 %v983, 1e-06
        %986 = vrot.lane.b32.xlu0 %v984, 126
        %v987 = vpop.permute.xlu0 %986
        %v989 = vrcp.pop %v987
        %v990 = vmul.f32 %v916, %v989
        %991 = vrot.lane.b32.xlu0 %v941, 122
        %v992 = vpop.permute.xlu0 %991
        %v994 = vsel %vm942, %v992, 0.0
        %995 = vadd.xlane.f32.xlu0 %v994
        %v996 = vpop.xlane.xlu0 %995
        %v997 = vrsqrt.pop %v996
        %v998 = vmul.f32 %v996, %v997
        %vm999 = vcmp.eq.f32.partialorder %v996, inf
        %v1000 = vsel %vm999, %v996, %v998
        %vm1001 = vcmp.eq.f32.partialorder %v996, 0.0
        %v1002 = vand.u32 %v996, 2147483648
        %v1003 = vsel %vm1001, %v1002, %v1000
        %v1004 = vrot.slane %v1003, 4
        %v1005 = vadd.f32 %v1003, %v1004
        %v1006 = vrot.slane %v1005, 2
        %v1007 = vadd.f32 %v1005, %v1006
        %v1008 = vrot.slane %v1007, 1
        %v1009 = vadd.f32 %v1007, %v1008
        %v1010 = vmul.f32 %v1009, %v937
        %v1011 = vadd.f32 %v1010, 1e-06
        %1013 = vrot.lane.b32.xlu0 %v1011, 124
        %v1014 = vpop.permute.xlu0 %1013
        %v1016 = vrcp.pop %v1014
        %v1017 = vmul.f32 %v916, %v1016
        %1018 = vrot.lane.b32.xlu0 %v941, 119
        %v1019 = vpop.permute.xlu0 %1018
        %v1021 = vsel %vm942, %v1019, 0.0
        %1022 = vadd.xlane.f32.xlu0 %v1021
        %v1023 = vpop.xlane.xlu0 %1022
        %v1024 = vrsqrt.pop %v1023
        %v1025 = vmul.f32 %v1023, %v1024
        %vm1026 = vcmp.eq.f32.partialorder %v1023, inf
        %v1027 = vsel %vm1026, %v1023, %v1025
        %vm1028 = vcmp.eq.f32.partialorder %v1023, 0.0
        %v1029 = vand.u32 %v1023, 2147483648
        %v1030 = vsel %vm1028, %v1029, %v1027
        %v1031 = vrot.slane %v1030, 4
        %v1032 = vadd.f32 %v1030, %v1031
        %v1033 = vrot.slane %v1032, 2
        %v1034 = vadd.f32 %v1032, %v1033
        %v1035 = vrot.slane %v1034, 1
        %v1036 = vadd.f32 %v1034, %v1035
        %v1037 = vmul.f32 %v1036, %v937
        %v1038 = vadd.f32 %v1037, 1e-06
        %1040 = vrot.lane.b32.xlu0 %v1038, 122
        %v1041 = vpop.permute.xlu0 %1040
        %v1043 = vrcp.pop %v1041
        %v1044 = vmul.f32 %v916, %v1043
        %1046 = vrot.lane.b32.xlu0 %v962, 1
        %v1047 = vpop.permute.xlu0 %1046
        %1049 = vrot.lane.b32.xlu0 %v962, 2
        %v1050 = vpop.permute.xlu0 %1049
        %1053 = vrot.lane.b32.xlu0 %v990, 2
        %v1054 = vpop.permute.xlu0 %1053
        %1056 = vrot.lane.b32.xlu0 %v990, 3
        %v1057 = vpop.permute.xlu0 %1056
        %1059 = vrot.lane.b32.xlu0 %v990, 4
        %v1060 = vpop.permute.xlu0 %1059
        %1063 = vrot.lane.b32.xlu0 %v1017, 4
        %v1064 = vpop.permute.xlu0 %1063
        %1066 = vrot.lane.b32.xlu0 %v1017, 5
        %v1067 = vpop.permute.xlu0 %1066
        %1069 = vrot.lane.b32.xlu0 %v1017, 6
        %v1070 = vpop.permute.xlu0 %1069
        %1073 = vrot.lane.b32.xlu0 %v1044, 6
        %v1074 = vpop.permute.xlu0 %1073
        %1076 = vrot.lane.b32.xlu0 %v1044, 7
        %v1077 = vpop.permute.xlu0 %1076
        %1079 = vrot.lane.b32.xlu0 %v1044, 8
        %v1080 = vpop.permute.xlu0 %1079
        %vm1082 = vcmask 7168
        %v1083 = vsel %vm1082, %v962, %v1047
        %vm1084 = vcmask 15360
        %v1085 = vsel %vm1084, %v1083, %v1050
        %v1086 = vsel %vm942, %v1085, %v1054
        %vm1087 = vcmask 31744
        %v1088 = vsel %vm1087, %v1086, %v1057
        %vm1089 = vcmask 39936
        %v1090 = vsel %vm1089, %v1088, %v1060
        %vm1091 = vcmask 48128
        %v1092 = vsel %vm1091, %v1090, %v1064
        %vm1093 = vcmask 56320
        %v1094 = vsel %vm1093, %v1092, %v1067
        %vm1095 = vcmask 64512
        %v1096 = vsel %vm1095, %v1094, %v1070
        %vm1097 = vcmask 72704
        %v1098 = vsel %vm1097, %v1096, %v1074
        %vm1099 = vcmask 80896
        %v1100 = vsel %vm1099, %v1098, %v1077
        %vm1101 = vcmask 89088
        %v1102 = vsel %vm1101, %v1100, %v1080
        %vm1103 = vcmask 261120
        %v1104 = vsel %vm1103, %v918, 0.0
        %1105 = vadd.xlane.f32.xlu0 %v1104
        %v1106 = vpop.xlane.xlu0 %1105
        %v1107 = vrcp.pop 32.0
        %v1108 = vmul.f32 %v1106, %v1107
        %v1109 = vsub.f32 %v918, %v1108
        %v1110 = vmul.f32 %v1109, %v1109
        %v1111 = vsel %vm1103, %v1110, 0.0
        %1112 = vadd.xlane.f32.xlu0 %v1111
        %v1113 = vpop.xlane.xlu0 %1112
        %v1114 = vmul.f32 %v1113, %v1107
        %v1115 = vadd.f32 %v1114, 1e-05
        %v1116 = vrsqrt.pop %v1115
        %v1117 = vmul.f32 %v1109, %v1116
        %v1118 = vlaneseq
        %v1119 = vshrl.u32 %v1118, 7
        %v1120 = vsub.s32 0, %v1119
        %v1121 = vrot.slane %v912, %v1120
        %v1122 = vmul.f32 %v1117, %v1121
        %v1123 = vlaneseq
        %v1124 = vshrl.u32 %v1123, 7
        %v1125 = vsub.s32 1, %v1124
        %v1126 = vrot.slane %v912, %v1125
        %v1127 = vadd.f32 %v1122, %v1126
        %v1128 = vlaneseq
        %v1129 = vshrl.u32 %v1128, 7
        %v1130 = vsub.s32 0, %v1129
        %v1131 = vrot.slane %v1102, %v1130
        %v1132 = vmul.f32 %v940, %v1131
        %v1134 = vlaneseq
        %v1135 = vshrl.u32 %v1134, 7
        %v1136 = vsub.s32 0, %v1135
        %v1137 = vrot.slane %v913, %v1136
        %v1140 = vsel %vm1103, %v1127, 0
        %1142 = vmatprep.subr.mxu0 0.0
        %1143 = vmatpush1.msra.mxu0 %v873
        %1144 = vmatprep.subr.mxu0 0.0
        %1145 = vmatpush1.msra.mxu0 %v874
        %1146 = vmatprep.subr.mxu0 0.0
        %1147 = vmatpush1.msra.mxu0 %v875
        %1148 = vmatprep.subr.mxu0 0.0
        %1149 = vmatpush1.msra.mxu0 %v876
        %1150 = vmatprep.subr.mxu0 0.0
        %1151 = vmatpush1.msra.mxu0 0.0
        %1152 = vmatprep.subr.mxu0 0.0
        %1153 = vmatpush1.msra.mxu0 0.0
        %1154 = vmatprep.subr.mxu0 0.0
        %1155 = vmatpush1.msra.mxu0 0.0
        %1156 = vmatprep.subr.mxu0 0.0
        %1157 = vmatpush1.msra.mxu0 0.0
        %1158 = vmatprep.subr.mxu0 0.0
        %1159 = vmatpush1.msra.mxu0 0.0
        %1160 = vmatprep.subr.mxu0 0.0
        %1161 = vmatpush1.msra.mxu0 0.0
        %1162 = vmatprep.subr.mxu0 0.0
        %1163 = vmatpush1.msra.mxu0 0.0
        %1164 = vmatprep.subr.mxu0 0.0
        %1165 = vmatpush1.msra.mxu0 0.0
        %1166 = vmatprep.subr.mxu0 0.0
        %1167 = vmatpush1.msra.mxu0 0.0
        %1168 = vmatprep.subr.mxu0 0.0
        %1169 = vmatpush1.msra.mxu0 0.0
        %1170 = vmatprep.subr.mxu0 0.0
        %1171 = vmatpush1.msra.mxu0 0.0
        %1172 = vmatprep.subr.mxu0 0.0
        %1173 = vmatpush1.msra.mxu0 0.0
        %1174 = vmatprep.subr.mxu0 0.0
        %1175 = vmatpush1.msra.mxu0 0.0
        %1176 = vmatprep.subr.mxu0 0.0
        %1177 = vmatpush1.msra.mxu0 0.0
        %1178 = vmatprep.subr.mxu0 0.0
        %1179 = vmatpush1.msra.mxu0 0.0
        %1180 = vmatprep.subr.mxu0 0.0
        %1181 = vmatpush1.msra.mxu0 0.0
        %1182 = vmatprep.subr.mxu0 0.0
        %1183 = vmatpush1.msra.mxu0 0.0
        %1184 = vmatprep.subr.mxu0 0.0
        %1185 = vmatpush1.msra.mxu0 0.0
        %1186 = vmatprep.subr.mxu0 0.0
        %1187 = vmatpush1.msra.mxu0 0.0
        %1188 = vmatprep.subr.mxu0 0.0
        %1189 = vmatpush1.msra.mxu0 0.0
        %1190 = vmatprep.subr.mxu0 0.0
        %1191 = vmatpush1.msra.mxu0 0.0
        %1192 = vmatprep.subr.mxu0 0.0
        %1193 = vmatpush1.msra.mxu0 0.0
        %1194 = vmatprep.subr.mxu0 0.0
        %1195 = vmatpush1.msra.mxu0 0.0
        %1196 = vmatprep.subr.mxu0 0.0
        %1197 = vmatpush1.msra.mxu0 0.0
        %1198 = vmatprep.subr.mxu0 0.0
        %1199 = vmatpush1.msra.mxu0 0.0
        %1200 = vmatprep.subr.mxu0 0.0
        %1201 = vmatpush1.msra.mxu0 0.0
        %1202 = vmatprep.subr.mxu0 0.0
        %1203 = vmatpush1.msra.mxu0 0.0
        %1204 = vmatprep.subr.mxu0 0.0
        %1205 = vmatpush1.msra.mxu0 0.0
        %1206 = vmatprep.mubr.f32.mxu0 0.0
        %1207 = vmatmul.mubr.f32.gmra.mrb[0].mxu0 %v1140
        %v1208 = vpop.f32.mrb[0].mxu0
        %v1209 = vadd.f32 %v1137, %v1208
        %v1210 = vpop.f32.mrb[0].mxu0
        %1211 = vdwg.mxu0
        %v1212 = vmul.f32 %v1132, %v1132
        %v1213 = vsel %vm942, %v1212, 0.0
        %1214 = vadd.xlane.f32.xlu0 %v1213
        %v1215 = vpop.xlane.xlu0 %1214
        %v1216 = vrsqrt.pop %v1215
        %v1217 = vmul.f32 %v1215, %v1216
        %vm1218 = vcmp.eq.f32.partialorder %v1215, inf
        %v1219 = vsel %vm1218, %v1215, %v1217
        %vm1220 = vcmp.eq.f32.partialorder %v1215, 0.0
        %v1221 = vand.u32 %v1215, 2147483648
        %v1222 = vsel %vm1220, %v1221, %v1219
        %v1223 = vlaneseq
        %v1224 = vshrl.u32 %v1223, 7
        %v1225 = vsub.s32 0, %v1224
        %v1226 = vrot.slane %v877, %v1225
        %v1227 = vmul.f32 %v1222, %v1226
        %v1228 = vadd.f32 %v1209, %v1227
        %1230 = vrot.lane.b32.xlu0 %v1212, 125
        %v1231 = vpop.permute.xlu0 %1230
        %v1233 = vsel %vm942, %v1231, 0.0
        %1234 = vadd.xlane.f32.xlu0 %v1233
        %v1235 = vpop.xlane.xlu0 %1234
        %v1236 = vrsqrt.pop %v1235
        %v1237 = vmul.f32 %v1235, %v1236
        %vm1238 = vcmp.eq.f32.partialorder %v1235, inf
        %v1239 = vsel %vm1238, %v1235, %v1237
        %vm1240 = vcmp.eq.f32.partialorder %v1235, 0.0
        %v1241 = vand.u32 %v1235, 2147483648
        %v1242 = vsel %vm1240, %v1241, %v1239
        %v1243 = vlaneseq
        %v1244 = vshrl.u32 %v1243, 7
        %v1245 = vsub.s32 1, %v1244
        %v1246 = vrot.slane %v877, %v1245
        %v1247 = vmul.f32 %v1242, %v1246
        %v1248 = vadd.f32 %v1228, %v1247
        %1249 = vrot.lane.b32.xlu0 %v1212, 122
        %v1250 = vpop.permute.xlu0 %1249
        %v1252 = vsel %vm942, %v1250, 0.0
        %1253 = vadd.xlane.f32.xlu0 %v1252
        %v1254 = vpop.xlane.xlu0 %1253
        %v1255 = vrsqrt.pop %v1254
        %v1256 = vmul.f32 %v1254, %v1255
        %vm1257 = vcmp.eq.f32.partialorder %v1254, inf
        %v1258 = vsel %vm1257, %v1254, %v1256
        %vm1259 = vcmp.eq.f32.partialorder %v1254, 0.0
        %v1260 = vand.u32 %v1254, 2147483648
        %v1261 = vsel %vm1259, %v1260, %v1258
        %v1262 = vlaneseq
        %v1263 = vshrl.u32 %v1262, 7
        %v1264 = vsub.s32 2, %v1263
        %v1265 = vrot.slane %v877, %v1264
        %v1266 = vmul.f32 %v1261, %v1265
        %v1267 = vadd.f32 %v1248, %v1266
        %1268 = vrot.lane.b32.xlu0 %v1212, 119
        %v1269 = vpop.permute.xlu0 %1268
        %v1271 = vsel %vm942, %v1269, 0.0
        %1272 = vadd.xlane.f32.xlu0 %v1271
        %v1273 = vpop.xlane.xlu0 %1272
        %v1274 = vrsqrt.pop %v1273
        %v1275 = vmul.f32 %v1273, %v1274
        %vm1276 = vcmp.eq.f32.partialorder %v1273, inf
        %v1277 = vsel %vm1276, %v1273, %v1275
        %vm1278 = vcmp.eq.f32.partialorder %v1273, 0.0
        %v1279 = vand.u32 %v1273, 2147483648
        %v1280 = vsel %vm1278, %v1279, %v1277
        %v1281 = vlaneseq
        %v1282 = vshrl.u32 %v1281, 7
        %v1283 = vsub.s32 3, %v1282
        %v1284 = vrot.slane %v877, %v1283
        %v1285 = vmul.f32 %v1280, %v1284
        %v1286 = vadd.f32 %v1267, %v1285
        %v1287 = vxor.u32 %v1286, 2147483648
        %v1288 = vmul.f32 %v1287, 1.442695
        %v1289 = vpow.pop %v1288
        %v1290 = vadd.f32 %v1289, 1.0
        %v1291 = vrcp.pop %v1290
        %v1292 = vmul.f32 1.0, %v1291
        %v1293 = vmul.f32 %v1286, %v1292
        %1294 = vmatprep.subr.mxu0 0.0
        %1295 = vmatpush1.msra.mxu0 %v878
        %1296 = vmatprep.subr.mxu0 0.0
        %1297 = vmatpush1.msra.mxu0 %v879
        %1298 = vmatprep.subr.mxu0 0.0
        %1299 = vmatpush1.msra.mxu0 %v880
        %1300 = vmatprep.subr.mxu0 0.0
        %1301 = vmatpush1.msra.mxu0 %v881
        %1302 = vmatprep.subr.mxu0 0.0
        %1303 = vmatpush1.msra.mxu0 %v882
        %1304 = vmatprep.subr.mxu0 0.0
        %1305 = vmatpush1.msra.mxu0 %v883
        %1306 = vmatprep.subr.mxu0 0.0
        %1307 = vmatpush1.msra.mxu0 %v884
        %1308 = vmatprep.subr.mxu0 0.0
        %1309 = vmatpush1.msra.mxu0 %v885
        %1310 = vmatprep.subr.mxu0 0.0
        %1311 = vmatpush1.msra.mxu0 %v886
        %1312 = vmatprep.subr.mxu0 0.0
        %1313 = vmatpush1.msra.mxu0 %v887
        %1314 = vmatprep.subr.mxu0 0.0
        %1315 = vmatpush1.msra.mxu0 %v888
        %1316 = vmatprep.subr.mxu0 0.0
        %1317 = vmatpush1.msra.mxu0 %v889
        %1318 = vmatprep.subr.mxu0 0.0
        %1319 = vmatpush1.msra.mxu0 %v890
        %1320 = vmatprep.subr.mxu0 0.0
        %1321 = vmatpush1.msra.mxu0 %v891
        %1322 = vmatprep.subr.mxu0 0.0
        %1323 = vmatpush1.msra.mxu0 %v892
        %1324 = vmatprep.subr.mxu0 0.0
        %1325 = vmatpush1.msra.mxu0 %v893
        %1326 = vmatprep.subr.mxu0 0.0
        %1327 = vmatpush1.msra.mxu0 0.0
        %1328 = vmatprep.subr.mxu0 0.0
        %1329 = vmatpush1.msra.mxu0 0.0
        %1330 = vmatprep.subr.mxu0 0.0
        %1331 = vmatpush1.msra.mxu0 0.0
        %1332 = vmatprep.subr.mxu0 0.0
        %1333 = vmatpush1.msra.mxu0 0.0
        %1334 = vmatprep.subr.mxu0 0.0
        %1335 = vmatpush1.msra.mxu0 0.0
        %1336 = vmatprep.subr.mxu0 0.0
        %1337 = vmatpush1.msra.mxu0 0.0
        %1338 = vmatprep.subr.mxu0 0.0
        %1339 = vmatpush1.msra.mxu0 0.0
        %1340 = vmatprep.subr.mxu0 0.0
        %1341 = vmatpush1.msra.mxu0 0.0
        %1342 = vmatprep.subr.mxu0 0.0
        %1343 = vmatpush1.msra.mxu0 0.0
        %1344 = vmatprep.subr.mxu0 0.0
        %1345 = vmatpush1.msra.mxu0 0.0
        %1346 = vmatprep.subr.mxu0 0.0
        %1347 = vmatpush1.msra.mxu0 0.0
        %1348 = vmatprep.subr.mxu0 0.0
        %1349 = vmatpush1.msra.mxu0 0.0
        %1350 = vmatprep.subr.mxu0 0.0
        %1351 = vmatpush1.msra.mxu0 0.0
        %1352 = vmatprep.subr.mxu0 0.0
        %1353 = vmatpush1.msra.mxu0 0.0
        %1354 = vmatprep.subr.mxu0 0.0
        %1355 = vmatpush1.msra.mxu0 0.0
        %1356 = vmatprep.subr.mxu0 0.0
        %1357 = vmatpush1.msra.mxu0 0.0
        %1358 = vmatprep.mubr.f32.mxu0 0.0
        %1359 = vmatmul.mubr.f32.gmra.mrb[0].mxu0 %v1293
        %v1360 = vpop.f32.mrb[0].mxu0
        %v1361 = vadd.f32 0.0, %v1360
        %v1362 = vpop.f32.mrb[0].mxu0
        %1363 = vdwg.mxu0
        %v1364 = vadd.f32 %v918, %v1361
        %v1365 = vlaneseq
        %v1366 = vshrl.u32 %v1365, 7
        %v1367 = vsub.s32 2, %v1366
        %v1368 = vrot.slane %v912, %v1367
        %v1369 = vadd.f32 %v1364, %v1368
        %v1370 = vlaneseq
        %v1371 = vshrl.u32 %v1370, 7
        %v1372 = vsub.s32 0, %v1371
        %v1373 = vrot.slane %v914, %v1372
        %1374 = vmatprep.subr.mxu0 0.0
        %1375 = vmatpush1.msra.mxu0 %v894
        %1376 = vmatprep.subr.mxu0 0.0
        %1377 = vmatpush1.msra.mxu0 %v895
        %1378 = vmatprep.subr.mxu0 0.0
        %1379 = vmatpush1.msra.mxu0 %v896
        %1380 = vmatprep.subr.mxu0 0.0
        %1381 = vmatpush1.msra.mxu0 %v897
        %1382 = vmatprep.subr.mxu0 0.0
        %1383 = vmatpush1.msra.mxu0 0.0
        %1384 = vmatprep.subr.mxu0 0.0
        %1385 = vmatpush1.msra.mxu0 0.0
        %1386 = vmatprep.subr.mxu0 0.0
        %1387 = vmatpush1.msra.mxu0 0.0
        %1388 = vmatprep.subr.mxu0 0.0
        %1389 = vmatpush1.msra.mxu0 0.0
        %1390 = vmatprep.subr.mxu0 0.0
        %1391 = vmatpush1.msra.mxu0 0.0
        %1392 = vmatprep.subr.mxu0 0.0
        %1393 = vmatpush1.msra.mxu0 0.0
        %1394 = vmatprep.subr.mxu0 0.0
        %1395 = vmatpush1.msra.mxu0 0.0
        %1396 = vmatprep.subr.mxu0 0.0
        %1397 = vmatpush1.msra.mxu0 0.0
        %1398 = vmatprep.subr.mxu0 0.0
        %1399 = vmatpush1.msra.mxu0 0.0
        %1400 = vmatprep.subr.mxu0 0.0
        %1401 = vmatpush1.msra.mxu0 0.0
        %1402 = vmatprep.subr.mxu0 0.0
        %1403 = vmatpush1.msra.mxu0 0.0
        %1404 = vmatprep.subr.mxu0 0.0
        %1405 = vmatpush1.msra.mxu0 0.0
        %1406 = vmatprep.subr.mxu0 0.0
        %1407 = vmatpush1.msra.mxu0 0.0
        %1408 = vmatprep.subr.mxu0 0.0
        %1409 = vmatpush1.msra.mxu0 0.0
        %1410 = vmatprep.subr.mxu0 0.0
        %1411 = vmatpush1.msra.mxu0 0.0
        %1412 = vmatprep.subr.mxu0 0.0
        %1413 = vmatpush1.msra.mxu0 0.0
        %1414 = vmatprep.subr.mxu0 0.0
        %1415 = vmatpush1.msra.mxu0 0.0
        %1416 = vmatprep.subr.mxu0 0.0
        %1417 = vmatpush1.msra.mxu0 0.0
        %1418 = vmatprep.subr.mxu0 0.0
        %1419 = vmatpush1.msra.mxu0 0.0
        %1420 = vmatprep.subr.mxu0 0.0
        %1421 = vmatpush1.msra.mxu0 0.0
        %1422 = vmatprep.subr.mxu0 0.0
        %1423 = vmatpush1.msra.mxu0 0.0
        %1424 = vmatprep.subr.mxu0 0.0
        %1425 = vmatpush1.msra.mxu0 0.0
        %1426 = vmatprep.subr.mxu0 0.0
        %1427 = vmatpush1.msra.mxu0 0.0
        %1428 = vmatprep.subr.mxu0 0.0
        %1429 = vmatpush1.msra.mxu0 0.0
        %1430 = vmatprep.subr.mxu0 0.0
        %1431 = vmatpush1.msra.mxu0 0.0
        %1432 = vmatprep.subr.mxu0 0.0
        %1433 = vmatpush1.msra.mxu0 0.0
        %1434 = vmatprep.subr.mxu0 0.0
        %1435 = vmatpush1.msra.mxu0 0.0
        %1436 = vmatprep.subr.mxu0 0.0
        %1437 = vmatpush1.msra.mxu0 0.0
        %1438 = vmatprep.mubr.f32.mxu0 0.0
        %1439 = vmatmul.mubr.f32.gmra.mrb[0].mxu0 %v1140
        %v1440 = vpop.f32.mrb[0].mxu0
        %v1441 = vadd.f32 %v1373, %v1440
        %v1442 = vpop.f32.mrb[0].mxu0
        %1443 = vdwg.mxu0
        %v1444 = vxor.u32 %v1441, 2147483648
        %v1445 = vmul.f32 %v1444, 1.442695
        %v1446 = vpow.pop %v1445
        %v1447 = vadd.f32 %v1446, 1.0
        %v1448 = vrcp.pop %v1447
        %v1449 = vmul.f32 1.0, %v1448
        %v1450 = vmul.f32 %v1441, %v1449
        %v1451 = vlaneseq
        %v1452 = vshrl.u32 %v1451, 7
        %v1453 = vsub.s32 1, %v1452
        %v1454 = vrot.slane %v914, %v1453
        %v1456 = vsel %vm1095, %v1450, 0
        %1458 = vmatprep.subr.mxu0 0.0
        %1459 = vmatpush1.msra.mxu0 %v898
        %1460 = vmatprep.subr.mxu0 0.0
        %1461 = vmatpush1.msra.mxu0 0.0
        %1462 = vmatprep.subr.mxu0 0.0
        %1463 = vmatpush1.msra.mxu0 0.0
        %1464 = vmatprep.subr.mxu0 0.0
        %1465 = vmatpush1.msra.mxu0 0.0
        %1466 = vmatprep.subr.mxu0 0.0
        %1467 = vmatpush1.msra.mxu0 0.0
        %1468 = vmatprep.subr.mxu0 0.0
        %1469 = vmatpush1.msra.mxu0 0.0
        %1470 = vmatprep.subr.mxu0 0.0
        %1471 = vmatpush1.msra.mxu0 0.0
        %1472 = vmatprep.subr.mxu0 0.0
        %1473 = vmatpush1.msra.mxu0 0.0
        %1474 = vmatprep.subr.mxu0 0.0
        %1475 = vmatpush1.msra.mxu0 0.0
        %1476 = vmatprep.subr.mxu0 0.0
        %1477 = vmatpush1.msra.mxu0 0.0
        %1478 = vmatprep.subr.mxu0 0.0
        %1479 = vmatpush1.msra.mxu0 0.0
        %1480 = vmatprep.subr.mxu0 0.0
        %1481 = vmatpush1.msra.mxu0 0.0
        %1482 = vmatprep.subr.mxu0 0.0
        %1483 = vmatpush1.msra.mxu0 0.0
        %1484 = vmatprep.subr.mxu0 0.0
        %1485 = vmatpush1.msra.mxu0 0.0
        %1486 = vmatprep.subr.mxu0 0.0
        %1487 = vmatpush1.msra.mxu0 0.0
        %1488 = vmatprep.subr.mxu0 0.0
        %1489 = vmatpush1.msra.mxu0 0.0
        %1490 = vmatprep.subr.mxu0 0.0
        %1491 = vmatpush1.msra.mxu0 0.0
        %1492 = vmatprep.subr.mxu0 0.0
        %1493 = vmatpush1.msra.mxu0 0.0
        %1494 = vmatprep.subr.mxu0 0.0
        %1495 = vmatpush1.msra.mxu0 0.0
        %1496 = vmatprep.subr.mxu0 0.0
        %1497 = vmatpush1.msra.mxu0 0.0
        %1498 = vmatprep.subr.mxu0 0.0
        %1499 = vmatpush1.msra.mxu0 0.0
        %1500 = vmatprep.subr.mxu0 0.0
        %1501 = vmatpush1.msra.mxu0 0.0
        %1502 = vmatprep.subr.mxu0 0.0
        %1503 = vmatpush1.msra.mxu0 0.0
        %1504 = vmatprep.subr.mxu0 0.0
        %1505 = vmatpush1.msra.mxu0 0.0
        %1506 = vmatprep.subr.mxu0 0.0
        %1507 = vmatpush1.msra.mxu0 0.0
        %1508 = vmatprep.subr.mxu0 0.0
        %1509 = vmatpush1.msra.mxu0 0.0
        %1510 = vmatprep.subr.mxu0 0.0
        %1511 = vmatpush1.msra.mxu0 0.0
        %1512 = vmatprep.subr.mxu0 0.0
        %1513 = vmatpush1.msra.mxu0 0.0
        %1514 = vmatprep.subr.mxu0 0.0
        %1515 = vmatpush1.msra.mxu0 0.0
        %1516 = vmatprep.subr.mxu0 0.0
        %1517 = vmatpush1.msra.mxu0 0.0
        %1518 = vmatprep.subr.mxu0 0.0
        %1519 = vmatpush1.msra.mxu0 0.0
        %1520 = vmatprep.subr.mxu0 0.0
        %1521 = vmatpush1.msra.mxu0 0.0
        %1522 = vmatprep.mubr.f32.mxu0 0.0
        %1523 = vmatmul.mubr.f32.gmra.mrb[0].mxu0 %v1456
        %v1524 = vpop.f32.mrb[0].mxu0
        %v1525 = vadd.f32 %v1454, %v1524
        %v1526 = vpop.f32.mrb[0].mxu0
        %1527 = vdwg.mxu0
        %v1529 = vsel %vm1095, %v1525, 0
        %1531 = vmatprep.subr.mxu0 0.0
        %1532 = vmatpush1.msra.mxu0 %v900
        %1533 = vmatprep.subr.mxu0 0.0
        %1534 = vmatpush1.msra.mxu0 0.0
        %1535 = vmatprep.subr.mxu0 0.0
        %1536 = vmatpush1.msra.mxu0 0.0
        %1537 = vmatprep.subr.mxu0 0.0
        %1538 = vmatpush1.msra.mxu0 0.0
        %1539 = vmatprep.subr.mxu0 0.0
        %1540 = vmatpush1.msra.mxu0 0.0
        %1541 = vmatprep.subr.mxu0 0.0
        %1542 = vmatpush1.msra.mxu0 0.0
        %1543 = vmatprep.subr.mxu0 0.0
        %1544 = vmatpush1.msra.mxu0 0.0
        %1545 = vmatprep.subr.mxu0 0.0
        %1546 = vmatpush1.msra.mxu0 0.0
        %1547 = vmatprep.subr.mxu0 0.0
        %1548 = vmatpush1.msra.mxu0 0.0
        %1549 = vmatprep.subr.mxu0 0.0
        %1550 = vmatpush1.msra.mxu0 0.0
        %1551 = vmatprep.subr.mxu0 0.0
        %1552 = vmatpush1.msra.mxu0 0.0
        %1553 = vmatprep.subr.mxu0 0.0
        %1554 = vmatpush1.msra.mxu0 0.0
        %1555 = vmatprep.subr.mxu0 0.0
        %1556 = vmatpush1.msra.mxu0 0.0
        %1557 = vmatprep.subr.mxu0 0.0
        %1558 = vmatpush1.msra.mxu0 0.0
        %1559 = vmatprep.subr.mxu0 0.0
        %1560 = vmatpush1.msra.mxu0 0.0
        %1561 = vmatprep.subr.mxu0 0.0
        %1562 = vmatpush1.msra.mxu0 0.0
        %1563 = vmatprep.subr.mxu0 0.0
        %1564 = vmatpush1.msra.mxu0 0.0
        %1565 = vmatprep.subr.mxu0 0.0
        %1566 = vmatpush1.msra.mxu0 0.0
        %1567 = vmatprep.subr.mxu0 0.0
        %1568 = vmatpush1.msra.mxu0 0.0
        %1569 = vmatprep.subr.mxu0 0.0
        %1570 = vmatpush1.msra.mxu0 0.0
        %1571 = vmatprep.subr.mxu0 0.0
        %1572 = vmatpush1.msra.mxu0 0.0
        %1573 = vmatprep.subr.mxu0 0.0
        %1574 = vmatpush1.msra.mxu0 0.0
        %1575 = vmatprep.subr.mxu0 0.0
        %1576 = vmatpush1.msra.mxu0 0.0
        %1577 = vmatprep.subr.mxu0 0.0
        %1578 = vmatpush1.msra.mxu0 0.0
        %1579 = vmatprep.subr.mxu0 0.0
        %1580 = vmatpush1.msra.mxu0 0.0
        %1581 = vmatprep.subr.mxu0 0.0
        %1582 = vmatpush1.msra.mxu0 0.0
        %1583 = vmatprep.subr.mxu0 0.0
        %1584 = vmatpush1.msra.mxu0 0.0
        %1585 = vmatprep.subr.mxu0 0.0
        %1586 = vmatpush1.msra.mxu0 0.0
        %1587 = vmatprep.subr.mxu0 0.0
        %1588 = vmatpush1.msra.mxu0 0.0
        %1589 = vmatprep.subr.mxu0 0.0
        %1590 = vmatpush1.msra.mxu0 0.0
        %1591 = vmatprep.subr.mxu0 0.0
        %1592 = vmatpush1.msra.mxu0 0.0
        %1593 = vmatprep.subr.mxu0 0.0
        %1594 = vmatpush1.msra.mxu0 0.0
        %1595 = vmatprep.mubr.f32.mxu0 0.0
        %1596 = vmatmul.mubr.f32.gmra.mrb[0].mxu0 %v1529
        %v1597 = vpop.f32.mrb[0].mxu0
        %v1598 = vadd.f32 0.0, %v1597
        %v1599 = vpop.f32.mrb[0].mxu0
        %1600 = vdwg.mxu0
        %vm1601 = vcmask 60416
        %v1602 = vsel %vm1601, %v899, 0.0
        %1603 = vadd.xlane.f32.xlu0 %v1602
        %v1604 = vpop.xlane.xlu0 %1603
        %v1605 = vlaneseq
        %v1606 = vshrl.u32 %v1605, 7
        %v1607 = vsub.s32 0, %v1606
        %v1608 = vrot.slane %v1604, %v1607
        %v1609 = vmul.f32 %v1132, %v1608
        %v1610 = vlaneseq
        %v1611 = vshrl.u32 %v1610, 7
        %v1612 = vsub.s32 1, %v1611
        %v1613 = vrot.slane %v1604, %v1612
        %v1614 = vmul.f32 %v1132, %v1613
        %1616 = vrot.lane.b32.xlu0 %v1614, 125
        %v1617 = vpop.permute.xlu0 %1616
        %v1619 = vadd.f32 %v1609, %v1617
        %v1620 = vlaneseq
        %v1621 = vshrl.u32 %v1620, 7
        %v1622 = vsub.s32 2, %v1621
        %v1623 = vrot.slane %v1604, %v1622
        %v1624 = vmul.f32 %v1132, %v1623
        %1626 = vrot.lane.b32.xlu0 %v1624, 122
        %v1627 = vpop.permute.xlu0 %1626
        %v1629 = vadd.f32 %v1619, %v1627
        %v1630 = vlaneseq
        %v1631 = vshrl.u32 %v1630, 7
        %v1632 = vsub.s32 3, %v1631
        %v1633 = vrot.slane %v1604, %v1632
        %v1634 = vmul.f32 %v1132, %v1633
        %1636 = vrot.lane.b32.xlu0 %v1634, 119
        %v1637 = vpop.permute.xlu0 %1636
        %v1639 = vadd.f32 %v1629, %v1637
        %1641 = vset.pattern.permute.xlu0 0
        %1642 = vperm.xlu0 %1641, %v1598
        %v1643 = vpop.permute.xlu0 %1642
        %v1645 = vmul.f32 %v1643, %v1639
        %1646 = vset.pattern.permute.xlu0 1
        %1647 = vperm.xlu0 %1646, %v1598
        %v1648 = vpop.permute.xlu0 %1647
        %v1650 = vmul.f32 %v1648, %v1639
        %1651 = vset.pattern.permute.xlu0 2
        %1652 = vperm.xlu0 %1651, %v1598
        %v1653 = vpop.permute.xlu0 %1652
        %v1655 = vmul.f32 %v1653, %v1639
        %1656 = vset.pattern.permute.xlu0 3
        %1657 = vperm.xlu0 %1656, %v1598
        %v1658 = vpop.permute.xlu0 %1657
        %v1660 = vmul.f32 %v1658, %v1639
        %1662 = vrot.lane.b32.xlu0 %v1650, 3
        %v1663 = vpop.permute.xlu0 %1662
        %1666 = vrot.lane.b32.xlu0 %v1655, 6
        %v1667 = vpop.permute.xlu0 %1666
        %1670 = vrot.lane.b32.xlu0 %v1660, 9
        %v1671 = vpop.permute.xlu0 %1670
        %v1673 = vsel %vm942, %v1645, %v1663
        %v1674 = vsel %vm1091, %v1673, %v1667
        %v1675 = vsel %vm1097, %v1674, %v1671
        %v1676 = vadd.f32 %v917, %v1675
        %v1677 = vmul.f32 %v1676, %v919
        %v1678 = vsel %vm921, %v1677, 0.0
        %v1679 = vrot.slane %v1678, 4
        %v1680 = vadd.f32 %v1678, %v1679
        %v1681 = vrot.slane %v1680, 2
        %v1682 = vadd.f32 %v1680, %v1681
        %v1683 = vrot.slane %v1682, 1
        %v1684 = vadd.f32 %v1682, %v1683
        %v1685 = vmul.f32 %v1684, %v937
        %1687 = vrot.lane.b32.xlu0 %v916, 1
        %v1688 = vpop.permute.xlu0 %1687
        %1690 = vrot.lane.b32.xlu0 %v916, 2
        %v1691 = vpop.permute.xlu0 %1690
        %1693 = vrot.lane.b32.xlu0 %v916, 3
        %v1694 = vpop.permute.xlu0 %1693
        %1696 = vrot.lane.b32.xlu0 %v916, 4
        %v1697 = vpop.permute.xlu0 %1696
        %1699 = vrot.lane.b32.xlu0 %v916, 5
        %v1700 = vpop.permute.xlu0 %1699
        %1702 = vrot.lane.b32.xlu0 %v916, 6
        %v1703 = vpop.permute.xlu0 %1702
        %1705 = vrot.lane.b32.xlu0 %v916, 7
        %v1706 = vpop.permute.xlu0 %1705
        %1708 = vrot.lane.b32.xlu0 %v916, 8
        %v1709 = vpop.permute.xlu0 %1708
        %v1711 = vsel %vm1082, %v916, %v1688
        %v1712 = vsel %vm1084, %v1711, %v1691
        %v1713 = vsel %vm942, %v1712, %v1691
        %v1714 = vsel %vm1087, %v1713, %v1694
        %v1715 = vsel %vm1089, %v1714, %v1697
        %v1716 = vsel %vm1091, %v1715, %v1697
        %v1717 = vsel %vm1093, %v1716, %v1700
        %v1718 = vsel %vm1095, %v1717, %v1703
        %v1719 = vsel %vm1097, %v1718, %v1703
        %v1720 = vsel %vm1099, %v1719, %v1706
        %v1721 = vsel %vm1101, %v1720, %v1709
        %v1722 = vsub.f32 %v1676, %v1685
        %v1723 = vmul.f32 %v1722, %v919
        %v1724 = vmul.f32 %v1723, %v1723
        %v1725 = vsel %vm942, %v1724, 0.0
        %1726 = vadd.xlane.f32.xlu0 %v1725
        %v1727 = vpop.xlane.xlu0 %1726
        %v1728 = vrsqrt.pop %v1727
        %v1729 = vmul.f32 %v1727, %v1728
        %vm1730 = vcmp.eq.f32.partialorder %v1727, inf
        %v1731 = vsel %vm1730, %v1727, %v1729
        %vm1732 = vcmp.eq.f32.partialorder %v1727, 0.0
        %v1733 = vand.u32 %v1727, 2147483648
        %v1734 = vsel %vm1732, %v1733, %v1731
        %v1735 = vrot.slane %v1734, 4
        %v1736 = vadd.f32 %v1734, %v1735
        %v1737 = vrot.slane %v1736, 2
        %v1738 = vadd.f32 %v1736, %v1737
        %v1739 = vrot.slane %v1738, 1
        %v1740 = vadd.f32 %v1738, %v1739
        %v1741 = vmul.f32 %v1740, %v937
        %v1742 = vadd.f32 %v1741, 1e-06
        %v1743 = vrcp.pop %v1742
        %v1744 = vmul.f32 %v916, %v1743
        %1746 = vrot.lane.b32.xlu0 %v1724, 125
        %v1747 = vpop.permute.xlu0 %1746
        %v1749 = vsel %vm942, %v1747, 0.0
        %1750 = vadd.xlane.f32.xlu0 %v1749
        %v1751 = vpop.xlane.xlu0 %1750
        %v1752 = vrsqrt.pop %v1751
        %v1753 = vmul.f32 %v1751, %v1752
        %vm1754 = vcmp.eq.f32.partialorder %v1751, inf
        %v1755 = vsel %vm1754, %v1751, %v1753
        %vm1756 = vcmp.eq.f32.partialorder %v1751, 0.0
        %v1757 = vand.u32 %v1751, 2147483648
        %v1758 = vsel %vm1756, %v1757, %v1755
        %v1759 = vrot.slane %v1758, 4
        %v1760 = vadd.f32 %v1758, %v1759
        %v1761 = vrot.slane %v1760, 2
        %v1762 = vadd.f32 %v1760, %v1761
        %v1763 = vrot.slane %v1762, 1
        %v1764 = vadd.f32 %v1762, %v1763
        %v1765 = vmul.f32 %v1764, %v937
        %v1766 = vadd.f32 %v1765, 1e-06
        %1768 = vrot.lane.b32.xlu0 %v1766, 126
        %v1769 = vpop.permute.xlu0 %1768
        %v1771 = vrcp.pop %v1769
        %v1772 = vmul.f32 %v916, %v1771
        %1773 = vrot.lane.b32.xlu0 %v1724, 122
        %v1774 = vpop.permute.xlu0 %1773
        %v1776 = vsel %vm942, %v1774, 0.0
        %1777 = vadd.xlane.f32.xlu0 %v1776
        %v1778 = vpop.xlane.xlu0 %1777
        %v1779 = vrsqrt.pop %v1778
        %v1780 = vmul.f32 %v1778, %v1779
        %vm1781 = vcmp.eq.f32.partialorder %v1778, inf
        %v1782 = vsel %vm1781, %v1778, %v1780
        %vm1783 = vcmp.eq.f32.partialorder %v1778, 0.0
        %v1784 = vand.u32 %v1778, 2147483648
        %v1785 = vsel %vm1783, %v1784, %v1782
        %v1786 = vrot.slane %v1785, 4
        %v1787 = vadd.f32 %v1785, %v1786
        %v1788 = vrot.slane %v1787, 2
        %v1789 = vadd.f32 %v1787, %v1788
        %v1790 = vrot.slane %v1789, 1
        %v1791 = vadd.f32 %v1789, %v1790
        %v1792 = vmul.f32 %v1791, %v937
        %v1793 = vadd.f32 %v1792, 1e-06
        %1795 = vrot.lane.b32.xlu0 %v1793, 124
        %v1796 = vpop.permute.xlu0 %1795
        %v1798 = vrcp.pop %v1796
        %v1799 = vmul.f32 %v916, %v1798
        %1800 = vrot.lane.b32.xlu0 %v1724, 119
        %v1801 = vpop.permute.xlu0 %1800
        %v1803 = vsel %vm942, %v1801, 0.0
        %1804 = vadd.xlane.f32.xlu0 %v1803
        %v1805 = vpop.xlane.xlu0 %1804
        %v1806 = vrsqrt.pop %v1805
        %v1807 = vmul.f32 %v1805, %v1806
        %vm1808 = vcmp.eq.f32.partialorder %v1805, inf
        %v1809 = vsel %vm1808, %v1805, %v1807
        %vm1810 = vcmp.eq.f32.partialorder %v1805, 0.0
        %v1811 = vand.u32 %v1805, 2147483648
        %v1812 = vsel %vm1810, %v1811, %v1809
        %v1813 = vrot.slane %v1812, 4
        %v1814 = vadd.f32 %v1812, %v1813
        %v1815 = vrot.slane %v1814, 2
        %v1816 = vadd.f32 %v1814, %v1815
        %v1817 = vrot.slane %v1816, 1
        %v1818 = vadd.f32 %v1816, %v1817
        %v1819 = vmul.f32 %v1818, %v937
        %v1820 = vadd.f32 %v1819, 1e-06
        %1822 = vrot.lane.b32.xlu0 %v1820, 122
        %v1823 = vpop.permute.xlu0 %1822
        %v1825 = vrcp.pop %v1823
        %v1826 = vmul.f32 %v916, %v1825
        %1828 = vrot.lane.b32.xlu0 %v1744, 1
        %v1829 = vpop.permute.xlu0 %1828
        %1831 = vrot.lane.b32.xlu0 %v1744, 2
        %v1832 = vpop.permute.xlu0 %1831
        %1835 = vrot.lane.b32.xlu0 %v1772, 2
        %v1836 = vpop.permute.xlu0 %1835
        %1838 = vrot.lane.b32.xlu0 %v1772, 3
        %v1839 = vpop.permute.xlu0 %1838
        %1841 = vrot.lane.b32.xlu0 %v1772, 4
        %v1842 = vpop.permute.xlu0 %1841
        %1845 = vrot.lane.b32.xlu0 %v1799, 4
        %v1846 = vpop.permute.xlu0 %1845
        %1848 = vrot.lane.b32.xlu0 %v1799, 5
        %v1849 = vpop.permute.xlu0 %1848
        %1851 = vrot.lane.b32.xlu0 %v1799, 6
        %v1852 = vpop.permute.xlu0 %1851
        %1855 = vrot.lane.b32.xlu0 %v1826, 6
        %v1856 = vpop.permute.xlu0 %1855
        %1858 = vrot.lane.b32.xlu0 %v1826, 7
        %v1859 = vpop.permute.xlu0 %1858
        %1861 = vrot.lane.b32.xlu0 %v1826, 8
        %v1862 = vpop.permute.xlu0 %1861
        %v1864 = vsel %vm1082, %v1744, %v1829
        %v1865 = vsel %vm1084, %v1864, %v1832
        %v1866 = vsel %vm942, %v1865, %v1836
        %v1867 = vsel %vm1087, %v1866, %v1839
        %v1868 = vsel %vm1089, %v1867, %v1842
        %v1869 = vsel %vm1091, %v1868, %v1846
        %v1870 = vsel %vm1093, %v1869, %v1849
        %v1871 = vsel %vm1095, %v1870, %v1852
        %v1872 = vsel %vm1097, %v1871, %v1856
        %v1873 = vsel %vm1099, %v1872, %v1859
        %v1874 = vsel %vm1101, %v1873, %v1862
        %v1875 = vlaneseq
        %v1876 = vshrl.u32 %v1875, 7
        %v1877 = vsub.s32 1, %v1876
        %v1878 = vrot.slane %v1721, %v1877
        %v1879 = vmul.f32 %v1723, %v1878
        %v1880 = vlaneseq
        %v1881 = vshrl.u32 %v1880, 7
        %v1882 = vsub.s32 2, %v1881
        %v1883 = vrot.slane %v1874, %v1882
        %v1884 = vmul.f32 %v1723, %v1883
        %s1886 = vtos %v911
        %v1887 = vstv %s1886
        %v1889 = vmul.f32 %v1884, %v1887
        %v1890 = vrot.slane %v911, 1
        %s1891 = vtos %v1890
        %v1892 = vstv %s1891
        %v1894 = vmul.f32 %v1884, %v1892
        %1896 = vrot.lane.b32.xlu0 %v1894, 125
        %v1897 = vpop.permute.xlu0 %1896
        %v1899 = vadd.f32 %v1889, %v1897
        %v1900 = vrot.slane %v911, 2
        %s1901 = vtos %v1900
        %v1902 = vstv %s1901
        %v1904 = vmul.f32 %v1884, %v1902
        %1906 = vrot.lane.b32.xlu0 %v1904, 122
        %v1907 = vpop.permute.xlu0 %1906
        %v1909 = vadd.f32 %v1899, %v1907
        %v1910 = vrot.slane %v911, 3
        %s1911 = vtos %v1910
        %v1912 = vstv %s1911
        %v1914 = vmul.f32 %v1884, %v1912
        %1916 = vrot.lane.b32.xlu0 %v1914, 119
        %v1917 = vpop.permute.xlu0 %1916
        %v1919 = vadd.f32 %v1909, %v1917
        %1920 = vrot.lane.b32.xlu0 %v911, 127
        %v1921 = vpop.permute.xlu0 %1920
        %s1922 = vtos %v1921
        %v1923 = vstv %s1922
        %v1925 = vmul.f32 %v1884, %v1923
        %1926 = vrot.lane.b32.xlu0 %v1890, 127
        %v1927 = vpop.permute.xlu0 %1926
        %s1928 = vtos %v1927
        %v1929 = vstv %s1928
        %v1931 = vmul.f32 %v1884, %v1929
        %1933 = vrot.lane.b32.xlu0 %v1931, 125
        %v1934 = vpop.permute.xlu0 %1933
        %v1936 = vadd.f32 %v1925, %v1934
        %1937 = vrot.lane.b32.xlu0 %v1900, 127
        %v1938 = vpop.permute.xlu0 %1937
        %s1939 = vtos %v1938
        %v1940 = vstv %s1939
        %v1942 = vmul.f32 %v1884, %v1940
        %1944 = vrot.lane.b32.xlu0 %v1942, 122
        %v1945 = vpop.permute.xlu0 %1944
        %v1947 = vadd.f32 %v1936, %v1945
        %1948 = vrot.lane.b32.xlu0 %v1910, 127
        %v1949 = vpop.permute.xlu0 %1948
        %s1950 = vtos %v1949
        %v1951 = vstv %s1950
        %v1953 = vmul.f32 %v1884, %v1951
        %1955 = vrot.lane.b32.xlu0 %v1953, 119
        %v1956 = vpop.permute.xlu0 %1955
        %v1958 = vadd.f32 %v1947, %v1956
        %1959 = vrot.lane.b32.xlu0 %v911, 126
        %v1960 = vpop.permute.xlu0 %1959
        %s1961 = vtos %v1960
        %v1962 = vstv %s1961
        %v1964 = vmul.f32 %v1884, %v1962
        %1965 = vrot.lane.b32.xlu0 %v1890, 126
        %v1966 = vpop.permute.xlu0 %1965
        %s1967 = vtos %v1966
        %v1968 = vstv %s1967
        %v1970 = vmul.f32 %v1884, %v1968
        %1972 = vrot.lane.b32.xlu0 %v1970, 125
        %v1973 = vpop.permute.xlu0 %1972
        %v1975 = vadd.f32 %v1964, %v1973
        %1976 = vrot.lane.b32.xlu0 %v1900, 126
        %v1977 = vpop.permute.xlu0 %1976
        %s1978 = vtos %v1977
        %v1979 = vstv %s1978
        %v1981 = vmul.f32 %v1884, %v1979
        %1983 = vrot.lane.b32.xlu0 %v1981, 122
        %v1984 = vpop.permute.xlu0 %1983
        %v1986 = vadd.f32 %v1975, %v1984
        %1987 = vrot.lane.b32.xlu0 %v1910, 126
        %v1988 = vpop.permute.xlu0 %1987
        %s1989 = vtos %v1988
        %v1990 = vstv %s1989
        %v1992 = vmul.f32 %v1884, %v1990
        %1994 = vrot.lane.b32.xlu0 %v1992, 119
        %v1995 = vpop.permute.xlu0 %1994
        %v1997 = vadd.f32 %v1986, %v1995
        %1998 = vrot.lane.b32.xlu0 %v911, 125
        %v1999 = vpop.permute.xlu0 %1998
        %s2000 = vtos %v1999
        %v2001 = vstv %s2000
        %v2003 = vmul.f32 %v1884, %v2001
        %2004 = vrot.lane.b32.xlu0 %v1890, 125
        %v2005 = vpop.permute.xlu0 %2004
        %s2006 = vtos %v2005
        %v2007 = vstv %s2006
        %v2009 = vmul.f32 %v1884, %v2007
        %2011 = vrot.lane.b32.xlu0 %v2009, 125
        %v2012 = vpop.permute.xlu0 %2011
        %v2014 = vadd.f32 %v2003, %v2012
        %2015 = vrot.lane.b32.xlu0 %v1900, 125
        %v2016 = vpop.permute.xlu0 %2015
        %s2017 = vtos %v2016
        %v2018 = vstv %s2017
        %v2020 = vmul.f32 %v1884, %v2018
        %2022 = vrot.lane.b32.xlu0 %v2020, 122
        %v2023 = vpop.permute.xlu0 %2022
        %v2025 = vadd.f32 %v2014, %v2023
        %2026 = vrot.lane.b32.xlu0 %v1910, 125
        %v2027 = vpop.permute.xlu0 %2026
        %s2028 = vtos %v2027
        %v2029 = vstv %s2028
        %v2031 = vmul.f32 %v1884, %v2029
        %2033 = vrot.lane.b32.xlu0 %v2031, 119
        %v2034 = vpop.permute.xlu0 %2033
        %v2036 = vadd.f32 %v2025, %v2034
        %2038 = vrot.lane.b32.xlu0 %v1958, 3
        %v2039 = vpop.permute.xlu0 %2038
        %2042 = vrot.lane.b32.xlu0 %v1997, 6
        %v2043 = vpop.permute.xlu0 %2042
        %2046 = vrot.lane.b32.xlu0 %v2036, 9
        %v2047 = vpop.permute.xlu0 %2046
        %v2049 = vsel %vm942, %v1919, %v2039
        %v2050 = vsel %vm1091, %v2049, %v2043
        %v2051 = vsel %vm1097, %v2050, %v2047
        %v2052 = vsel %vm1103, %v1369, 0.0
        %2053 = vadd.xlane.f32.xlu0 %v2052
        %v2054 = vpop.xlane.xlu0 %2053
        %v2055 = vmul.f32 %v2054, %v1107
        %v2056 = vsub.f32 %v1369, %v2055
        %v2057 = vmul.f32 %v2056, %v2056
        %v2058 = vsel %vm1103, %v2057, 0.0
        %2059 = vadd.xlane.f32.xlu0 %v2058
        %v2060 = vpop.xlane.xlu0 %2059
        %v2061 = vmul.f32 %v2060, %v1107
        %v2062 = vadd.f32 %v2061, 1e-05
        %v2063 = vrsqrt.pop %v2062
        %v2064 = vmul.f32 %v2056, %v2063
        %v2065 = vlaneseq
        %v2066 = vshrl.u32 %v2065, 7
        %v2067 = vsub.s32 3, %v2066
        %v2068 = vrot.slane %v912, %v2067
        %v2069 = vmul.f32 %v2064, %v2068
        %v2070 = vlaneseq
        %v2071 = vshrl.u32 %v2070, 7
        %v2072 = vsub.s32 4, %v2071
        %v2073 = vrot.slane %v912, %v2072
        %v2074 = vadd.f32 %v2069, %v2073
        %v2075 = vlaneseq
        %v2076 = vshrl.u32 %v2075, 7
        %v2077 = vsub.s32 2, %v2076
        %v2078 = vrot.slane %v914, %v2077
        %v2080 = vsel %vm1103, %v2074, 0
        %2082 = vmatprep.subr.mxu0 0.0
        %2083 = vmatpush1.msra.mxu0 %v901
        %2084 = vmatprep.subr.mxu0 0.0
        %2085 = vmatpush1.msra.mxu0 %v902
        %2086 = vmatprep.subr.mxu0 0.0
        %2087 = vmatpush1.msra.mxu0 %v903
        %2088 = vmatprep.subr.mxu0 0.0
        %2089 = vmatpush1.msra.mxu0 %v904
        %2090 = vmatprep.subr.mxu0 0.0
        %2091 = vmatpush1.msra.mxu0 0.0
        %2092 = vmatprep.subr.mxu0 0.0
        %2093 = vmatpush1.msra.mxu0 0.0
        %2094 = vmatprep.subr.mxu0 0.0
        %2095 = vmatpush1.msra.mxu0 0.0
        %2096 = vmatprep.subr.mxu0 0.0
        %2097 = vmatpush1.msra.mxu0 0.0
        %2098 = vmatprep.subr.mxu0 0.0
        %2099 = vmatpush1.msra.mxu0 0.0
        %2100 = vmatprep.subr.mxu0 0.0
        %2101 = vmatpush1.msra.mxu0 0.0
        %2102 = vmatprep.subr.mxu0 0.0
        %2103 = vmatpush1.msra.mxu0 0.0
        %2104 = vmatprep.subr.mxu0 0.0
        %2105 = vmatpush1.msra.mxu0 0.0
        %2106 = vmatprep.subr.mxu0 0.0
        %2107 = vmatpush1.msra.mxu0 0.0
        %2108 = vmatprep.subr.mxu0 0.0
        %2109 = vmatpush1.msra.mxu0 0.0
        %2110 = vmatprep.subr.mxu0 0.0
        %2111 = vmatpush1.msra.mxu0 0.0
        %2112 = vmatprep.subr.mxu0 0.0
        %2113 = vmatpush1.msra.mxu0 0.0
        %2114 = vmatprep.subr.mxu0 0.0
        %2115 = vmatpush1.msra.mxu0 0.0
        %2116 = vmatprep.subr.mxu0 0.0
        %2117 = vmatpush1.msra.mxu0 0.0
        %2118 = vmatprep.subr.mxu0 0.0
        %2119 = vmatpush1.msra.mxu0 0.0
        %2120 = vmatprep.subr.mxu0 0.0
        %2121 = vmatpush1.msra.mxu0 0.0
        %2122 = vmatprep.subr.mxu0 0.0
        %2123 = vmatpush1.msra.mxu0 0.0
        %2124 = vmatprep.subr.mxu0 0.0
        %2125 = vmatpush1.msra.mxu0 0.0
        %2126 = vmatprep.subr.mxu0 0.0
        %2127 = vmatpush1.msra.mxu0 0.0
        %2128 = vmatprep.subr.mxu0 0.0
        %2129 = vmatpush1.msra.mxu0 0.0
        %2130 = vmatprep.subr.mxu0 0.0
        %2131 = vmatpush1.msra.mxu0 0.0
        %2132 = vmatprep.subr.mxu0 0.0
        %2133 = vmatpush1.msra.mxu0 0.0
        %2134 = vmatprep.subr.mxu0 0.0
        %2135 = vmatpush1.msra.mxu0 0.0
        %2136 = vmatprep.subr.mxu0 0.0
        %2137 = vmatpush1.msra.mxu0 0.0
        %2138 = vmatprep.subr.mxu0 0.0
        %2139 = vmatpush1.msra.mxu0 0.0
        %2140 = vmatprep.subr.mxu0 0.0
        %2141 = vmatpush1.msra.mxu0 0.0
        %2142 = vmatprep.subr.mxu0 0.0
        %2143 = vmatpush1.msra.mxu0 0.0
        %2144 = vmatprep.subr.mxu0 0.0
        %2145 = vmatpush1.msra.mxu0 0.0
        %2146 = vmatprep.mubr.f32.mxu0 0.0
        %2147 = vmatmul.mubr.f32.gmra.mrb[0].mxu0 %v2080
        %v2148 = vpop.f32.mrb[0].mxu0
        %v2149 = vadd.f32 %v2078, %v2148
        %v2150 = vpop.f32.mrb[0].mxu0
        %2151 = vdwg.mxu0
        %v2152 = vlaneseq
        %v2153 = vshrl.u32 %v2152, 7
        %v2154 = vsub.s32 0, %v2153
        %v2155 = vrot.slane %v915, %v2154
        %v2157 = vsel %vm1095, %v2149, 0
        %2159 = vmatprep.subr.mxu0 0.0
        %2160 = vmatpush1.msra.mxu0 %v905
        %2161 = vmatprep.subr.mxu0 0.0
        %2162 = vmatpush1.msra.mxu0 0.0
        %2163 = vmatprep.subr.mxu0 0.0
        %2164 = vmatpush1.msra.mxu0 0.0
        %2165 = vmatprep.subr.mxu0 0.0
        %2166 = vmatpush1.msra.mxu0 0.0
        %2167 = vmatprep.subr.mxu0 0.0
        %2168 = vmatpush1.msra.mxu0 0.0
        %2169 = vmatprep.subr.mxu0 0.0
        %2170 = vmatpush1.msra.mxu0 0.0
        %2171 = vmatprep.subr.mxu0 0.0
        %2172 = vmatpush1.msra.mxu0 0.0
        %2173 = vmatprep.subr.mxu0 0.0
        %2174 = vmatpush1.msra.mxu0 0.0
        %2175 = vmatprep.subr.mxu0 0.0
        %2176 = vmatpush1.msra.mxu0 0.0
        %2177 = vmatprep.subr.mxu0 0.0
        %2178 = vmatpush1.msra.mxu0 0.0
        %2179 = vmatprep.subr.mxu0 0.0
        %2180 = vmatpush1.msra.mxu0 0.0
        %2181 = vmatprep.subr.mxu0 0.0
        %2182 = vmatpush1.msra.mxu0 0.0
        %2183 = vmatprep.subr.mxu0 0.0
        %2184 = vmatpush1.msra.mxu0 0.0
        %2185 = vmatprep.subr.mxu0 0.0
        %2186 = vmatpush1.msra.mxu0 0.0
        %2187 = vmatprep.subr.mxu0 0.0
        %2188 = vmatpush1.msra.mxu0 0.0
        %2189 = vmatprep.subr.mxu0 0.0
        %2190 = vmatpush1.msra.mxu0 0.0
        %2191 = vmatprep.subr.mxu0 0.0
        %2192 = vmatpush1.msra.mxu0 0.0
        %2193 = vmatprep.subr.mxu0 0.0
        %2194 = vmatpush1.msra.mxu0 0.0
        %2195 = vmatprep.subr.mxu0 0.0
        %2196 = vmatpush1.msra.mxu0 0.0
        %2197 = vmatprep.subr.mxu0 0.0
        %2198 = vmatpush1.msra.mxu0 0.0
        %2199 = vmatprep.subr.mxu0 0.0
        %2200 = vmatpush1.msra.mxu0 0.0
        %2201 = vmatprep.subr.mxu0 0.0
        %2202 = vmatpush1.msra.mxu0 0.0
        %2203 = vmatprep.subr.mxu0 0.0
        %2204 = vmatpush1.msra.mxu0 0.0
        %2205 = vmatprep.subr.mxu0 0.0
        %2206 = vmatpush1.msra.mxu0 0.0
        %2207 = vmatprep.subr.mxu0 0.0
        %2208 = vmatpush1.msra.mxu0 0.0
        %2209 = vmatprep.subr.mxu0 0.0
        %2210 = vmatpush1.msra.mxu0 0.0
        %2211 = vmatprep.subr.mxu0 0.0
        %2212 = vmatpush1.msra.mxu0 0.0
        %2213 = vmatprep.subr.mxu0 0.0
        %2214 = vmatpush1.msra.mxu0 0.0
        %2215 = vmatprep.subr.mxu0 0.0
        %2216 = vmatpush1.msra.mxu0 0.0
        %2217 = vmatprep.subr.mxu0 0.0
        %2218 = vmatpush1.msra.mxu0 0.0
        %2219 = vmatprep.subr.mxu0 0.0
        %2220 = vmatpush1.msra.mxu0 0.0
        %2221 = vmatprep.subr.mxu0 0.0
        %2222 = vmatpush1.msra.mxu0 0.0
        %2223 = vmatprep.mubr.f32.mxu0 0.0
        %2224 = vmatmul.mubr.f32.gmra.mrb[0].mxu0 %v2157
        %v2225 = vpop.f32.mrb[0].mxu0
        %v2226 = vadd.f32 %v2155, %v2225
        %v2227 = vpop.f32.mrb[0].mxu0
        %2228 = vdwg.mxu0
        %2229 = vmatprep.subr.mxu0 0.0
        %2230 = vmatpush1.msra.mxu0 %v906
        %2231 = vmatprep.subr.mxu0 0.0
        %2232 = vmatpush1.msra.mxu0 0.0
        %2233 = vmatprep.subr.mxu0 0.0
        %2234 = vmatpush1.msra.mxu0 0.0
        %2235 = vmatprep.subr.mxu0 0.0
        %2236 = vmatpush1.msra.mxu0 0.0
        %2237 = vmatprep.subr.mxu0 0.0
        %2238 = vmatpush1.msra.mxu0 0.0
        %2239 = vmatprep.subr.mxu0 0.0
        %2240 = vmatpush1.msra.mxu0 0.0
        %2241 = vmatprep.subr.mxu0 0.0
        %2242 = vmatpush1.msra.mxu0 0.0
        %2243 = vmatprep.subr.mxu0 0.0
        %2244 = vmatpush1.msra.mxu0 0.0
        %2245 = vmatprep.subr.mxu0 0.0
        %2246 = vmatpush1.msra.mxu0 0.0
        %2247 = vmatprep.subr.mxu0 0.0
        %2248 = vmatpush1.msra.mxu0 0.0
        %2249 = vmatprep.subr.mxu0 0.0
        %2250 = vmatpush1.msra.mxu0 0.0
        %2251 = vmatprep.subr.mxu0 0.0
        %2252 = vmatpush1.msra.mxu0 0.0
        %2253 = vmatprep.subr.mxu0 0.0
        %2254 = vmatpush1.msra.mxu0 0.0
        %2255 = vmatprep.subr.mxu0 0.0
        %2256 = vmatpush1.msra.mxu0 0.0
        %2257 = vmatprep.subr.mxu0 0.0
        %2258 = vmatpush1.msra.mxu0 0.0
        %2259 = vmatprep.subr.mxu0 0.0
        %2260 = vmatpush1.msra.mxu0 0.0
        %2261 = vmatprep.subr.mxu0 0.0
        %2262 = vmatpush1.msra.mxu0 0.0
        %2263 = vmatprep.subr.mxu0 0.0
        %2264 = vmatpush1.msra.mxu0 0.0
        %2265 = vmatprep.subr.mxu0 0.0
        %2266 = vmatpush1.msra.mxu0 0.0
        %2267 = vmatprep.subr.mxu0 0.0
        %2268 = vmatpush1.msra.mxu0 0.0
        %2269 = vmatprep.subr.mxu0 0.0
        %2270 = vmatpush1.msra.mxu0 0.0
        %2271 = vmatprep.subr.mxu0 0.0
        %2272 = vmatpush1.msra.mxu0 0.0
        %2273 = vmatprep.subr.mxu0 0.0
        %2274 = vmatpush1.msra.mxu0 0.0
        %2275 = vmatprep.subr.mxu0 0.0
        %2276 = vmatpush1.msra.mxu0 0.0
        %2277 = vmatprep.subr.mxu0 0.0
        %2278 = vmatpush1.msra.mxu0 0.0
        %2279 = vmatprep.subr.mxu0 0.0
        %2280 = vmatpush1.msra.mxu0 0.0
        %2281 = vmatprep.subr.mxu0 0.0
        %2282 = vmatpush1.msra.mxu0 0.0
        %2283 = vmatprep.subr.mxu0 0.0
        %2284 = vmatpush1.msra.mxu0 0.0
        %2285 = vmatprep.subr.mxu0 0.0
        %2286 = vmatpush1.msra.mxu0 0.0
        %2287 = vmatprep.subr.mxu0 0.0
        %2288 = vmatpush1.msra.mxu0 0.0
        %2289 = vmatprep.subr.mxu0 0.0
        %2290 = vmatpush1.msra.mxu0 0.0
        %2291 = vmatprep.subr.mxu0 0.0
        %2292 = vmatpush1.msra.mxu0 0.0
        %2293 = vmatprep.mubr.f32.mxu0 0.0
        %2294 = vmatmul.mubr.f32.gmra.mrb[0].mxu0 %v2157
        %v2295 = vpop.f32.mrb[0].mxu0
        %v2296 = vadd.f32 0.0, %v2295
        %v2297 = vpop.f32.mrb[0].mxu0
        %2298 = vdwg.mxu0
        %v2299 = vlaneseq
        %v2300 = vshrl.u32 %v2299, 7
        %v2301 = vsub.s32 5, %v2300
        %v2302 = vrot.slane %v912, %v2301
        %v2303 = vmul.f32 %v2064, %v2302
        %v2304 = vlaneseq
        %v2305 = vshrl.u32 %v2304, 7
        %v2306 = vsub.s32 6, %v2305
        %v2307 = vrot.slane %v912, %v2306
        %v2308 = vadd.f32 %v2303, %v2307
        %v2309 = vlaneseq
        %v2310 = vshrl.u32 %v2309, 7
        %v2311 = vsub.s32 7, %v2310
        %v2312 = vrot.slane %v912, %v2311
        %v2314 = vsel %vm1103, %v2308, 0
        %2316 = vmatprep.subr.mxu0 0.0
        %2317 = vmatpush1.msra.mxu0 %v907
        %2318 = vmatprep.subr.mxu0 0.0
        %2319 = vmatpush1.msra.mxu0 %v908
        %2320 = vmatprep.subr.mxu0 0.0
        %2321 = vmatpush1.msra.mxu0 %v909
        %2322 = vmatprep.subr.mxu0 0.0
        %2323 = vmatpush1.msra.mxu0 %v910
        %2324 = vmatprep.subr.mxu0 0.0
        %2325 = vmatpush1.msra.mxu0 0.0
        %2326 = vmatprep.subr.mxu0 0.0
        %2327 = vmatpush1.msra.mxu0 0.0
        %2328 = vmatprep.subr.mxu0 0.0
        %2329 = vmatpush1.msra.mxu0 0.0
        %2330 = vmatprep.subr.mxu0 0.0
        %2331 = vmatpush1.msra.mxu0 0.0
        %2332 = vmatprep.subr.mxu0 0.0
        %2333 = vmatpush1.msra.mxu0 0.0
        %2334 = vmatprep.subr.mxu0 0.0
        %2335 = vmatpush1.msra.mxu0 0.0
        %2336 = vmatprep.subr.mxu0 0.0
        %2337 = vmatpush1.msra.mxu0 0.0
        %2338 = vmatprep.subr.mxu0 0.0
        %2339 = vmatpush1.msra.mxu0 0.0
        %2340 = vmatprep.subr.mxu0 0.0
        %2341 = vmatpush1.msra.mxu0 0.0
        %2342 = vmatprep.subr.mxu0 0.0
        %2343 = vmatpush1.msra.mxu0 0.0
        %2344 = vmatprep.subr.mxu0 0.0
        %2345 = vmatpush1.msra.mxu0 0.0
        %2346 = vmatprep.subr.mxu0 0.0
        %2347 = vmatpush1.msra.mxu0 0.0
        %2348 = vmatprep.subr.mxu0 0.0
        %2349 = vmatpush1.msra.mxu0 0.0
        %2350 = vmatprep.subr.mxu0 0.0
        %2351 = vmatpush1.msra.mxu0 0.0
        %2352 = vmatprep.subr.mxu0 0.0
        %2353 = vmatpush1.msra.mxu0 0.0
        %2354 = vmatprep.subr.mxu0 0.0
        %2355 = vmatpush1.msra.mxu0 0.0
        %2356 = vmatprep.subr.mxu0 0.0
        %2357 = vmatpush1.msra.mxu0 0.0
        %2358 = vmatprep.subr.mxu0 0.0
        %2359 = vmatpush1.msra.mxu0 0.0
        %2360 = vmatprep.subr.mxu0 0.0
        %2361 = vmatpush1.msra.mxu0 0.0
        %2362 = vmatprep.subr.mxu0 0.0
        %2363 = vmatpush1.msra.mxu0 0.0
        %2364 = vmatprep.subr.mxu0 0.0
        %2365 = vmatpush1.msra.mxu0 0.0
        %2366 = vmatprep.subr.mxu0 0.0
        %2367 = vmatpush1.msra.mxu0 0.0
        %2368 = vmatprep.subr.mxu0 0.0
        %2369 = vmatpush1.msra.mxu0 0.0
        %2370 = vmatprep.subr.mxu0 0.0
        %2371 = vmatpush1.msra.mxu0 0.0
        %2372 = vmatprep.subr.mxu0 0.0
        %2373 = vmatpush1.msra.mxu0 0.0
        %2374 = vmatprep.subr.mxu0 0.0
        %2375 = vmatpush1.msra.mxu0 0.0
        %2376 = vmatprep.subr.mxu0 0.0
        %2377 = vmatpush1.msra.mxu0 0.0
        %2378 = vmatprep.subr.mxu0 0.0
        %2379 = vmatpush1.msra.mxu0 0.0
        %2380 = vmatprep.mubr.f32.mxu0 0.0
        %2381 = vmatmul.mubr.f32.gmra.mrb[0].mxu0 %v2314
        %v2382 = vpop.f32.mrb[0].mxu0
        %v2383 = vadd.f32 %v2312, %v2382
        %v2384 = vpop.f32.mrb[0].mxu0
        %2385 = vdwg.mxu0
        %2386 = vst.msk [vmem:[%s818] sm:$0xff] %vm1103, %v1369
        %2387 = vst.msk [vmem:[%s825] sm:$0xff] %vm921, %v1676
        %2388 = vst.msk [vmem:[%s832] sm:$0xff] %vm921, %v1879
        %2389 = vst.msk [vmem:[%s839] sm:$0xff] %vm921, %v2051
        %2390 = vst.msk [vmem:[%s846] sm:$0xff] %vm921, %v2226
        %2391 = vst.msk [vmem:[%s853] sm:$0xff] %vm921, %v2296
        %2392 = vst.msk [vmem:[%s860] sm:$0xff] %vm1103, %v2383
        %s2393 = sand.u32 %s493, 1
        %s2394 = scalar_lea.sflag [#allocation3], %s2393
        %s2395 = sand.u32 %s493, 1
        %s2396 = smul.addr %s2395, 8
        %s2397 = scalar_lea.vmem [#allocation2], %s2396
        %s2398 = sand.u32 %s50, 1
        %s2399 = scalar_lea.sflag [#allocation5], %s2398
        %s2400 = sand.u32 %s519, 1
        %s2401 = smul.addr %s2400, 8
        %s2402 = scalar_lea.vmem [#allocation4], %s2401
        %s2403 = sand.u32 %s50, 1
        %s2404 = scalar_lea.sflag [#allocation5], %s2403
        %s2405 = sand.u32 %s545, 1
        %s2406 = smul.addr %s2405, 8
        %s2407 = scalar_lea.vmem [#allocation6], %s2406
        %s2408 = sand.u32 %s50, 1
        %s2409 = scalar_lea.sflag [#allocation8], %s2408
        %s2410 = sand.u32 %s571, 1
        %s2411 = smul.addr %s2410, 8
        %s2412 = scalar_lea.vmem [#allocation7], %s2411
        %s2413 = sand.u32 %s50, 1
        %s2414 = scalar_lea.sflag [#allocation8], %s2413
        %s2415 = sand.u32 %s597, 1
        %s2416 = smul.addr %s2415, 8
        %s2417 = scalar_lea.vmem [#allocation9], %s2416
        %s2418 = sand.u32 %s50, 1
        %s2419 = scalar_lea.sflag [#allocation11], %s2418
        %s2420 = sand.u32 %s623, 1
        %s2421 = smul.addr %s2420, 8
        %s2422 = scalar_lea.vmem [#allocation10], %s2421
        %s2423 = sand.u32 %s50, 1
        %s2424 = scalar_lea.sflag [#allocation11], %s2423
        %s2425 = sand.u32 %s649, 1
        %s2426 = smul.addr %s2425, 8
        %s2427 = scalar_lea.vmem [#allocation12], %s2426
        // Predicated region
        $region101: #{tpu_custom_call.1} parent=99 // pred_check
          %p2428 = pneg %p503
        $region102: #{tpu_custom_call.1} parent=99 // pred_check_branch
          %2430 = sbr.rel (%p2428) target = $region104
        $region103: #{tpu_custom_call.1} parent=99 // pred_region
          %s2432 = ssub.s32 128, 128
          %2433 = vsyncadd %s2394, %s2432
          %s2434 = smul.addr %s50, 128
          %s2435 = scalar_lea.hbm %s20, %s2434
          %s2437 = sshll.u32 %s2397, 4
          %s2438 = int_to_ptr.vmem [resolvable:$true] %s2437
          %2440 = dma.vmem_to_hbm [thread:$0]  %s2438, 128, %s2435, %s2394
        $region104: #{tpu_custom_call.1} parent=99 // pred_fallthru
          _
        // Predicated region
        $region105: #{tpu_custom_call.1} parent=99 // pred_check
          %p2441 = pneg %p529
        $region106: #{tpu_custom_call.1} parent=99 // pred_check_branch
          %2443 = sbr.rel (%p2441) target = $region108
        $region107: #{tpu_custom_call.1} parent=99 // pred_region
          %s2445 = ssub.s32 128, 128
          %2446 = vsyncadd %s2399, %s2445
          %s2447 = smul.addr %s50, 128
          %s2448 = scalar_lea.hbm %s21, %s2447
          %s2450 = sshll.u32 %s2402, 4
          %s2451 = int_to_ptr.vmem [resolvable:$true] %s2450
          %2453 = dma.vmem_to_hbm [thread:$0]  %s2451, 128, %s2448, %s2399
        $region108: #{tpu_custom_call.1} parent=99 // pred_fallthru
          _
        // Predicated region
        $region109: #{tpu_custom_call.1} parent=99 // pred_check
          %p2454 = pneg %p555
        $region110: #{tpu_custom_call.1} parent=99 // pred_check_branch
          %2456 = sbr.rel (%p2454) target = $region112
        $region111: #{tpu_custom_call.1} parent=99 // pred_region
          %s2458 = ssub.s32 128, 128
          %2459 = vsyncadd %s2404, %s2458
          %s2460 = smul.addr %s50, 128
          %s2461 = scalar_lea.hbm %s22, %s2460
          %s2463 = sshll.u32 %s2407, 4
          %s2464 = int_to_ptr.vmem [resolvable:$true] %s2463
          %2466 = dma.vmem_to_hbm [thread:$0]  %s2464, 128, %s2461, %s2404
        $region112: #{tpu_custom_call.1} parent=99 // pred_fallthru
          _
        // Predicated region
        $region113: #{tpu_custom_call.1} parent=99 // pred_check
          %p2467 = pneg %p581
        $region114: #{tpu_custom_call.1} parent=99 // pred_check_branch
          %2469 = sbr.rel (%p2467) target = $region116
        $region115: #{tpu_custom_call.1} parent=99 // pred_region
          %s2471 = ssub.s32 128, 128
          %2472 = vsyncadd %s2409, %s2471
          %s2473 = smul.addr %s50, 128
          %s2474 = scalar_lea.hbm %s23, %s2473
          %s2476 = sshll.u32 %s2412, 4
          %s2477 = int_to_ptr.vmem [resolvable:$true] %s2476
          %2479 = dma.vmem_to_hbm [thread:$0]  %s2477, 128, %s2474, %s2409
        $region116: #{tpu_custom_call.1} parent=99 // pred_fallthru
          _
        // Predicated region
        $region117: #{tpu_custom_call.1} parent=99 // pred_check
          %p2480 = pneg %p607
        $region118: #{tpu_custom_call.1} parent=99 // pred_check_branch
          %2482 = sbr.rel (%p2480) target = $region120
        $region119: #{tpu_custom_call.1} parent=99 // pred_region
          %s2484 = ssub.s32 128, 128
          %2485 = vsyncadd %s2414, %s2484
          %s2486 = smul.addr %s50, 128
          %s2487 = scalar_lea.hbm %s24, %s2486
          %s2489 = sshll.u32 %s2417, 4
          %s2490 = int_to_ptr.vmem [resolvable:$true] %s2489
          %2492 = dma.vmem_to_hbm [thread:$0]  %s2490, 128, %s2487, %s2414
        $region120: #{tpu_custom_call.1} parent=99 // pred_fallthru
          _
        // Predicated region
        $region121: #{tpu_custom_call.1} parent=99 // pred_check
          %p2493 = pneg %p633
        $region122: #{tpu_custom_call.1} parent=99 // pred_check_branch
          %2495 = sbr.rel (%p2493) target = $region124
        $region123: #{tpu_custom_call.1} parent=99 // pred_region
          %s2497 = ssub.s32 128, 128
          %2498 = vsyncadd %s2419, %s2497
          %s2499 = smul.addr %s50, 128
          %s2500 = scalar_lea.hbm %s25, %s2499
          %s2502 = sshll.u32 %s2422, 4
          %s2503 = int_to_ptr.vmem [resolvable:$true] %s2502
          %2505 = dma.vmem_to_hbm [thread:$0]  %s2503, 128, %s2500, %s2419
        $region124: #{tpu_custom_call.1} parent=99 // pred_fallthru
          _
        // Predicated region
        $region125: #{tpu_custom_call.1} parent=99 // pred_check
          %p2506 = pneg %p659
        $region126: #{tpu_custom_call.1} parent=99 // pred_check_branch
          %2508 = sbr.rel (%p2506) target = $region128
        $region127: #{tpu_custom_call.1} parent=99 // pred_region
          %s2510 = ssub.s32 128, 128
          %2511 = vsyncadd %s2424, %s2510
          %s2512 = smul.addr %s50, 128
          %s2513 = scalar_lea.hbm %s26, %s2512
          %s2515 = sshll.u32 %s2427, 4
          %s2516 = int_to_ptr.vmem [resolvable:$true] %s2515
          %2518 = dma.vmem_to_hbm [thread:$0]  %s2516, 128, %s2513, %s2424
        $region128: #{tpu_custom_call.1} parent=99 // pred_fallthru
          _
      $region100: #{tpu_custom_call.1} parent=5 // pred_fallthru
        _
      %p2519 = scmp.le.s32.totalorder 2, %s45
      // Predicated region
      $region129: #{tpu_custom_call.1} parent=5 // pred_check
        %p2520 = pneg %p2519
      $region130: #{tpu_custom_call.1} parent=5 // pred_check_branch
        %2522 = sbr.rel (%p2520) target = $region132
      $region131: #{tpu_custom_call.1} parent=5 // pred_region
        %s2523 = ssub.s32 %s45, 2
        // Predicated region
        $region133: #{tpu_custom_call.1} parent=131 // pred_check
          %p2524 = pneg %p509
        $region134: #{tpu_custom_call.1} parent=131 // pred_check_branch
          %2526 = sbr.rel (%p2524) target = $region136
        $region135: #{tpu_custom_call.1} parent=131 // pred_region
          %s2527 = sand.u32 %s494, 1
          %s2528 = scalar_lea.sflag [#allocation3], %s2527
          %s2529 = sand.u32 %s494, 1
          %s2530 = smul.addr %s2529, 8
          %s2531 = scalar_lea.vmem [#allocation2], %s2530
          %2532 = dma.done %s2528, 128
        $region136: #{tpu_custom_call.1} parent=131 // pred_fallthru
          _
        // Predicated region
        $region137: #{tpu_custom_call.1} parent=131 // pred_check
          %p2533 = pneg %p535
        $region138: #{tpu_custom_call.1} parent=131 // pred_check_branch
          %2535 = sbr.rel (%p2533) target = $region140
        $region139: #{tpu_custom_call.1} parent=131 // pred_region
          %s2536 = sand.u32 %s51, 1
          %s2537 = scalar_lea.sflag [#allocation5], %s2536
          %s2538 = sand.u32 %s520, 1
          %s2539 = smul.addr %s2538, 8
          %s2540 = scalar_lea.vmem [#allocation4], %s2539
          %2541 = dma.done %s2537, 128
        $region140: #{tpu_custom_call.1} parent=131 // pred_fallthru
          _
        // Predicated region
        $region141: #{tpu_custom_call.1} parent=131 // pred_check
          %p2542 = pneg %p561
        $region142: #{tpu_custom_call.1} parent=131 // pred_check_branch
          %2544 = sbr.rel (%p2542) target = $region144
        $region143: #{tpu_custom_call.1} parent=131 // pred_region
          %s2545 = sand.u32 %s51, 1
          %s2546 = scalar_lea.sflag [#allocation5], %s2545
          %s2547 = sand.u32 %s546, 1
          %s2548 = smul.addr %s2547, 8
          %s2549 = scalar_lea.vmem [#allocation6], %s2548
          %2550 = dma.done %s2546, 128
        $region144: #{tpu_custom_call.1} parent=131 // pred_fallthru
          _
        // Predicated region
        $region145: #{tpu_custom_call.1} parent=131 // pred_check
          %p2551 = pneg %p587
        $region146: #{tpu_custom_call.1} parent=131 // pred_check_branch
          %2553 = sbr.rel (%p2551) target = $region148
        $region147: #{tpu_custom_call.1} parent=131 // pred_region
          %s2554 = sand.u32 %s51, 1
          %s2555 = scalar_lea.sflag [#allocation8], %s2554
          %s2556 = sand.u32 %s572, 1
          %s2557 = smul.addr %s2556, 8
          %s2558 = scalar_lea.vmem [#allocation7], %s2557
          %2559 = dma.done %s2555, 128
        $region148: #{tpu_custom_call.1} parent=131 // pred_fallthru
          _
        // Predicated region
        $region149: #{tpu_custom_call.1} parent=131 // pred_check
          %p2560 = pneg %p613
        $region150: #{tpu_custom_call.1} parent=131 // pred_check_branch
          %2562 = sbr.rel (%p2560) target = $region152
        $region151: #{tpu_custom_call.1} parent=131 // pred_region
          %s2563 = sand.u32 %s51, 1
          %s2564 = scalar_lea.sflag [#allocation8], %s2563
          %s2565 = sand.u32 %s598, 1
          %s2566 = smul.addr %s2565, 8
          %s2567 = scalar_lea.vmem [#allocation9], %s2566
          %2568 = dma.done %s2564, 128
        $region152: #{tpu_custom_call.1} parent=131 // pred_fallthru
          _
        // Predicated region
        $region153: #{tpu_custom_call.1} parent=131 // pred_check
          %p2569 = pneg %p639
        $region154: #{tpu_custom_call.1} parent=131 // pred_check_branch
          %2571 = sbr.rel (%p2569) target = $region156
        $region155: #{tpu_custom_call.1} parent=131 // pred_region
          %s2572 = sand.u32 %s51, 1
          %s2573 = scalar_lea.sflag [#allocation11], %s2572
          %s2574 = sand.u32 %s624, 1
          %s2575 = smul.addr %s2574, 8
          %s2576 = scalar_lea.vmem [#allocation10], %s2575
          %2577 = dma.done %s2573, 128
        $region156: #{tpu_custom_call.1} parent=131 // pred_fallthru
          _
        // Predicated region
        $region157: #{tpu_custom_call.1} parent=131 // pred_check
          %p2578 = pneg %p665
        $region158: #{tpu_custom_call.1} parent=131 // pred_check_branch
          %2580 = sbr.rel (%p2578) target = $region160
        $region159: #{tpu_custom_call.1} parent=131 // pred_region
          %s2581 = sand.u32 %s51, 1
          %s2582 = scalar_lea.sflag [#allocation11], %s2581
          %s2583 = sand.u32 %s650, 1
          %s2584 = smul.addr %s2583, 8
          %s2585 = scalar_lea.vmem [#allocation12], %s2584
          %2586 = dma.done %s2582, 128
        $region160: #{tpu_custom_call.1} parent=131 // pred_fallthru
          _
      $region132: #{tpu_custom_call.1} parent=5 // pred_fallthru
        _
    $region6: #{tpu_custom_call.1} parent=1 // loop_footer
      %s49 = sadd.s32 1, %s45
    $region7: #{tpu_custom_call.1} parent=1 // loop_footer_branch
      %44 = sbr.rel target = $region3
    $region8: #{tpu_custom_call.1} parent=1 // loop_exit
      _
    %2587 = vsyncpa [#allocation3], 1
    %s2588 = scalar_lea.sflag [#allocation3], 1
    %2589 = vsyncpa %s2588, 1
    %2590 = vsyncpa [#allocation5], 1
    %s2591 = scalar_lea.sflag [#allocation5], 1
    %2592 = vsyncpa %s2591, 1
    %2593 = vsyncpa [#allocation8], 1
    %s2594 = scalar_lea.sflag [#allocation8], 1
    %2595 = vsyncpa %s2594, 1
    %2596 = vsyncpa [#allocation11], 1
    %s2597 = scalar_lea.sflag [#allocation11], 1
    %2598 = vsyncpa %s2597, 1

</llo_original>
